<compile_context>
chip_gen: v6e
topology: v6e:2x2x1
jax: 0.10.0
libtpu: 0.0.40
codegen_flags: <defaults>
</compile_context>

<pallas_src>
import functools

import jax
import jax.numpy as jnp
from jax import lax
from jax.experimental import pallas as pl
from jax.experimental.pallas import tpu as pltpu


def _pick_tile_rows(Ho, Wo, C, itemsize, *, m_target=256, tile_bytes_cap=2 << 20):
    """Output-row tile height th.

    Prefers th | Ho with th*Wo a multiple of 128 (unmasked, lane-dense stores /
    full MXU rows) and th*Wo >= m_target (fills the 256-wide v6e/v7x MXU),
    bounded by a per-tile activation byte cap (vreg / VMEM pressure).  Falls
    back to th = Ho (single tile: block == full array, so the (8,128)
    divisibility rule is still satisfied) only when no such divisor exists.
    """
    divisors = [d for d in range(1, Ho + 1) if Ho % d == 0]
    lane_ok = [d for d in divisors
               if (d * Wo) % 128 == 0 and d * Wo * C * itemsize <= tile_bytes_cap]
    for d in lane_ok:
        if d * Wo >= m_target:
            return d
    if lane_ok:
        return lane_ok[-1]
    # TODO(synk): for large images with awkward Wo this falls back to a whole-
    # image tile; pad Ho/Wo instead to keep VMEM bounded.
    return Ho


def _make_kernel(*, k, s, p, H, W, th, Wo, C, lp, compute_dtype):
    """lp = left (column) pad of the scratch: >= p and rounded to a sublane
    multiple so the once-per-image interior copy is an (almost) unmasked store."""

    def kernel(x_ref, wdw_ref, wpwT_ref, b1_ref, b2_ref, o_ref, xpad_ref):
        i = pl.program_id(1)                     # output row-tile index
        Hp, Wpc, _ = xpad_ref.shape

        # ---- once-per-image setup: zero only the halo strips, copy the interior.
        # NOTE: relies on the row-tile axis iterating sequentially ("arbitrary")
        # on one core; the batch axis stays "parallel".
        # TODO(synk): build a per-tile th_in-row halo (manual DMA from an
        # pl.ANY-space x) so the row-tile axis can also be "parallel" (v7x dual
        # TensorCore at batch=1) and only ONE image copy lives in VMEM.
        @pl.when(i == 0)
        def _():
            if p > 0:                                            # top / bottom rows
                xpad_ref[pl.ds(0, p), :, :] = jnp.zeros((p, Wpc, C), compute_dtype)
                xpad_ref[pl.ds(p + H, Hp - p - H), :, :] = jnp.zeros(
                    (Hp - p - H, Wpc, C), compute_dtype)
            if lp > 0:                                           # left column strip
                xpad_ref[pl.ds(p, H), pl.ds(0, lp), :] = jnp.zeros(
                    (H, lp, C), compute_dtype)
            rw = Wpc - lp - W
            if rw > 0:                                           # right column strip
                xpad_ref[pl.ds(p, H), pl.ds(lp + W, rw), :] = jnp.zeros(
                    (H, rw, C), compute_dtype)
            xpad_ref[pl.ds(p, H), pl.ds(lp, W), :] = x_ref[0].astype(compute_dtype)

        # ---- depthwise k x k conv (groups = C); BN1 scale pre-folded into wdw,
        #      folded bias1 used as the accumulator init; then ReLU.  Per-tap
        #      loads come straight from the scratch ref (no big live window);
        #      math is packed bf16 on v6e/v7x (compute_dtype=f32 for v5e).
        row0 = pl.multiple_of(i * (th * s), th * s)              # padded-row origin
        acc = jnp.broadcast_to(b1_ref[0], (th, Wo, C)).astype(compute_dtype)
        for dy in range(k):
            for dx in range(k):
                col0 = lp - p + dx
                if s == 1:
                    r_idx = pl.ds(row0 + dy, th)
                    c_idx = pl.ds(col0, Wo)
                else:
                    # TODO(synk): for s > 1 pre-deinterleave even/odd columns once
                    # per image; this strided sublane slice is slow (x k*k taps).
                    r_idx = pl.ds(row0 + dy, th, stride=s)
                    c_idx = pl.ds(col0, Wo, stride=s)
                patch = xpad_ref[r_idx, c_idx, :]                # (th, Wo, C)
                acc = acc + patch * wdw_ref[dy, dx, :]
        h = jnp.maximum(acc, 0)                                  # (th, Wo, C)

        # ---- pointwise 1x1 conv: bf16 MXU matmul in (Cout, M) orientation so the
        #      MXU output and the HBM store are lane-dense in M = th*Wo, and the
        #      (N, Cout, Ho*Wo) output slab reshapes to NCHW for free.
        # TODO(synk): when Cout % 128 == 0 use the natural (M,C)x(C,Cout)
        # orientation (NHWC store) to avoid a possible operand transpose.
        h2 = h.reshape(th * Wo, C).astype(jnp.bfloat16)          # (M, C)
        y = lax.dot_general(
            wpwT_ref[...], h2,                                   # (Cout, C) x (M, C)
            dimension_numbers=(((1,), (1,)), ((), ())),
            preferred_element_type=jnp.float32,
        )                                                        # (Cout, M) f32

        # ---- BN2 (folded) bias + ReLU, lane-dense store.
        y = jnp.maximum(y + b2_ref[...], 0.0)
        o_ref[0] = y.astype(o_ref.dtype)

    return kernel


def depthwise_separable_block(x_nhwc, w_dw_kkc, w_pw_mat,
                              scale1, bias1, scale2, bias2, *,
                              k, s, p, compute_dtype=jnp.bfloat16):
    """MobileNet-V1 depthwise-separable block.

    x_nhwc: (N, H, W, C) activations (channels on lanes).  Returns
    (N, Cout, Ho, Wo) float32 (NCHW), recovered from the kernel's
    (N, Cout, Ho*Wo) slab by a free contiguous reshape -- no transposes.

    compute_dtype: depthwise / VPU math dtype.  bf16 on v6e/v7x (packed VALU);
    use jnp.float32 on v5e (no bf16 VALU).
    """
    N, H, W, C = x_nhwc.shape
    Ho = (H + 2 * p - k) // s + 1
    Wo = (W + 2 * p - k) // s + 1
    Cout = w_pw_mat.shape[1]

    # bf16 activations at the pallas_call boundary (halves HBM read + the
    # double-buffered input VMEM).  In a real network the activations already
    # arrive in bf16 and this convert fuses away / disappears.
    x = x_nhwc.astype(compute_dtype)

    # Fold BN scales into the conv weights; only the folded biases stay in-kernel.
    wdw = (w_dw_kkc * scale1[None, None, :]).astype(compute_dtype)    # (k, k, C)
    wpwT = (w_pw_mat * scale2[None, :]).T.astype(jnp.bfloat16)        # (Cout, C)
    b1 = bias1[None, :].astype(compute_dtype)                         # (1, C)
    b2 = bias2[:, None].astype(jnp.float32)                           # (Cout, 1)

    # Row tiling: th output rows per grid step.  M = th*Wo is the lane dim of
    # the store and the MXU N dim -> prefer a multiple of 128 and >= 256.
    itemsize = jnp.dtype(compute_dtype).itemsize
    th = _pick_tile_rows(Ho, Wo, C, itemsize)
    n_th = Ho // th
    m = th * Wo

    # Padded-image scratch: top pad = p (major dim, no alignment requirement);
    # left pad rounded up to a sublane multiple so the interior copy is aligned.
    lp = -(-p // 8) * 8 if p > 0 else 0
    Hp = H + 2 * p
    Wpc = lp + W + p

    kernel = _make_kernel(k=k, s=s, p=p, H=H, W=W, th=th, Wo=Wo, C=C, lp=lp,
                          compute_dtype=compute_dtype)

    # VMEM budget from the actual buffers (double-buffered pipeline blocks +
    # the padded-image scratch), with headroom; capped for v7x's 64 MiB VMEM.
    vmem_needed = (
        2 * H * W * C * itemsize                  # input block (x2 pipeline bufs)
        + 2 * Cout * m * 4                        # output block (x2, f32)
        + Hp * Wpc * C * itemsize                 # padded-image scratch
        + 2 * (k * k * C * itemsize + Cout * C * 2 + C * itemsize + Cout * 4)
    )
    vmem_limit = int(min(64 << 20, max(16 << 20, 2 * vmem_needed + (2 << 20))))

    out = pl.pallas_call(
        kernel,
        out_shape=jax.ShapeDtypeStruct((N, Cout, Ho * Wo), jnp.float32),
        grid=(N, n_th),
        in_specs=[
            pl.BlockSpec((1, H, W, C), lambda n, i: (n, 0, 0, 0)),  # image (DMA'd once per n)
            pl.BlockSpec((k, k, C), lambda n, i: (0, 0, 0)),        # depthwise w (BN1-scaled)
            pl.BlockSpec((Cout, C), lambda n, i: (0, 0)),           # pointwise w^T (BN2-scaled, bf16)
            pl.BlockSpec((1, C), lambda n, i: (0, 0)),              # folded bias1
            pl.BlockSpec((Cout, 1), lambda n, i: (0, 0)),           # folded bias2
        ],
        out_specs=pl.BlockSpec((1, Cout, m), lambda n, i: (n, 0, i)),
        scratch_shapes=[pltpu.VMEM((Hp, Wpc, C), compute_dtype)],    # padded image (bf16)
        compiler_params=pltpu.CompilerParams(
            dimension_semantics=("parallel", "arbitrary"),
            vmem_limit_bytes=vmem_limit,
        ),
    )(x, wdw, wpwT, b1, b2)

    # (N, Cout, Ho*Wo) -> (N, Cout, Ho, Wo): contiguous split of the minor dim,
    # free (no HBM pass, no transpose).
    return out.reshape(N, Cout, Ho, Wo)


def _reference(x_nchw, w_dw, b_dw, w_pw, b_pw,
               g1, be1, m1, v1, g2, be2, m2, v2, *, k, s, p, eps):
    """Pure-JAX reference of the PyTorch forward (eval-mode BN), f32 HIGHEST."""
    x = jnp.transpose(x_nchw, (0, 2, 3, 1))
    C = x.shape[-1]
    w_dw_hwio = jnp.transpose(w_dw, (2, 3, 1, 0))           # (k, k, 1, C)
    dw = lax.conv_general_dilated(
        x, w_dw_hwio, (s, s), [(p, p), (p, p)],
        dimension_numbers=("NHWC", "HWIO", "NHWC"),
        feature_group_count=C, precision=lax.Precision.HIGHEST) + b_dw
    h = jnp.maximum((dw - m1) / jnp.sqrt(v1 + eps) * g1 + be1, 0.0)
    w_pw_hwio = jnp.transpose(w_pw, (2, 3, 1, 0))           # (1, 1, C, Cout)
    pw = lax.conv_general_dilated(
        h, w_pw_hwio, (1, 1), [(0, 0), (0, 0)],
        dimension_numbers=("NHWC", "HWIO", "NHWC"),
        precision=lax.Precision.HIGHEST) + b_pw
    y = jnp.maximum((pw - m2) / jnp.sqrt(v2 + eps) * g2 + be2, 0.0)
    return jnp.transpose(y, (0, 3, 1, 2))


if __name__ == "__main__":
    # Module hyper-params (small, consistent with Deptwise_Conv.__init__):
    alpha, k, s, in_c, out_c, img_size, last = 1.0, 3, 1, 4, 8, 16, False
    C = int(in_c * alpha)
    Cout = int(out_c * alpha)
    p = 1 if not last else ((img_size // 2 ** 5) - s + k) // 2
    eps = 1e-5
    N, H, W = 2, img_size, img_size

    keys = jax.random.split(jax.random.PRNGKey(0), 12)
    x = jax.random.normal(keys[0], (N, C, H, W), jnp.float32)

    # PyTorch-shaped parameters, deterministic init.
    w_dw = jax.random.normal(keys[1], (C, 1, k, k), jnp.float32) * 0.2   # depthwise Conv2d
    b_dw = jax.random.normal(keys[2], (C,), jnp.float32) * 0.1
    w_pw = jax.random.normal(keys[3], (Cout, C, 1, 1), jnp.float32) * 0.2
    b_pw = jax.random.normal(keys[4], (Cout,), jnp.float32) * 0.1
    g1 = 1.0 + 0.1 * jax.random.normal(keys[5], (C,), jnp.float32)
    be1 = 0.1 * jax.random.normal(keys[6], (C,), jnp.float32)
    m1 = 0.1 * jax.random.normal(keys[7], (C,), jnp.float32)
    v1 = 1.0 + 0.1 * jax.random.uniform(keys[8], (C,), jnp.float32)
    g2 = 1.0 + 0.1 * jax.random.normal(keys[9], (Cout,), jnp.float32)
    be2 = 0.1 * jax.random.normal(keys[10], (Cout,), jnp.float32)
    m2 = 0.1 * jax.random.normal(keys[11], (Cout,), jnp.float32)
    v2 = jnp.ones((Cout,), jnp.float32)

    # Kernel-format weights / folded BN params (scales folded into weights in
    # the wrapper; biases passed through).
    w_dw_kkc = jnp.transpose(w_dw[:, 0, :, :], (1, 2, 0))       # (k, k, C)
    w_pw_mat = jnp.transpose(w_pw[:, :, 0, 0], (1, 0))          # (C, Cout)
    scale1 = g1 / jnp.sqrt(v1 + eps)
    bias1 = be1 - m1 * scale1 + b_dw * scale1
    scale2 = g2 / jnp.sqrt(v2 + eps)
    bias2 = be2 - m2 * scale2 + b_pw * scale2

    # The block consumes NHWC activations (channels on lanes).  In a full
    # MobileNet this conversion happens ONCE at the network entry, not per block;
    # it sits outside the kernel wrapper so the block itself does no transposes.
    x_nhwc = jnp.transpose(x, (0, 2, 3, 1))

    run = functools.partial(depthwise_separable_block, k=k, s=s, p=p)
    out = jax.jit(run)(x_nhwc, w_dw_kkc, w_pw_mat, scale1, bias1, scale2, bias2)
    out = jax.block_until_ready(out)

    ref = _reference(x, w_dw, b_dw, w_pw, b_pw,
                     g1, be1, m1, v1, g2, be2, m2, v2, k=k, s=s, p=p, eps=eps)
    assert out.shape == (N, Cout, H // s, W // s), out.shape
    # bf16 activations + bf16 depthwise taps + bf16 MXU vs. f32-HIGHEST reference.
    assert jnp.allclose(out, ref, atol=3e-2, rtol=3e-2), float(jnp.max(jnp.abs(out - ref)))

    print("KERNEL_OK")
</pallas_src>

<mosaic_0001>
module attributes {stable_mosaic.version = 11 : i64} {
  func.func @kernel(%arg0: i32, %arg1: i32, %arg2: memref<1x16x16x4xbf16, #tpu.memory_space<vmem>>, %arg3: memref<3x3x4xbf16, #tpu.memory_space<vmem>>, %arg4: memref<8x4xbf16, #tpu.memory_space<vmem>>, %arg5: memref<1x4xbf16, #tpu.memory_space<vmem>>, %arg6: memref<8x1xf32, #tpu.memory_space<vmem>>, %arg7: memref<1x8x256xf32, #tpu.memory_space<vmem>>, %arg8: memref<18x25x4xbf16, #tpu.memory_space<vmem>>) attributes {dimension_semantics = [#tpu.dimension_semantics<parallel>, #tpu.dimension_semantics<arbitrary>], iteration_bounds = array<i64: 2, 1>, scalar_prefetch = 0 : i64, scratch_operands = 1 : i64, tpu.core_type = #tpu.core_type<tc>, window_params = [{transform_indices = @transform_0, window_bounds = array<i64: 1, 16, 16, 4>}, {pipeline_mode = #tpu.pipeline_mode<synchronous>, transform_indices = @transform_1, window_bounds = array<i64: 3, 3, 4>}, {pipeline_mode = #tpu.pipeline_mode<synchronous>, transform_indices = @transform_2, window_bounds = array<i64: 8, 4>}, {pipeline_mode = #tpu.pipeline_mode<synchronous>, transform_indices = @transform_3, window_bounds = array<i64: 1, 4>}, {pipeline_mode = #tpu.pipeline_mode<synchronous>, transform_indices = @transform_4, window_bounds = array<i64: 8, 1>}, {transform_indices = @transform_5, window_bounds = array<i64: 1, 8, 256>}]} {
    %c0_i32 = arith.constant 0 : i32
    %0 = arith.cmpi eq, %arg1, %c0_i32 : i32
    %1 = arith.extui %0 : i1 to i32
    %c0_i32_0 = arith.constant 0 : i32
    %2 = arith.cmpi ne, %1, %c0_i32_0 : i32
    scf.if %2 {
      %cst_58 = arith.constant 0.000000e+00 : bf16
      %103 = vector.broadcast %cst_58 : bf16 to vector<1x25x4xbf16>
      %c0_59 = arith.constant 0 : index
      %c0_60 = arith.constant 0 : index
      %c0_61 = arith.constant 0 : index
      %104 = vector.load %arg8[%c0_59, %c0_60, %c0_61] : memref<18x25x4xbf16, #tpu.memory_space<vmem>>, vector<1x25x4xbf16>
      tpu.vector_store %arg8[%c0_59, %c0_60, %c0_61], %103 {strides = array<i32>} : memref<18x25x4xbf16, #tpu.memory_space<vmem>>, vector<1x25x4xbf16>,
      %cst_62 = arith.constant 0.000000e+00 : bf16
      %105 = vector.broadcast %cst_62 : bf16 to vector<1x25x4xbf16>
      %c17 = arith.constant 17 : index
      %c0_63 = arith.constant 0 : index
      %c0_64 = arith.constant 0 : index
      %106 = vector.load %arg8[%c17, %c0_63, %c0_64] : memref<18x25x4xbf16, #tpu.memory_space<vmem>>, vector<1x25x4xbf16>
      tpu.vector_store %arg8[%c17, %c0_63, %c0_64], %105 {strides = array<i32>} : memref<18x25x4xbf16, #tpu.memory_space<vmem>>, vector<1x25x4xbf16>,
      %cst_65 = arith.constant 0.000000e+00 : bf16
      %107 = vector.broadcast %cst_65 : bf16 to vector<16x8x4xbf16>
      %c1_66 = arith.constant 1 : index
      %c0_67 = arith.constant 0 : index
      %c0_68 = arith.constant 0 : index
      %108 = vector.load %arg8[%c1_66, %c0_67, %c0_68] : memref<18x25x4xbf16, #tpu.memory_space<vmem>>, vector<16x8x4xbf16>
      tpu.vector_store %arg8[%c1_66, %c0_67, %c0_68], %107 {strides = array<i32>} : memref<18x25x4xbf16, #tpu.memory_space<vmem>>, vector<16x8x4xbf16>,
      %cst_69 = arith.constant 0.000000e+00 : bf16
      %109 = vector.broadcast %cst_69 : bf16 to vector<16x1x4xbf16>
      %c1_70 = arith.constant 1 : index
      %c24 = arith.constant 24 : index
      %c0_71 = arith.constant 0 : index
      %110 = vector.load %arg8[%c1_70, %c24, %c0_71] : memref<18x25x4xbf16, #tpu.memory_space<vmem>>, vector<16x1x4xbf16>
      tpu.vector_store %arg8[%c1_70, %c24, %c0_71], %109 {strides = array<i32>} : memref<18x25x4xbf16, #tpu.memory_space<vmem>>, vector<16x1x4xbf16>,
      %c0_72 = arith.constant 0 : index
      %c0_73 = arith.constant 0 : index
      %c0_74 = arith.constant 0 : index
      %c0_75 = arith.constant 0 : index
      %111 = vector.load %arg2[%c0_72, %c0_73, %c0_74, %c0_75] : memref<1x16x16x4xbf16, #tpu.memory_space<vmem>>, vector<1x16x16x4xbf16>
      %112 = vector.shape_cast %111 : vector<1x16x16x4xbf16> to vector<16x16x4xbf16>
      %c1_76 = arith.constant 1 : index
      %c8_77 = arith.constant 8 : index
      %c0_78 = arith.constant 0 : index
      %113 = vector.load %arg8[%c1_76, %c8_77, %c0_78] : memref<18x25x4xbf16, #tpu.memory_space<vmem>>, vector<16x16x4xbf16>
      tpu.vector_store %arg8[%c1_76, %c8_77, %c0_78], %112 {strides = array<i32>} : memref<18x25x4xbf16, #tpu.memory_space<vmem>>, vector<16x16x4xbf16>,
    } else {
    }
    %c16_i32 = arith.constant 16 : i32
    %3 = arith.muli %arg1, %c16_i32 : i32
    %4 = tpu.assume_multiple %3, 16 : i32
    %c0 = arith.constant 0 : index
    %c0_1 = arith.constant 0 : index
    %5 = vector.load %arg5[%c0, %c0_1] : memref<1x4xbf16, #tpu.memory_space<vmem>>, vector<1x4xbf16>
    %6 = vector.shape_cast %5 : vector<1x4xbf16> to vector<4xbf16>
    %7 = vector.shape_cast %6 : vector<4xbf16> to vector<1x1x4xbf16>
    %8 = vector.broadcast %7 : vector<1x1x4xbf16> to vector<16x16x4xbf16>
    %c0_i32_2 = arith.constant 0 : i32
    %9 = arith.addi %4, %c0_i32_2 : i32
    %10 = arith.index_cast %9 : i32 to index
    %c7 = arith.constant 7 : index
    %c0_3 = arith.constant 0 : index
    %11 = vector.load %arg8[%10, %c7, %c0_3] : memref<18x25x4xbf16, #tpu.memory_space<vmem>>, vector<16x16x4xbf16>
    %c0_4 = arith.constant 0 : index
    %c0_5 = arith.constant 0 : index
    %c0_6 = arith.constant 0 : index
    %12 = vector.load %arg3[%c0_4, %c0_5, %c0_6] : memref<3x3x4xbf16, #tpu.memory_space<vmem>>, vector<1x1x4xbf16>
    %13 = vector.shape_cast %12 : vector<1x1x4xbf16> to vector<4xbf16>
    %14 = vector.shape_cast %13 : vector<4xbf16> to vector<1x1x4xbf16>
    %15 = vector.broadcast %14 : vector<1x1x4xbf16> to vector<16x16x4xbf16>
    %16 = arith.mulf %11, %15 : vector<16x16x4xbf16>
    %17 = arith.addf %8, %16 : vector<16x16x4xbf16>
    %c0_i32_7 = arith.constant 0 : i32
    %18 = arith.addi %4, %c0_i32_7 : i32
    %19 = arith.index_cast %18 : i32 to index
    %c8 = arith.constant 8 : index
    %c0_8 = arith.constant 0 : index
    %20 = vector.load %arg8[%19, %c8, %c0_8] : memref<18x25x4xbf16, #tpu.memory_space<vmem>>, vector<16x16x4xbf16>
    %c0_9 = arith.constant 0 : index
    %c1 = arith.constant 1 : index
    %c0_10 = arith.constant 0 : index
    %21 = vector.load %arg3[%c0_9, %c1, %c0_10] : memref<3x3x4xbf16, #tpu.memory_space<vmem>>, vector<1x1x4xbf16>
    %22 = vector.shape_cast %21 : vector<1x1x4xbf16> to vector<4xbf16>
    %23 = vector.shape_cast %22 : vector<4xbf16> to vector<1x1x4xbf16>
    %24 = vector.broadcast %23 : vector<1x1x4xbf16> to vector<16x16x4xbf16>
    %25 = arith.mulf %20, %24 : vector<16x16x4xbf16>
    %26 = arith.addf %17, %25 : vector<16x16x4xbf16>
    %c0_i32_11 = arith.constant 0 : i32
    %27 = arith.addi %4, %c0_i32_11 : i32
    %28 = arith.index_cast %27 : i32 to index
    %c9 = arith.constant 9 : index
    %c0_12 = arith.constant 0 : index
    %29 = vector.load %arg8[%28, %c9, %c0_12] : memref<18x25x4xbf16, #tpu.memory_space<vmem>>, vector<16x16x4xbf16>
    %c0_13 = arith.constant 0 : index
    %c2 = arith.constant 2 : index
    %c0_14 = arith.constant 0 : index
    %30 = vector.load %arg3[%c0_13, %c2, %c0_14] : memref<3x3x4xbf16, #tpu.memory_space<vmem>>, vector<1x1x4xbf16>
    %31 = vector.shape_cast %30 : vector<1x1x4xbf16> to vector<4xbf16>
    %32 = vector.shape_cast %31 : vector<4xbf16> to vector<1x1x4xbf16>
    %33 = vector.broadcast %32 : vector<1x1x4xbf16> to vector<16x16x4xbf16>
    %34 = arith.mulf %29, %33 : vector<16x16x4xbf16>
    %35 = arith.addf %26, %34 : vector<16x16x4xbf16>
    %c1_i32 = arith.constant 1 : i32
    %36 = arith.addi %4, %c1_i32 : i32
    %37 = arith.index_cast %36 : i32 to index
    %c7_15 = arith.constant 7 : index
    %c0_16 = arith.constant 0 : index
    %38 = vector.load %arg8[%37, %c7_15, %c0_16] : memref<18x25x4xbf16, #tpu.memory_space<vmem>>, vector<16x16x4xbf16>
    %c1_17 = arith.constant 1 : index
    %c0_18 = arith.constant 0 : index
    %c0_19 = arith.constant 0 : index
    %39 = vector.load %arg3[%c1_17, %c0_18, %c0_19] : memref<3x3x4xbf16, #tpu.memory_space<vmem>>, vector<1x1x4xbf16>
    %40 = vector.shape_cast %39 : vector<1x1x4xbf16> to vector<4xbf16>
    %41 = vector.shape_cast %40 : vector<4xbf16> to vector<1x1x4xbf16>
    %42 = vector.broadcast %41 : vector<1x1x4xbf16> to vector<16x16x4xbf16>
    %43 = arith.mulf %38, %42 : vector<16x16x4xbf16>
    %44 = arith.addf %35, %43 : vector<16x16x4xbf16>
    %c1_i32_20 = arith.constant 1 : i32
    %45 = arith.addi %4, %c1_i32_20 : i32
    %46 = arith.index_cast %45 : i32 to index
    %c8_21 = arith.constant 8 : index
    %c0_22 = arith.constant 0 : index
    %47 = vector.load %arg8[%46, %c8_21, %c0_22] : memref<18x25x4xbf16, #tpu.memory_space<vmem>>, vector<16x16x4xbf16>
    %c1_23 = arith.constant 1 : index
    %c1_24 = arith.constant 1 : index
    %c0_25 = arith.constant 0 : index
    %48 = vector.load %arg3[%c1_23, %c1_24, %c0_25] : memref<3x3x4xbf16, #tpu.memory_space<vmem>>, vector<1x1x4xbf16>
    %49 = vector.shape_cast %48 : vector<1x1x4xbf16> to vector<4xbf16>
    %50 = vector.shape_cast %49 : vector<4xbf16> to vector<1x1x4xbf16>
    %51 = vector.broadcast %50 : vector<1x1x4xbf16> to vector<16x16x4xbf16>
    %52 = arith.mulf %47, %51 : vector<16x16x4xbf16>
    %53 = arith.addf %44, %52 : vector<16x16x4xbf16>
    %c1_i32_26 = arith.constant 1 : i32
    %54 = arith.addi %4, %c1_i32_26 : i32
    %55 = arith.index_cast %54 : i32 to index
    %c9_27 = arith.constant 9 : index
    %c0_28 = arith.constant 0 : index
    %56 = vector.load %arg8[%55, %c9_27, %c0_28] : memref<18x25x4xbf16, #tpu.memory_space<vmem>>, vector<16x16x4xbf16>
    %c1_29 = arith.constant 1 : index
    %c2_30 = arith.constant 2 : index
    %c0_31 = arith.constant 0 : index
    %57 = vector.load %arg3[%c1_29, %c2_30, %c0_31] : memref<3x3x4xbf16, #tpu.memory_space<vmem>>, vector<1x1x4xbf16>
    %58 = vector.shape_cast %57 : vector<1x1x4xbf16> to vector<4xbf16>
    %59 = vector.shape_cast %58 : vector<4xbf16> to vector<1x1x4xbf16>
    %60 = vector.broadcast %59 : vector<1x1x4xbf16> to vector<16x16x4xbf16>
    %61 = arith.mulf %56, %60 : vector<16x16x4xbf16>
    %62 = arith.addf %53, %61 : vector<16x16x4xbf16>
    %c2_i32 = arith.constant 2 : i32
    %63 = arith.addi %4, %c2_i32 : i32
    %64 = arith.index_cast %63 : i32 to index
    %c7_32 = arith.constant 7 : index
    %c0_33 = arith.constant 0 : index
    %65 = vector.load %arg8[%64, %c7_32, %c0_33] : memref<18x25x4xbf16, #tpu.memory_space<vmem>>, vector<16x16x4xbf16>
    %c2_34 = arith.constant 2 : index
    %c0_35 = arith.constant 0 : index
    %c0_36 = arith.constant 0 : index
    %66 = vector.load %arg3[%c2_34, %c0_35, %c0_36] : memref<3x3x4xbf16, #tpu.memory_space<vmem>>, vector<1x1x4xbf16>
    %67 = vector.shape_cast %66 : vector<1x1x4xbf16> to vector<4xbf16>
    %68 = vector.shape_cast %67 : vector<4xbf16> to vector<1x1x4xbf16>
    %69 = vector.broadcast %68 : vector<1x1x4xbf16> to vector<16x16x4xbf16>
    %70 = arith.mulf %65, %69 : vector<16x16x4xbf16>
    %71 = arith.addf %62, %70 : vector<16x16x4xbf16>
    %c2_i32_37 = arith.constant 2 : i32
    %72 = arith.addi %4, %c2_i32_37 : i32
    %73 = arith.index_cast %72 : i32 to index
    %c8_38 = arith.constant 8 : index
    %c0_39 = arith.constant 0 : index
    %74 = vector.load %arg8[%73, %c8_38, %c0_39] : memref<18x25x4xbf16, #tpu.memory_space<vmem>>, vector<16x16x4xbf16>
    %c2_40 = arith.constant 2 : index
    %c1_41 = arith.constant 1 : index
    %c0_42 = arith.constant 0 : index
    %75 = vector.load %arg3[%c2_40, %c1_41, %c0_42] : memref<3x3x4xbf16, #tpu.memory_space<vmem>>, vector<1x1x4xbf16>
    %76 = vector.shape_cast %75 : vector<1x1x4xbf16> to vector<4xbf16>
    %77 = vector.shape_cast %76 : vector<4xbf16> to vector<1x1x4xbf16>
    %78 = vector.broadcast %77 : vector<1x1x4xbf16> to vector<16x16x4xbf16>
    %79 = arith.mulf %74, %78 : vector<16x16x4xbf16>
    %80 = arith.addf %71, %79 : vector<16x16x4xbf16>
    %c2_i32_43 = arith.constant 2 : i32
    %81 = arith.addi %4, %c2_i32_43 : i32
    %82 = arith.index_cast %81 : i32 to index
    %c9_44 = arith.constant 9 : index
    %c0_45 = arith.constant 0 : index
    %83 = vector.load %arg8[%82, %c9_44, %c0_45] : memref<18x25x4xbf16, #tpu.memory_space<vmem>>, vector<16x16x4xbf16>
    %c2_46 = arith.constant 2 : index
    %c2_47 = arith.constant 2 : index
    %c0_48 = arith.constant 0 : index
    %84 = vector.load %arg3[%c2_46, %c2_47, %c0_48] : memref<3x3x4xbf16, #tpu.memory_space<vmem>>, vector<1x1x4xbf16>
    %85 = vector.shape_cast %84 : vector<1x1x4xbf16> to vector<4xbf16>
    %86 = vector.shape_cast %85 : vector<4xbf16> to vector<1x1x4xbf16>
    %87 = vector.broadcast %86 : vector<1x1x4xbf16> to vector<16x16x4xbf16>
    %88 = arith.mulf %83, %87 : vector<16x16x4xbf16>
    %89 = arith.addf %80, %88 : vector<16x16x4xbf16>
    %cst = arith.constant 0.000000e+00 : bf16
    %90 = vector.broadcast %cst : bf16 to vector<16x16x4xbf16>
    %91 = arith.maximumf %89, %90 : vector<16x16x4xbf16>
    %92 = vector.shape_cast %91 : vector<16x16x4xbf16> to vector<256x4xbf16>
    %c0_49 = arith.constant 0 : index
    %c0_50 = arith.constant 0 : index
    %93 = vector.load %arg4[%c0_49, %c0_50] : memref<8x4xbf16, #tpu.memory_space<vmem>>, vector<8x4xbf16>
    %cst_51 = arith.constant dense<0.000000e+00> : vector<8x256xf32>
    %94 = tpu.matmul %93, %92, %cst_51 {dimension_numbers = #tpu.dot_dimension_numbers<[1], [1], [0], [0], [0, 0, 1, 0], [], []>} : vector<8x4xbf16>, vector<256x4xbf16>, vector<8x256xf32> -> vector<8x256xf32>
    %c0_52 = arith.constant 0 : index
    %c0_53 = arith.constant 0 : index
    %95 = vector.load %arg6[%c0_52, %c0_53] : memref<8x1xf32, #tpu.memory_space<vmem>>, vector<8x1xf32>
    %96 = vector.broadcast %95 : vector<8x1xf32> to vector<8x256xf32>
    %97 = arith.addf %94, %96 : vector<8x256xf32>
    %cst_54 = arith.constant 0.000000e+00 : f32
    %98 = vector.broadcast %cst_54 : f32 to vector<8x256xf32>
    %99 = arith.maximumf %97, %98 : vector<8x256xf32>
    %c0_55 = arith.constant 0 : index
    %c0_56 = arith.constant 0 : index
    %c0_57 = arith.constant 0 : index
    %100 = vector.load %arg7[%c0_55, %c0_56, %c0_57] : memref<1x8x256xf32, #tpu.memory_space<vmem>>, vector<1x8x256xf32>
    %101 = vector.shape_cast %100 : vector<1x8x256xf32> to vector<8x256xf32>
    %102 = vector.shape_cast %99 : vector<8x256xf32> to vector<1x8x256xf32>
    tpu.vector_store %arg7[%c0_55, %c0_56, %c0_57], %102 {strides = array<i32>} : memref<1x8x256xf32, #tpu.memory_space<vmem>>, vector<1x8x256xf32>,
    return
  }
  func.func @transform_0(%arg0: i32, %arg1: i32) -> (i32, i32, i32, i32) {
    %c0_i32 = arith.constant 0 : i32
    %c0_i32_0 = arith.constant 0 : i32
    %c0_i32_1 = arith.constant 0 : i32
    %c0_i32_2 = arith.constant 0 : i32
    return %arg0, %c0_i32, %c0_i32_0, %c0_i32_1 : i32, i32, i32, i32
  }
  func.func @transform_1(%arg0: i32, %arg1: i32) -> (i32, i32, i32) {
    %c0_i32 = arith.constant 0 : i32
    %c0_i32_0 = arith.constant 0 : i32
    %c0_i32_1 = arith.constant 0 : i32
    %c0_i32_2 = arith.constant 0 : i32
    return %c0_i32, %c0_i32_0, %c0_i32_1 : i32, i32, i32
  }
  func.func @transform_2(%arg0: i32, %arg1: i32) -> (i32, i32) {
    %c0_i32 = arith.constant 0 : i32
    %c0_i32_0 = arith.constant 0 : i32
    %c0_i32_1 = arith.constant 0 : i32
    return %c0_i32, %c0_i32_0 : i32, i32
  }
  func.func @transform_3(%arg0: i32, %arg1: i32) -> (i32, i32) {
    %c0_i32 = arith.constant 0 : i32
    %c0_i32_0 = arith.constant 0 : i32
    %c0_i32_1 = arith.constant 0 : i32
    return %c0_i32, %c0_i32_0 : i32, i32
  }
  func.func @transform_4(%arg0: i32, %arg1: i32) -> (i32, i32) {
    %c0_i32 = arith.constant 0 : i32
    %c0_i32_0 = arith.constant 0 : i32
    %c0_i32_1 = arith.constant 0 : i32
    return %c0_i32, %c0_i32_0 : i32, i32
  }
  func.func @transform_5(%arg0: i32, %arg1: i32) -> (i32, i32, i32) {
    %c0_i32 = arith.constant 0 : i32
    %c0_i32_0 = arith.constant 0 : i32
    return %arg0, %c0_i32, %arg1 : i32, i32, i32
  }
}

</mosaic_0001>

<llo_original>
// kernel: depthwise_separable_block.1
$region0: #{depthwise_separable_block.1}
  #allocation0 [shape = 'u32[]', space=smem, size = 0x4, offset = 0x4, fixed_abs, tag = 'smem constant byte address 0x4 - core index']
  #allocation1 [shape = 'u32[144,128]{1,0:T(1,128)}', space=vmem, size = 0x12000, scoped, tag = 'internal scratch']
  #allocation2 [shape = 'bf16[18,25,4]{2,1,0:T(8,128)(2,1)}', space=vmem, size = 0x24000, scoped, tag = 'scratch operand']
  %s0 = inlined_call_operand.vmem [shape: bf16[2,16,16,4], index: 0, kind: input, shape index: {}]
  %s1 = inlined_call_operand.vmem [shape: bf16[3,3,4], index: 1, kind: input, shape index: {}]
  %s2 = inlined_call_operand.vmem [shape: bf16[8,4], index: 2, kind: input, shape index: {}]
  %s3 = inlined_call_operand.vmem [shape: bf16[1,4], index: 3, kind: input, shape index: {}]
  %s4 = inlined_call_operand.vmem [shape: f32[8,1], index: 4, kind: input, shape index: {}]
  %s5 = inlined_call_operand.vmem [shape: f32[2,8,256], index: 5, kind: output, shape index: {}]
  %s6 = sld [smem:[#allocation0]]
  $region57: #{depthwise_separable_block.1} parent=0
    _
  %s8 = ssub.s32 1, %s6
  %s9 = scalar_select 0, %s8, %s6
  loop: start=0, step=1, limit=4
  $region2: #{depthwise_separable_block.1} parent=0 // loop_pre_header
    _
  $region3: #{depthwise_separable_block.1} parent=0 // loop_header
    %s11 = sphi 0, %s15
    %p12 = scmp.ge.s32.totalorder %s11, 4
    %s18 = sphi 0, %s30
    %s19 = sphi 0, %s26
    %s20 = sphi 0, %s18
    %s21 = sphi 0, %s19
    %s22 = sphi 0, %s20
    %s23 = sphi 0, %s21
    %s33 = sphi 0, %s35
    %s36 = sphi 0, %s33
    %s37 = sphi 0, %s36
    %s53 = sphi 0, %s37
    %s57 = sphi 0, %s57
    %s59 = sphi 0, %s57
    %s60 = sphi 0, %s59
    %s74 = sphi 0, %s60
    %s78 = sphi 0, %s78
    %s80 = sphi 0, %s78
    %s81 = sphi 0, %s80
    %s95 = sphi 0, %s81
    %s99 = sphi 0, %s99
    %s101 = sphi 0, %s99
    %s102 = sphi 0, %s101
    %s116 = sphi 0, %s102
    %s120 = sphi 0, %s120
    %s122 = sphi 0, %s120
    %s123 = sphi 0, %s122
    %s137 = sphi 0, %s123
    %s145 = sphi 0, %s147
    %s148 = sphi 0, %s145
    %s149 = sphi 0, %s148
    %s165 = sphi 0, %s149
  $region4: #{depthwise_separable_block.1} parent=0 // loop_header_branch
    %14 = sbr.rel (%p12) target = $region8
  $region5: #{depthwise_separable_block.1} parent=0 // loop_body
    %s16 = ssub.s32 %s11, 1
    %s17 = ssub.s32 %s11, 2
    %s24 = sadd.s32 1, %s19
    %p25 = scmp.ge.s32.totalorder %s24, 1
    %s26 = scalar_select %p25, 0, %s24
    %s27 = sadd.s32 1, %s18
    %s28 = scalar_select %p25, %s27, %s18
    %p29 = scmp.ge.s32.totalorder %s28, 2
    %s30 = scalar_select %p29, 0, %s28
    %s31 = ssub.s32 %s18, %s30
    %p32 = scmp.eq.s32.totalorder %s31, 0
    %s34 = sadd.s32 %s33, 1
    %s35 = scalar_select %p32, %s33, %s34
    %p38 = pneg %p32
    %p39 = scmp.eq.s32.totalorder %s11, 1
    %p40 = por %p38, %p39
    %p41 = scmp.ne.s32.totalorder %s33, %s36
    %p42 = scmp.eq.s32.totalorder %s11, 0
    %p43 = por %p41, %p42
    %p44 = scmp.ne.s32.totalorder %s33, %s36
    %p45 = scmp.eq.s32.totalorder %s16, 1
    %p46 = por %p44, %p45
    %p47 = scmp.ne.s32.totalorder %s36, %s37
    %p48 = scmp.eq.s32.totalorder %s16, 0
    %p49 = por %p47, %p48
    %p50 = scmp.ne.s32.totalorder %s36, %s37
    %p51 = scmp.eq.s32.totalorder %s17, 1
    %p52 = por %p50, %p51
    %p54 = scmp.ne.s32.totalorder %s37, %s53
    %p55 = scmp.eq.s32.totalorder %s17, 0
    %p56 = por %p54, %p55
    %s58 = sadd.s32 %s57, 1
    %p61 = scmp.eq.s32.totalorder %s11, 1
    %p62 = scmp.ne.s32.totalorder %s57, %s59
    %p63 = scmp.eq.s32.totalorder %s11, 0
    %p64 = por %p62, %p63
    %p65 = scmp.ne.s32.totalorder %s57, %s59
    %p66 = scmp.eq.s32.totalorder %s16, 1
    %p67 = por %p65, %p66
    %p68 = scmp.ne.s32.totalorder %s59, %s60
    %p69 = scmp.eq.s32.totalorder %s16, 0
    %p70 = por %p68, %p69
    %p71 = scmp.ne.s32.totalorder %s59, %s60
    %p72 = scmp.eq.s32.totalorder %s17, 1
    %p73 = por %p71, %p72
    %p75 = scmp.ne.s32.totalorder %s60, %s74
    %p76 = scmp.eq.s32.totalorder %s17, 0
    %p77 = por %p75, %p76
    %s79 = sadd.s32 %s78, 1
    %p82 = scmp.eq.s32.totalorder %s11, 1
    %p83 = scmp.ne.s32.totalorder %s78, %s80
    %p84 = scmp.eq.s32.totalorder %s11, 0
    %p85 = por %p83, %p84
    %p86 = scmp.ne.s32.totalorder %s78, %s80
    %p87 = scmp.eq.s32.totalorder %s16, 1
    %p88 = por %p86, %p87
    %p89 = scmp.ne.s32.totalorder %s80, %s81
    %p90 = scmp.eq.s32.totalorder %s16, 0
    %p91 = por %p89, %p90
    %p92 = scmp.ne.s32.totalorder %s80, %s81
    %p93 = scmp.eq.s32.totalorder %s17, 1
    %p94 = por %p92, %p93
    %p96 = scmp.ne.s32.totalorder %s81, %s95
    %p97 = scmp.eq.s32.totalorder %s17, 0
    %p98 = por %p96, %p97
    %s100 = sadd.s32 %s99, 1
    %p103 = scmp.eq.s32.totalorder %s11, 1
    %p104 = scmp.ne.s32.totalorder %s99, %s101
    %p105 = scmp.eq.s32.totalorder %s11, 0
    %p106 = por %p104, %p105
    %p107 = scmp.ne.s32.totalorder %s99, %s101
    %p108 = scmp.eq.s32.totalorder %s16, 1
    %p109 = por %p107, %p108
    %p110 = scmp.ne.s32.totalorder %s101, %s102
    %p111 = scmp.eq.s32.totalorder %s16, 0
    %p112 = por %p110, %p111
    %p113 = scmp.ne.s32.totalorder %s101, %s102
    %p114 = scmp.eq.s32.totalorder %s17, 1
    %p115 = por %p113, %p114
    %p117 = scmp.ne.s32.totalorder %s102, %s116
    %p118 = scmp.eq.s32.totalorder %s17, 0
    %p119 = por %p117, %p118
    %s121 = sadd.s32 %s120, 1
    %p124 = scmp.eq.s32.totalorder %s11, 1
    %p125 = scmp.ne.s32.totalorder %s120, %s122
    %p126 = scmp.eq.s32.totalorder %s11, 0
    %p127 = por %p125, %p126
    %p128 = scmp.ne.s32.totalorder %s120, %s122
    %p129 = scmp.eq.s32.totalorder %s16, 1
    %p130 = por %p128, %p129
    %p131 = scmp.ne.s32.totalorder %s122, %s123
    %p132 = scmp.eq.s32.totalorder %s16, 0
    %p133 = por %p131, %p132
    %p134 = scmp.ne.s32.totalorder %s122, %s123
    %p135 = scmp.eq.s32.totalorder %s17, 1
    %p136 = por %p134, %p135
    %p138 = scmp.ne.s32.totalorder %s123, %s137
    %p139 = scmp.eq.s32.totalorder %s17, 0
    %p140 = por %p138, %p139
    %s141 = ssub.s32 %s18, %s30
    %s142 = ssub.s32 %s19, %s26
    %s143 = sor.u32 %s141, %s142
    %p144 = scmp.eq.s32.totalorder %s143, 0
    %s146 = sadd.s32 %s145, 1
    %s147 = scalar_select %p144, %s145, %s146
    %p150 = pneg %p144
    %p151 = scmp.eq.s32.totalorder %s11, 1
    %p152 = por %p150, %p151
    %p153 = scmp.ne.s32.totalorder %s145, %s148
    %p154 = scmp.eq.s32.totalorder %s11, 0
    %p155 = por %p153, %p154
    %p156 = scmp.ne.s32.totalorder %s145, %s148
    %p157 = scmp.eq.s32.totalorder %s16, 1
    %p158 = por %p156, %p157
    %p159 = scmp.ne.s32.totalorder %s148, %s149
    %p160 = scmp.eq.s32.totalorder %s16, 0
    %p161 = por %p159, %p160
    %p162 = scmp.ne.s32.totalorder %s148, %s149
    %p163 = scmp.eq.s32.totalorder %s17, 1
    %p164 = por %p162, %p163
    %p166 = scmp.ne.s32.totalorder %s149, %s165
    %p167 = scmp.eq.s32.totalorder %s17, 0
    %p168 = por %p166, %p167
    %p169 = scmp.le.s32.totalorder 1, %s11
    %p170 = scmp.lt.s32.totalorder %s11, 3
    %p171 = pnand %p169, %p170
    %p172 = pneg %p171
    // Predicated region
    $region9: #{depthwise_separable_block.1} parent=5 // pred_check
      _
    $region10: #{depthwise_separable_block.1} parent=5 // pred_check_branch
      %174 = sbr.rel (%p171) target = $region12
    $region11: #{depthwise_separable_block.1} parent=5 // pred_region
      %s175 = ssub.s32 %s11, 1
      // Predicated region
      $region13: #{depthwise_separable_block.1} parent=11 // pred_check
        %p176 = pneg %p70
      $region14: #{depthwise_separable_block.1} parent=11 // pred_check_branch
        %178 = sbr.rel (%p176) target = $region16
      $region15: #{depthwise_separable_block.1} parent=11 // pred_region
        _
      $region16: #{depthwise_separable_block.1} parent=11 // pred_fallthru
        _
      // Predicated region
      $region17: #{depthwise_separable_block.1} parent=11 // pred_check
        %p179 = pneg %p91
      $region18: #{depthwise_separable_block.1} parent=11 // pred_check_branch
        %181 = sbr.rel (%p179) target = $region20
      $region19: #{depthwise_separable_block.1} parent=11 // pred_region
        _
      $region20: #{depthwise_separable_block.1} parent=11 // pred_fallthru
        _
      // Predicated region
      $region21: #{depthwise_separable_block.1} parent=11 // pred_check
        %p182 = pneg %p112
      $region22: #{depthwise_separable_block.1} parent=11 // pred_check_branch
        %184 = sbr.rel (%p182) target = $region24
      $region23: #{depthwise_separable_block.1} parent=11 // pred_region
        _
      $region24: #{depthwise_separable_block.1} parent=11 // pred_fallthru
        _
      // Predicated region
      $region25: #{depthwise_separable_block.1} parent=11 // pred_check
        %p185 = pneg %p133
      $region26: #{depthwise_separable_block.1} parent=11 // pred_check_branch
        %187 = sbr.rel (%p185) target = $region28
      $region27: #{depthwise_separable_block.1} parent=11 // pred_region
        _
      $region28: #{depthwise_separable_block.1} parent=11 // pred_fallthru
        _
    $region12: #{depthwise_separable_block.1} parent=5 // pred_fallthru
      _
    %p188 = scmp.lt.s32.totalorder %s11, 2
    // Predicated region
    $region29: #{depthwise_separable_block.1} parent=5 // pred_check
      %p189 = pneg %p188
    $region30: #{depthwise_separable_block.1} parent=5 // pred_check_branch
      %191 = sbr.rel (%p189) target = $region32
    $region31: #{depthwise_separable_block.1} parent=5 // pred_region
      // Predicated region
      $region33: #{depthwise_separable_block.1} parent=31 // pred_check
        %p192 = pneg %p43
      $region34: #{depthwise_separable_block.1} parent=31 // pred_check_branch
        %194 = sbr.rel (%p192) target = $region36
      $region35: #{depthwise_separable_block.1} parent=31 // pred_region
        %p195 = scmp.lt.s32.totalorder %s18, 1
        %s196 = scalar_select %p195, %s18, 1
        %s197 = smul.addr %s196, 32
        %s198 = smul.addr %s197, 4
        %s199 = scalar_lea.vmem %s0, %s198
      $region36: #{depthwise_separable_block.1} parent=31 // pred_fallthru
        _
    $region32: #{depthwise_separable_block.1} parent=5 // pred_fallthru
      _
    %p200 = scmp.le.s32.totalorder 1, %s11
    %p201 = scmp.lt.s32.totalorder %s11, 3
    %p202 = pnand %p200, %p201
    %p203 = pneg %p202
    // Predicated region
    $region37: #{depthwise_separable_block.1} parent=5 // pred_check
      _
    $region38: #{depthwise_separable_block.1} parent=5 // pred_check_branch
      %205 = sbr.rel (%p202) target = $region40
    $region39: #{depthwise_separable_block.1} parent=5 // pred_region
      %s206 = ssub.s32 %s11, 1
      %p207 = scmp.lt.s32.totalorder %s20, 1
      %s208 = scalar_select %p207, %s20, 1
      %s209 = smul.addr %s208, 32
      %s210 = smul.addr %s209, 4
      %s211 = scalar_lea.vmem %s0, %s210
      %p212 = pneg %p49
      %p213 = pneg %p46
      %p214 = pneg %p70
      %p215 = pneg %p67
      %p216 = pneg %p91
      %p217 = pneg %p88
      %p218 = pneg %p112
      %p219 = pneg %p109
      %p220 = pneg %p133
      %p221 = pneg %p130
      %p222 = pneg %p161
      %p223 = pneg %p158
      %s224 = smul.u32 2, %s21
      %p225 = scmp.lt.s32.totalorder %s20, 1
      %s226 = scalar_select %p225, %s20, 1
      %p227 = scmp.lt.s32.totalorder %s224, 1
      %s228 = scalar_select %p227, %s224, 1
      %s229 = smul.addr %s226, 2
      %s230 = sadd.s32 %s228, %s229
      %s231 = smul.addr %s230, 8
      %s232 = scalar_lea.vmem %s5, %s231
      %p233 = scmp.lt.s32.totalorder %s20, 1
      %s234 = scalar_select %p233, %s20, 1
      %s235 = smul.addr %s234, 32
      %s236 = smul.addr %s235, 4
      %s237 = scalar_lea.vmem %s0, %s236
      %s238 = smul.u32 2, %s21
      %p239 = scmp.lt.s32.totalorder %s20, 1
      %s240 = scalar_select %p239, %s20, 1
      %p241 = scmp.lt.s32.totalorder %s238, 1
      %s242 = scalar_select %p241, %s238, 1
      %s243 = smul.addr %s240, 2
      %s244 = sadd.s32 %s242, %s243
      %s245 = smul.addr %s244, 8
      %s246 = scalar_lea.vmem %s5, %s245
      %s247 = smul.u32 2, %s21
      %p249 = scmp.eq.s32.totalorder %s21, 0
      // Predicated region
      $region41: #{depthwise_separable_block.1} parent=39 // pred_check
        %p250 = pneg %p249
      $region42: #{depthwise_separable_block.1} parent=39 // pred_check_branch
        %252 = sbr.rel (%p250) target = $region44
      $region43: #{depthwise_separable_block.1} parent=39 // pred_region
        %vm253 = vcmask 27648
        %254 = vst.msk [vmem:[#allocation2] sm:$0xf] %vm253, 0
        %255 = vst.msk [vmem:[#allocation2 + $0x4] sm:$0xf] %vm253, 0
        %256 = vst.msk [vmem:[#allocation2 + $0x8] sm:$0xf] %vm253, 0
        %vm257 = vcmask 24576
        %vm258 = vsmask.f32 256
        %vm259 = vmand %vm257, %vm258
        %v260 = vld [vmem:[#allocation2 + $0xc] sm:$0x1]
        %v261 = vsel %vm259, 0, %v260
        %262 = vst [vmem:[#allocation2 + $0xc] sm:$0x1] %v261
        %s263 = scalar_lea.vmem [#allocation2], 272
        %264 = vst.msk [vmem:[%s263] sm:$0xf] %vm253, 0
        %265 = vst.msk [vmem:[%s263 + $0x4] sm:$0xf] %vm253, 0
        %266 = vst.msk [vmem:[%s263 + $0x8] sm:$0xf] %vm253, 0
        %v267 = vld [vmem:[%s263 + $0xc] sm:$0x1]
        %v268 = vsel %vm259, 0, %v267
        %269 = vst [vmem:[%s263 + $0xc] sm:$0x1] %v268
        %s270 = scalar_lea.vmem [#allocation2], 16
        %271 = vst.msk [vmem:[%s270] sm:$0xf] %vm253, 0
        %272 = vst.msk [vmem:[%s270 + $0x10] sm:$0xf] %vm253, 0
        %273 = vst.msk [vmem:[%s270 + $0x20] sm:$0xf] %vm253, 0
        %274 = vst.msk [vmem:[%s270 + $0x30] sm:$0xf] %vm253, 0
        %275 = vst.msk [vmem:[%s270 + $0x40] sm:$0xf] %vm253, 0
        %276 = vst.msk [vmem:[%s270 + $0x50] sm:$0xf] %vm253, 0
        %277 = vst.msk [vmem:[%s270 + $0x60] sm:$0xf] %vm253, 0
        %278 = vst.msk [vmem:[%s270 + $0x70] sm:$0xf] %vm253, 0
        %279 = vst.msk [vmem:[%s270 + $0x80] sm:$0xf] %vm253, 0
        %280 = vst.msk [vmem:[%s270 + $0x90] sm:$0xf] %vm253, 0
        %281 = vst.msk [vmem:[%s270 + $0xa0] sm:$0xf] %vm253, 0
        %282 = vst.msk [vmem:[%s270 + $0xb0] sm:$0xf] %vm253, 0
        %283 = vst.msk [vmem:[%s270 + $0xc0] sm:$0xf] %vm253, 0
        %284 = vst.msk [vmem:[%s270 + $0xd0] sm:$0xf] %vm253, 0
        %285 = vst.msk [vmem:[%s270 + $0xe0] sm:$0xf] %vm253, 0
        %286 = vst.msk [vmem:[%s270 + $0xf0] sm:$0xf] %vm253, 0
        %v287 = vld [vmem:[%s270 + $0xc] sm:$0x1]
        %v288 = vsel %vm259, 0, %v287
        %289 = vst [vmem:[%s270 + $0xc] sm:$0x1] %v288
        %v290 = vld [vmem:[%s270 + $0x1c] sm:$0x1]
        %v291 = vsel %vm259, 0, %v290
        %292 = vst [vmem:[%s270 + $0x1c] sm:$0x1] %v291
        %v293 = vld [vmem:[%s270 + $0x2c] sm:$0x1]
        %v294 = vsel %vm259, 0, %v293
        %295 = vst [vmem:[%s270 + $0x2c] sm:$0x1] %v294
        %v296 = vld [vmem:[%s270 + $0x3c] sm:$0x1]
        %v297 = vsel %vm259, 0, %v296
        %298 = vst [vmem:[%s270 + $0x3c] sm:$0x1] %v297
        %v299 = vld [vmem:[%s270 + $0x4c] sm:$0x1]
        %v300 = vsel %vm259, 0, %v299
        %301 = vst [vmem:[%s270 + $0x4c] sm:$0x1] %v300
        %v302 = vld [vmem:[%s270 + $0x5c] sm:$0x1]
        %v303 = vsel %vm259, 0, %v302
        %304 = vst [vmem:[%s270 + $0x5c] sm:$0x1] %v303
        %v305 = vld [vmem:[%s270 + $0x6c] sm:$0x1]
        %v306 = vsel %vm259, 0, %v305
        %307 = vst [vmem:[%s270 + $0x6c] sm:$0x1] %v306
        %v308 = vld [vmem:[%s270 + $0x7c] sm:$0x1]
        %v309 = vsel %vm259, 0, %v308
        %310 = vst [vmem:[%s270 + $0x7c] sm:$0x1] %v309
        %v311 = vld [vmem:[%s270 + $0x8c] sm:$0x1]
        %v312 = vsel %vm259, 0, %v311
        %313 = vst [vmem:[%s270 + $0x8c] sm:$0x1] %v312
        %v314 = vld [vmem:[%s270 + $0x9c] sm:$0x1]
        %v315 = vsel %vm259, 0, %v314
        %316 = vst [vmem:[%s270 + $0x9c] sm:$0x1] %v315
        %v317 = vld [vmem:[%s270 + $0xac] sm:$0x1]
        %v318 = vsel %vm259, 0, %v317
        %319 = vst [vmem:[%s270 + $0xac] sm:$0x1] %v318
        %v320 = vld [vmem:[%s270 + $0xbc] sm:$0x1]
        %v321 = vsel %vm259, 0, %v320
        %322 = vst [vmem:[%s270 + $0xbc] sm:$0x1] %v321
        %v323 = vld [vmem:[%s270 + $0xcc] sm:$0x1]
        %v324 = vsel %vm259, 0, %v323
        %325 = vst [vmem:[%s270 + $0xcc] sm:$0x1] %v324
        %v326 = vld [vmem:[%s270 + $0xdc] sm:$0x1]
        %v327 = vsel %vm259, 0, %v326
        %328 = vst [vmem:[%s270 + $0xdc] sm:$0x1] %v327
        %v329 = vld [vmem:[%s270 + $0xec] sm:$0x1]
        %v330 = vsel %vm259, 0, %v329
        %331 = vst [vmem:[%s270 + $0xec] sm:$0x1] %v330
        %v332 = vld [vmem:[%s270 + $0xfc] sm:$0x1]
        %v333 = vsel %vm259, 0, %v332
        %334 = vst [vmem:[%s270 + $0xfc] sm:$0x1] %v333
        %v335 = vld [vmem:[%s237] sm:$0xf]
        %v336 = vld [vmem:[%s237 + $0x4] sm:$0xf]
        %v337 = vld [vmem:[%s237 + $0x8] sm:$0xf]
        %v338 = vld [vmem:[%s237 + $0xc] sm:$0xf]
        %v339 = vld [vmem:[%s237 + $0x10] sm:$0xf]
        %v340 = vld [vmem:[%s237 + $0x14] sm:$0xf]
        %v341 = vld [vmem:[%s237 + $0x18] sm:$0xf]
        %v342 = vld [vmem:[%s237 + $0x1c] sm:$0xf]
        %v343 = vld [vmem:[%s237 + $0x20] sm:$0xf]
        %v344 = vld [vmem:[%s237 + $0x24] sm:$0xf]
        %v345 = vld [vmem:[%s237 + $0x28] sm:$0xf]
        %v346 = vld [vmem:[%s237 + $0x2c] sm:$0xf]
        %v347 = vld [vmem:[%s237 + $0x30] sm:$0xf]
        %v348 = vld [vmem:[%s237 + $0x34] sm:$0xf]
        %v349 = vld [vmem:[%s237 + $0x38] sm:$0xf]
        %v350 = vld [vmem:[%s237 + $0x3c] sm:$0xf]
        %v351 = vld [vmem:[%s237 + $0x40] sm:$0xf]
        %v352 = vld [vmem:[%s237 + $0x44] sm:$0xf]
        %v353 = vld [vmem:[%s237 + $0x48] sm:$0xf]
        %v354 = vld [vmem:[%s237 + $0x4c] sm:$0xf]
        %v355 = vld [vmem:[%s237 + $0x50] sm:$0xf]
        %v356 = vld [vmem:[%s237 + $0x54] sm:$0xf]
        %v357 = vld [vmem:[%s237 + $0x58] sm:$0xf]
        %v358 = vld [vmem:[%s237 + $0x5c] sm:$0xf]
        %v359 = vld [vmem:[%s237 + $0x60] sm:$0xf]
        %v360 = vld [vmem:[%s237 + $0x64] sm:$0xf]
        %v361 = vld [vmem:[%s237 + $0x68] sm:$0xf]
        %v362 = vld [vmem:[%s237 + $0x6c] sm:$0xf]
        %v363 = vld [vmem:[%s237 + $0x70] sm:$0xf]
        %v364 = vld [vmem:[%s237 + $0x74] sm:$0xf]
        %v365 = vld [vmem:[%s237 + $0x78] sm:$0xf]
        %v366 = vld [vmem:[%s237 + $0x7c] sm:$0xf]
        %367 = vst.msk [vmem:[%s270 + $0x4] sm:$0xf] %vm253, %v335
        %368 = vst.msk [vmem:[%s270 + $0x8] sm:$0xf] %vm253, %v336
        %369 = vst.msk [vmem:[%s270 + $0x14] sm:$0xf] %vm253, %v337
        %370 = vst.msk [vmem:[%s270 + $0x18] sm:$0xf] %vm253, %v338
        %371 = vst.msk [vmem:[%s270 + $0x24] sm:$0xf] %vm253, %v339
        %372 = vst.msk [vmem:[%s270 + $0x28] sm:$0xf] %vm253, %v340
        %373 = vst.msk [vmem:[%s270 + $0x34] sm:$0xf] %vm253, %v341
        %374 = vst.msk [vmem:[%s270 + $0x38] sm:$0xf] %vm253, %v342
        %375 = vst.msk [vmem:[%s270 + $0x44] sm:$0xf] %vm253, %v343
        %376 = vst.msk [vmem:[%s270 + $0x48] sm:$0xf] %vm253, %v344
        %377 = vst.msk [vmem:[%s270 + $0x54] sm:$0xf] %vm253, %v345
        %378 = vst.msk [vmem:[%s270 + $0x58] sm:$0xf] %vm253, %v346
        %379 = vst.msk [vmem:[%s270 + $0x64] sm:$0xf] %vm253, %v347
        %380 = vst.msk [vmem:[%s270 + $0x68] sm:$0xf] %vm253, %v348
        %381 = vst.msk [vmem:[%s270 + $0x74] sm:$0xf] %vm253, %v349
        %382 = vst.msk [vmem:[%s270 + $0x78] sm:$0xf] %vm253, %v350
        %383 = vst.msk [vmem:[%s270 + $0x84] sm:$0xf] %vm253, %v351
        %384 = vst.msk [vmem:[%s270 + $0x88] sm:$0xf] %vm253, %v352
        %385 = vst.msk [vmem:[%s270 + $0x94] sm:$0xf] %vm253, %v353
        %386 = vst.msk [vmem:[%s270 + $0x98] sm:$0xf] %vm253, %v354
        %387 = vst.msk [vmem:[%s270 + $0xa4] sm:$0xf] %vm253, %v355
        %388 = vst.msk [vmem:[%s270 + $0xa8] sm:$0xf] %vm253, %v356
        %389 = vst.msk [vmem:[%s270 + $0xb4] sm:$0xf] %vm253, %v357
        %390 = vst.msk [vmem:[%s270 + $0xb8] sm:$0xf] %vm253, %v358
        %391 = vst.msk [vmem:[%s270 + $0xc4] sm:$0xf] %vm253, %v359
        %392 = vst.msk [vmem:[%s270 + $0xc8] sm:$0xf] %vm253, %v360
        %393 = vst.msk [vmem:[%s270 + $0xd4] sm:$0xf] %vm253, %v361
        %394 = vst.msk [vmem:[%s270 + $0xd8] sm:$0xf] %vm253, %v362
        %395 = vst.msk [vmem:[%s270 + $0xe4] sm:$0xf] %vm253, %v363
        %396 = vst.msk [vmem:[%s270 + $0xe8] sm:$0xf] %vm253, %v364
        %397 = vst.msk [vmem:[%s270 + $0xf4] sm:$0xf] %vm253, %v365
        %398 = vst.msk [vmem:[%s270 + $0xf8] sm:$0xf] %vm253, %v366
      $region44: #{depthwise_separable_block.1} parent=39 // pred_fallthru
        _
      %s399 = smul.u32 %s21, 16
      %v400 = vld [vmem:[%s3] sm:$0x1]
      %v402 = vpack.i.b16 %v400, %v400
      %v404 = vlaneseq
      %v405 = vshrl.u32 %v404, 7
      %v406 = vsub.s32 0, %v405
      %v407 = vrot.slane %v402, %v406
      %s408 = smul.u32 %s399, 4
      %s409 = smul.addr %s408, 4
      %s410 = scalar_lea.vmem [#allocation2], %s409
      %v411 = vld [vmem:[%s410] sm:$0x8]
      %v412 = vld [vmem:[%s410 + $0x4] sm:$0xf]
      %v413 = vld [vmem:[%s410 + $0x8] sm:$0xf]
      %v414 = vld [vmem:[%s410 + $0x10] sm:$0x8]
      %v415 = vld [vmem:[%s410 + $0x14] sm:$0xf]
      %v416 = vld [vmem:[%s410 + $0x18] sm:$0xf]
      %v417 = vld [vmem:[%s410 + $0x20] sm:$0x8]
      %v418 = vld [vmem:[%s410 + $0x24] sm:$0xf]
      %v419 = vld [vmem:[%s410 + $0x28] sm:$0xf]
      %v420 = vld [vmem:[%s410 + $0x30] sm:$0x8]
      %v421 = vld [vmem:[%s410 + $0x34] sm:$0xf]
      %v422 = vld [vmem:[%s410 + $0x38] sm:$0xf]
      %v423 = vld [vmem:[%s410 + $0x40] sm:$0x8]
      %v424 = vld [vmem:[%s410 + $0x44] sm:$0xf]
      %v425 = vld [vmem:[%s410 + $0x48] sm:$0xf]
      %v426 = vld [vmem:[%s410 + $0x50] sm:$0x8]
      %v427 = vld [vmem:[%s410 + $0x54] sm:$0xf]
      %v428 = vld [vmem:[%s410 + $0x58] sm:$0xf]
      %v429 = vld [vmem:[%s410 + $0x60] sm:$0x8]
      %v430 = vld [vmem:[%s410 + $0x64] sm:$0xf]
      %v431 = vld [vmem:[%s410 + $0x68] sm:$0xf]
      %v432 = vld [vmem:[%s410 + $0x70] sm:$0x8]
      %v433 = vld [vmem:[%s410 + $0x74] sm:$0xf]
      %v434 = vld [vmem:[%s410 + $0x78] sm:$0xf]
      %v435 = vld [vmem:[%s410 + $0x80] sm:$0x8]
      %v436 = vld [vmem:[%s410 + $0x84] sm:$0xf]
      %v437 = vld [vmem:[%s410 + $0x88] sm:$0xf]
      %v438 = vld [vmem:[%s410 + $0x90] sm:$0x8]
      %v439 = vld [vmem:[%s410 + $0x94] sm:$0xf]
      %v440 = vld [vmem:[%s410 + $0x98] sm:$0xf]
      %v441 = vld [vmem:[%s410 + $0xa0] sm:$0x8]
      %v442 = vld [vmem:[%s410 + $0xa4] sm:$0xf]
      %v443 = vld [vmem:[%s410 + $0xa8] sm:$0xf]
      %v444 = vld [vmem:[%s410 + $0xb0] sm:$0x8]
      %v445 = vld [vmem:[%s410 + $0xb4] sm:$0xf]
      %v446 = vld [vmem:[%s410 + $0xb8] sm:$0xf]
      %v447 = vld [vmem:[%s410 + $0xc0] sm:$0x8]
      %v448 = vld [vmem:[%s410 + $0xc4] sm:$0xf]
      %v449 = vld [vmem:[%s410 + $0xc8] sm:$0xf]
      %v450 = vld [vmem:[%s410 + $0xd0] sm:$0x8]
      %v451 = vld [vmem:[%s410 + $0xd4] sm:$0xf]
      %v452 = vld [vmem:[%s410 + $0xd8] sm:$0xf]
      %v453 = vld [vmem:[%s410 + $0xe0] sm:$0x8]
      %v454 = vld [vmem:[%s410 + $0xe4] sm:$0xf]
      %v455 = vld [vmem:[%s410 + $0xe8] sm:$0xf]
      %v456 = vld [vmem:[%s410 + $0xf0] sm:$0x8]
      %v457 = vld [vmem:[%s410 + $0xf4] sm:$0xf]
      %v458 = vld [vmem:[%s410 + $0xf8] sm:$0xf]
      %v459 = vld [vmem:[%s1] sm:$0x1]
      %v461 = vpack.i.b16 %v459, %v459
      %v463 = vlaneseq
      %v464 = vshrl.u32 %v463, 7
      %v465 = vsub.s32 0, %v464
      %v466 = vrot.slane %v461, %v465
      %v468 = vunpack.c.l.b16 %v466
      %v469 = vpack.c.b16 %v468, %v468
      %v471 = vmul.bf16 %v411, %v469
      %v472 = vmul.bf16 %v412, %v469
      %v473 = vmul.bf16 %v413, %v469
      %v474 = vmul.bf16 %v414, %v469
      %v475 = vmul.bf16 %v415, %v469
      %v476 = vmul.bf16 %v416, %v469
      %v477 = vmul.bf16 %v417, %v469
      %v478 = vmul.bf16 %v418, %v469
      %v479 = vmul.bf16 %v419, %v469
      %v480 = vmul.bf16 %v420, %v469
      %v481 = vmul.bf16 %v421, %v469
      %v482 = vmul.bf16 %v422, %v469
      %v483 = vmul.bf16 %v423, %v469
      %v484 = vmul.bf16 %v424, %v469
      %v485 = vmul.bf16 %v425, %v469
      %v486 = vmul.bf16 %v426, %v469
      %v487 = vmul.bf16 %v427, %v469
      %v488 = vmul.bf16 %v428, %v469
      %v489 = vmul.bf16 %v429, %v469
      %v490 = vmul.bf16 %v430, %v469
      %v491 = vmul.bf16 %v431, %v469
      %v492 = vmul.bf16 %v432, %v469
      %v493 = vmul.bf16 %v433, %v469
      %v494 = vmul.bf16 %v434, %v469
      %v495 = vmul.bf16 %v435, %v469
      %v496 = vmul.bf16 %v436, %v469
      %v497 = vmul.bf16 %v437, %v469
      %v498 = vmul.bf16 %v438, %v469
      %v499 = vmul.bf16 %v439, %v469
      %v500 = vmul.bf16 %v440, %v469
      %v501 = vmul.bf16 %v441, %v469
      %v502 = vmul.bf16 %v442, %v469
      %v503 = vmul.bf16 %v443, %v469
      %v504 = vmul.bf16 %v444, %v469
      %v505 = vmul.bf16 %v445, %v469
      %v506 = vmul.bf16 %v446, %v469
      %v507 = vmul.bf16 %v447, %v469
      %v508 = vmul.bf16 %v448, %v469
      %v509 = vmul.bf16 %v449, %v469
      %v510 = vmul.bf16 %v450, %v469
      %v511 = vmul.bf16 %v451, %v469
      %v512 = vmul.bf16 %v452, %v469
      %v513 = vmul.bf16 %v453, %v469
      %v514 = vmul.bf16 %v454, %v469
      %v515 = vmul.bf16 %v455, %v469
      %v516 = vmul.bf16 %v456, %v469
      %v517 = vmul.bf16 %v457, %v469
      %v518 = vmul.bf16 %v458, %v469
      %v567 = vunpack.c.l.b16 %v471
      %v568 = vunpack.c.l.b16 %v472
      %v569 = vunpack.c.l.b16 %v473
      %v570 = vunpack.c.l.b16 %v474
      %v571 = vunpack.c.l.b16 %v475
      %v572 = vunpack.c.l.b16 %v476
      %v573 = vunpack.c.l.b16 %v477
      %v574 = vunpack.c.l.b16 %v478
      %v575 = vunpack.c.l.b16 %v479
      %v576 = vunpack.c.l.b16 %v480
      %v577 = vunpack.c.l.b16 %v481
      %v578 = vunpack.c.l.b16 %v482
      %v579 = vunpack.c.l.b16 %v483
      %v580 = vunpack.c.l.b16 %v484
      %v581 = vunpack.c.l.b16 %v485
      %v582 = vunpack.c.l.b16 %v486
      %v583 = vunpack.c.l.b16 %v487
      %v584 = vunpack.c.l.b16 %v488
      %v585 = vunpack.c.l.b16 %v489
      %v586 = vunpack.c.l.b16 %v490
      %v587 = vunpack.c.l.b16 %v491
      %v588 = vunpack.c.l.b16 %v492
      %v589 = vunpack.c.l.b16 %v493
      %v590 = vunpack.c.l.b16 %v494
      %v591 = vunpack.c.l.b16 %v495
      %v592 = vunpack.c.l.b16 %v496
      %v593 = vunpack.c.l.b16 %v497
      %v594 = vunpack.c.l.b16 %v498
      %v595 = vunpack.c.l.b16 %v499
      %v596 = vunpack.c.l.b16 %v500
      %v597 = vunpack.c.l.b16 %v501
      %v598 = vunpack.c.l.b16 %v502
      %v599 = vunpack.c.l.b16 %v503
      %v600 = vunpack.c.l.b16 %v504
      %v601 = vunpack.c.l.b16 %v505
      %v602 = vunpack.c.l.b16 %v506
      %v603 = vunpack.c.l.b16 %v507
      %v604 = vunpack.c.l.b16 %v508
      %v605 = vunpack.c.l.b16 %v509
      %v606 = vunpack.c.l.b16 %v510
      %v607 = vunpack.c.l.b16 %v511
      %v608 = vunpack.c.l.b16 %v512
      %v609 = vunpack.c.l.b16 %v513
      %v610 = vunpack.c.l.b16 %v514
      %v611 = vunpack.c.l.b16 %v515
      %v612 = vunpack.c.l.b16 %v516
      %v613 = vunpack.c.l.b16 %v517
      %v614 = vunpack.c.l.b16 %v518
      %v615 = vpack.c.b16 %v568, %v567
      %v616 = vpack.c.b16 %v569, %v569
      %v617 = vpack.c.b16 %v571, %v570
      %v618 = vpack.c.b16 %v572, %v572
      %v619 = vpack.c.b16 %v574, %v573
      %v620 = vpack.c.b16 %v575, %v575
      %v621 = vpack.c.b16 %v577, %v576
      %v622 = vpack.c.b16 %v578, %v578
      %v623 = vpack.c.b16 %v580, %v579
      %v624 = vpack.c.b16 %v581, %v581
      %v625 = vpack.c.b16 %v583, %v582
      %v626 = vpack.c.b16 %v584, %v584
      %v627 = vpack.c.b16 %v586, %v585
      %v628 = vpack.c.b16 %v587, %v587
      %v629 = vpack.c.b16 %v589, %v588
      %v630 = vpack.c.b16 %v590, %v590
      %v631 = vpack.c.b16 %v592, %v591
      %v632 = vpack.c.b16 %v593, %v593
      %v633 = vpack.c.b16 %v595, %v594
      %v634 = vpack.c.b16 %v596, %v596
      %v635 = vpack.c.b16 %v598, %v597
      %v636 = vpack.c.b16 %v599, %v599
      %v637 = vpack.c.b16 %v601, %v600
      %v638 = vpack.c.b16 %v602, %v602
      %v639 = vpack.c.b16 %v604, %v603
      %v640 = vpack.c.b16 %v605, %v605
      %v641 = vpack.c.b16 %v607, %v606
      %v642 = vpack.c.b16 %v608, %v608
      %v643 = vpack.c.b16 %v610, %v609
      %v644 = vpack.c.b16 %v611, %v611
      %v645 = vpack.c.b16 %v613, %v612
      %v646 = vpack.c.b16 %v614, %v614
      %vm647 = vsmask.f32 4352
      %v649 = vshrl.u32 %v615, 16
      %v651 = vrot.slane %v649, 3
      %v652 = vshll.u32 %v615, 16
      %v654 = vrot.slane %v652, 4
      %v655 = vor.u32 %v651, %v654
      %v657 = vshrl.u32 %v616, 16
      %v659 = vrot.slane %v657, 3
      %v660 = vshll.u32 %v616, 16
      %v662 = vrot.slane %v660, 4
      %v663 = vor.u32 %v659, %v662
      %v664 = vsel %vm647, %v655, %v663
      %v666 = vshrl.u32 %v617, 16
      %v668 = vrot.slane %v666, 3
      %v669 = vshll.u32 %v617, 16
      %v671 = vrot.slane %v669, 4
      %v672 = vor.u32 %v668, %v671
      %v674 = vshrl.u32 %v618, 16
      %v676 = vrot.slane %v674, 3
      %v677 = vshll.u32 %v618, 16
      %v679 = vrot.slane %v677, 4
      %v680 = vor.u32 %v676, %v679
      %v681 = vsel %vm647, %v672, %v680
      %v683 = vshrl.u32 %v619, 16
      %v685 = vrot.slane %v683, 3
      %v686 = vshll.u32 %v619, 16
      %v688 = vrot.slane %v686, 4
      %v689 = vor.u32 %v685, %v688
      %v691 = vshrl.u32 %v620, 16
      %v693 = vrot.slane %v691, 3
      %v694 = vshll.u32 %v620, 16
      %v696 = vrot.slane %v694, 4
      %v697 = vor.u32 %v693, %v696
      %v698 = vsel %vm647, %v689, %v697
      %v700 = vshrl.u32 %v621, 16
      %v702 = vrot.slane %v700, 3
      %v703 = vshll.u32 %v621, 16
      %v705 = vrot.slane %v703, 4
      %v706 = vor.u32 %v702, %v705
      %v708 = vshrl.u32 %v622, 16
      %v710 = vrot.slane %v708, 3
      %v711 = vshll.u32 %v622, 16
      %v713 = vrot.slane %v711, 4
      %v714 = vor.u32 %v710, %v713
      %v715 = vsel %vm647, %v706, %v714
      %v717 = vshrl.u32 %v623, 16
      %v719 = vrot.slane %v717, 3
      %v720 = vshll.u32 %v623, 16
      %v722 = vrot.slane %v720, 4
      %v723 = vor.u32 %v719, %v722
      %v725 = vshrl.u32 %v624, 16
      %v727 = vrot.slane %v725, 3
      %v728 = vshll.u32 %v624, 16
      %v730 = vrot.slane %v728, 4
      %v731 = vor.u32 %v727, %v730
      %v732 = vsel %vm647, %v723, %v731
      %v734 = vshrl.u32 %v625, 16
      %v736 = vrot.slane %v734, 3
      %v737 = vshll.u32 %v625, 16
      %v739 = vrot.slane %v737, 4
      %v740 = vor.u32 %v736, %v739
      %v742 = vshrl.u32 %v626, 16
      %v744 = vrot.slane %v742, 3
      %v745 = vshll.u32 %v626, 16
      %v747 = vrot.slane %v745, 4
      %v748 = vor.u32 %v744, %v747
      %v749 = vsel %vm647, %v740, %v748
      %v751 = vshrl.u32 %v627, 16
      %v753 = vrot.slane %v751, 3
      %v754 = vshll.u32 %v627, 16
      %v756 = vrot.slane %v754, 4
      %v757 = vor.u32 %v753, %v756
      %v759 = vshrl.u32 %v628, 16
      %v761 = vrot.slane %v759, 3
      %v762 = vshll.u32 %v628, 16
      %v764 = vrot.slane %v762, 4
      %v765 = vor.u32 %v761, %v764
      %v766 = vsel %vm647, %v757, %v765
      %v768 = vshrl.u32 %v629, 16
      %v770 = vrot.slane %v768, 3
      %v771 = vshll.u32 %v629, 16
      %v773 = vrot.slane %v771, 4
      %v774 = vor.u32 %v770, %v773
      %v776 = vshrl.u32 %v630, 16
      %v778 = vrot.slane %v776, 3
      %v779 = vshll.u32 %v630, 16
      %v781 = vrot.slane %v779, 4
      %v782 = vor.u32 %v778, %v781
      %v783 = vsel %vm647, %v774, %v782
      %v785 = vshrl.u32 %v631, 16
      %v787 = vrot.slane %v785, 3
      %v788 = vshll.u32 %v631, 16
      %v790 = vrot.slane %v788, 4
      %v791 = vor.u32 %v787, %v790
      %v793 = vshrl.u32 %v632, 16
      %v795 = vrot.slane %v793, 3
      %v796 = vshll.u32 %v632, 16
      %v798 = vrot.slane %v796, 4
      %v799 = vor.u32 %v795, %v798
      %v800 = vsel %vm647, %v791, %v799
      %v802 = vshrl.u32 %v633, 16
      %v804 = vrot.slane %v802, 3
      %v805 = vshll.u32 %v633, 16
      %v807 = vrot.slane %v805, 4
      %v808 = vor.u32 %v804, %v807
      %v810 = vshrl.u32 %v634, 16
      %v812 = vrot.slane %v810, 3
      %v813 = vshll.u32 %v634, 16
      %v815 = vrot.slane %v813, 4
      %v816 = vor.u32 %v812, %v815
      %v817 = vsel %vm647, %v808, %v816
      %v819 = vshrl.u32 %v635, 16
      %v821 = vrot.slane %v819, 3
      %v822 = vshll.u32 %v635, 16
      %v824 = vrot.slane %v822, 4
      %v825 = vor.u32 %v821, %v824
      %v827 = vshrl.u32 %v636, 16
      %v829 = vrot.slane %v827, 3
      %v830 = vshll.u32 %v636, 16
      %v832 = vrot.slane %v830, 4
      %v833 = vor.u32 %v829, %v832
      %v834 = vsel %vm647, %v825, %v833
      %v836 = vshrl.u32 %v637, 16
      %v838 = vrot.slane %v836, 3
      %v839 = vshll.u32 %v637, 16
      %v841 = vrot.slane %v839, 4
      %v842 = vor.u32 %v838, %v841
      %v844 = vshrl.u32 %v638, 16
      %v846 = vrot.slane %v844, 3
      %v847 = vshll.u32 %v638, 16
      %v849 = vrot.slane %v847, 4
      %v850 = vor.u32 %v846, %v849
      %v851 = vsel %vm647, %v842, %v850
      %v853 = vshrl.u32 %v639, 16
      %v855 = vrot.slane %v853, 3
      %v856 = vshll.u32 %v639, 16
      %v858 = vrot.slane %v856, 4
      %v859 = vor.u32 %v855, %v858
      %v861 = vshrl.u32 %v640, 16
      %v863 = vrot.slane %v861, 3
      %v864 = vshll.u32 %v640, 16
      %v866 = vrot.slane %v864, 4
      %v867 = vor.u32 %v863, %v866
      %v868 = vsel %vm647, %v859, %v867
      %v870 = vshrl.u32 %v641, 16
      %v872 = vrot.slane %v870, 3
      %v873 = vshll.u32 %v641, 16
      %v875 = vrot.slane %v873, 4
      %v876 = vor.u32 %v872, %v875
      %v878 = vshrl.u32 %v642, 16
      %v880 = vrot.slane %v878, 3
      %v881 = vshll.u32 %v642, 16
      %v883 = vrot.slane %v881, 4
      %v884 = vor.u32 %v880, %v883
      %v885 = vsel %vm647, %v876, %v884
      %v887 = vshrl.u32 %v643, 16
      %v889 = vrot.slane %v887, 3
      %v890 = vshll.u32 %v643, 16
      %v892 = vrot.slane %v890, 4
      %v893 = vor.u32 %v889, %v892
      %v895 = vshrl.u32 %v644, 16
      %v897 = vrot.slane %v895, 3
      %v898 = vshll.u32 %v644, 16
      %v900 = vrot.slane %v898, 4
      %v901 = vor.u32 %v897, %v900
      %v902 = vsel %vm647, %v893, %v901
      %v904 = vshrl.u32 %v645, 16
      %v906 = vrot.slane %v904, 3
      %v907 = vshll.u32 %v645, 16
      %v909 = vrot.slane %v907, 4
      %v910 = vor.u32 %v906, %v909
      %v912 = vshrl.u32 %v646, 16
      %v914 = vrot.slane %v912, 3
      %v915 = vshll.u32 %v646, 16
      %v917 = vrot.slane %v915, 4
      %v918 = vor.u32 %v914, %v917
      %v919 = vsel %vm647, %v910, %v918
      %v936 = vadd.bf16 %v407, %v664
      %v937 = vadd.bf16 %v407, %v681
      %v938 = vadd.bf16 %v407, %v698
      %v939 = vadd.bf16 %v407, %v715
      %v940 = vadd.bf16 %v407, %v732
      %v941 = vadd.bf16 %v407, %v749
      %v942 = vadd.bf16 %v407, %v766
      %v943 = vadd.bf16 %v407, %v783
      %v944 = vadd.bf16 %v407, %v800
      %v945 = vadd.bf16 %v407, %v817
      %v946 = vadd.bf16 %v407, %v834
      %v947 = vadd.bf16 %v407, %v851
      %v948 = vadd.bf16 %v407, %v868
      %v949 = vadd.bf16 %v407, %v885
      %v950 = vadd.bf16 %v407, %v902
      %v951 = vadd.bf16 %v407, %v919
      %v952 = vshrl.u32 %v459, 16
      %v953 = vpack.i.b16 %v952, %v952
      %v955 = vlaneseq
      %v956 = vshrl.u32 %v955, 7
      %v957 = vsub.s32 0, %v956
      %v958 = vrot.slane %v953, %v957
      %v960 = vunpack.c.l.b16 %v958
      %v961 = vpack.c.b16 %v960, %v960
      %v963 = vmul.bf16 %v412, %v961
      %v964 = vmul.bf16 %v413, %v961
      %v965 = vmul.bf16 %v415, %v961
      %v966 = vmul.bf16 %v416, %v961
      %v967 = vmul.bf16 %v418, %v961
      %v968 = vmul.bf16 %v419, %v961
      %v969 = vmul.bf16 %v421, %v961
      %v970 = vmul.bf16 %v422, %v961
      %v971 = vmul.bf16 %v424, %v961
      %v972 = vmul.bf16 %v425, %v961
      %v973 = vmul.bf16 %v427, %v961
      %v974 = vmul.bf16 %v428, %v961
      %v975 = vmul.bf16 %v430, %v961
      %v976 = vmul.bf16 %v431, %v961
      %v977 = vmul.bf16 %v433, %v961
      %v978 = vmul.bf16 %v434, %v961
      %v979 = vmul.bf16 %v436, %v961
      %v980 = vmul.bf16 %v437, %v961
      %v981 = vmul.bf16 %v439, %v961
      %v982 = vmul.bf16 %v440, %v961
      %v983 = vmul.bf16 %v442, %v961
      %v984 = vmul.bf16 %v443, %v961
      %v985 = vmul.bf16 %v445, %v961
      %v986 = vmul.bf16 %v446, %v961
      %v987 = vmul.bf16 %v448, %v961
      %v988 = vmul.bf16 %v449, %v961
      %v989 = vmul.bf16 %v451, %v961
      %v990 = vmul.bf16 %v452, %v961
      %v991 = vmul.bf16 %v454, %v961
      %v992 = vmul.bf16 %v455, %v961
      %v993 = vmul.bf16 %v457, %v961
      %v994 = vmul.bf16 %v458, %v961
      %v1027 = vunpack.c.l.b16 %v963
      %v1028 = vunpack.c.l.b16 %v964
      %v1029 = vunpack.c.l.b16 %v965
      %v1030 = vunpack.c.l.b16 %v966
      %v1031 = vunpack.c.l.b16 %v967
      %v1032 = vunpack.c.l.b16 %v968
      %v1033 = vunpack.c.l.b16 %v969
      %v1034 = vunpack.c.l.b16 %v970
      %v1035 = vunpack.c.l.b16 %v971
      %v1036 = vunpack.c.l.b16 %v972
      %v1037 = vunpack.c.l.b16 %v973
      %v1038 = vunpack.c.l.b16 %v974
      %v1039 = vunpack.c.l.b16 %v975
      %v1040 = vunpack.c.l.b16 %v976
      %v1041 = vunpack.c.l.b16 %v977
      %v1042 = vunpack.c.l.b16 %v978
      %v1043 = vunpack.c.l.b16 %v979
      %v1044 = vunpack.c.l.b16 %v980
      %v1045 = vunpack.c.l.b16 %v981
      %v1046 = vunpack.c.l.b16 %v982
      %v1047 = vunpack.c.l.b16 %v983
      %v1048 = vunpack.c.l.b16 %v984
      %v1049 = vunpack.c.l.b16 %v985
      %v1050 = vunpack.c.l.b16 %v986
      %v1051 = vunpack.c.l.b16 %v987
      %v1052 = vunpack.c.l.b16 %v988
      %v1053 = vunpack.c.l.b16 %v989
      %v1054 = vunpack.c.l.b16 %v990
      %v1055 = vunpack.c.l.b16 %v991
      %v1056 = vunpack.c.l.b16 %v992
      %v1057 = vunpack.c.l.b16 %v993
      %v1058 = vunpack.c.l.b16 %v994
      %v1059 = vpack.c.b16 %v1028, %v1027
      %v1060 = vpack.c.b16 %v1030, %v1029
      %v1061 = vpack.c.b16 %v1032, %v1031
      %v1062 = vpack.c.b16 %v1034, %v1033
      %v1063 = vpack.c.b16 %v1036, %v1035
      %v1064 = vpack.c.b16 %v1038, %v1037
      %v1065 = vpack.c.b16 %v1040, %v1039
      %v1066 = vpack.c.b16 %v1042, %v1041
      %v1067 = vpack.c.b16 %v1044, %v1043
      %v1068 = vpack.c.b16 %v1046, %v1045
      %v1069 = vpack.c.b16 %v1048, %v1047
      %v1070 = vpack.c.b16 %v1050, %v1049
      %v1071 = vpack.c.b16 %v1052, %v1051
      %v1072 = vpack.c.b16 %v1054, %v1053
      %v1073 = vpack.c.b16 %v1056, %v1055
      %v1074 = vpack.c.b16 %v1058, %v1057
      %v1091 = vadd.bf16 %v936, %v1059
      %v1092 = vadd.bf16 %v937, %v1060
      %v1093 = vadd.bf16 %v938, %v1061
      %v1094 = vadd.bf16 %v939, %v1062
      %v1095 = vadd.bf16 %v940, %v1063
      %v1096 = vadd.bf16 %v941, %v1064
      %v1097 = vadd.bf16 %v942, %v1065
      %v1098 = vadd.bf16 %v943, %v1066
      %v1099 = vadd.bf16 %v944, %v1067
      %v1100 = vadd.bf16 %v945, %v1068
      %v1101 = vadd.bf16 %v946, %v1069
      %v1102 = vadd.bf16 %v947, %v1070
      %v1103 = vadd.bf16 %v948, %v1071
      %v1104 = vadd.bf16 %v949, %v1072
      %v1105 = vadd.bf16 %v950, %v1073
      %v1106 = vadd.bf16 %v951, %v1074
      %v1107 = vld [vmem:[%s410 + $0xc] sm:$0x1]
      %v1108 = vld [vmem:[%s410 + $0x1c] sm:$0x1]
      %v1109 = vld [vmem:[%s410 + $0x2c] sm:$0x1]
      %v1110 = vld [vmem:[%s410 + $0x3c] sm:$0x1]
      %v1111 = vld [vmem:[%s410 + $0x4c] sm:$0x1]
      %v1112 = vld [vmem:[%s410 + $0x5c] sm:$0x1]
      %v1113 = vld [vmem:[%s410 + $0x6c] sm:$0x1]
      %v1114 = vld [vmem:[%s410 + $0x7c] sm:$0x1]
      %v1115 = vld [vmem:[%s410 + $0x8c] sm:$0x1]
      %v1116 = vld [vmem:[%s410 + $0x9c] sm:$0x1]
      %v1117 = vld [vmem:[%s410 + $0xac] sm:$0x1]
      %v1118 = vld [vmem:[%s410 + $0xbc] sm:$0x1]
      %v1119 = vld [vmem:[%s410 + $0xcc] sm:$0x1]
      %v1120 = vld [vmem:[%s410 + $0xdc] sm:$0x1]
      %v1121 = vld [vmem:[%s410 + $0xec] sm:$0x1]
      %v1122 = vld [vmem:[%s410 + $0xfc] sm:$0x1]
      %v1123 = vld [vmem:[%s1] sm:$0x2]
      %v1125 = vpack.i.b16 %v1123, %v1123
      %v1127 = vlaneseq
      %v1128 = vshrl.u32 %v1127, 7
      %v1129 = vsub.s32 1, %v1128
      %v1130 = vrot.slane %v1125, %v1129
      %v1132 = vunpack.c.l.b16 %v1130
      %v1133 = vpack.c.b16 %v1132, %v1132
      %v1135 = vmul.bf16 %v412, %v1133
      %v1136 = vmul.bf16 %v413, %v1133
      %v1137 = vmul.bf16 %v1107, %v1133
      %v1138 = vmul.bf16 %v415, %v1133
      %v1139 = vmul.bf16 %v416, %v1133
      %v1140 = vmul.bf16 %v1108, %v1133
      %v1141 = vmul.bf16 %v418, %v1133
      %v1142 = vmul.bf16 %v419, %v1133
      %v1143 = vmul.bf16 %v1109, %v1133
      %v1144 = vmul.bf16 %v421, %v1133
      %v1145 = vmul.bf16 %v422, %v1133
      %v1146 = vmul.bf16 %v1110, %v1133
      %v1147 = vmul.bf16 %v424, %v1133
      %v1148 = vmul.bf16 %v425, %v1133
      %v1149 = vmul.bf16 %v1111, %v1133
      %v1150 = vmul.bf16 %v427, %v1133
      %v1151 = vmul.bf16 %v428, %v1133
      %v1152 = vmul.bf16 %v1112, %v1133
      %v1153 = vmul.bf16 %v430, %v1133
      %v1154 = vmul.bf16 %v431, %v1133
      %v1155 = vmul.bf16 %v1113, %v1133
      %v1156 = vmul.bf16 %v433, %v1133
      %v1157 = vmul.bf16 %v434, %v1133
      %v1158 = vmul.bf16 %v1114, %v1133
      %v1159 = vmul.bf16 %v436, %v1133
      %v1160 = vmul.bf16 %v437, %v1133
      %v1161 = vmul.bf16 %v1115, %v1133
      %v1162 = vmul.bf16 %v439, %v1133
      %v1163 = vmul.bf16 %v440, %v1133
      %v1164 = vmul.bf16 %v1116, %v1133
      %v1165 = vmul.bf16 %v442, %v1133
      %v1166 = vmul.bf16 %v443, %v1133
      %v1167 = vmul.bf16 %v1117, %v1133
      %v1168 = vmul.bf16 %v445, %v1133
      %v1169 = vmul.bf16 %v446, %v1133
      %v1170 = vmul.bf16 %v1118, %v1133
      %v1171 = vmul.bf16 %v448, %v1133
      %v1172 = vmul.bf16 %v449, %v1133
      %v1173 = vmul.bf16 %v1119, %v1133
      %v1174 = vmul.bf16 %v451, %v1133
      %v1175 = vmul.bf16 %v452, %v1133
      %v1176 = vmul.bf16 %v1120, %v1133
      %v1177 = vmul.bf16 %v454, %v1133
      %v1178 = vmul.bf16 %v455, %v1133
      %v1179 = vmul.bf16 %v1121, %v1133
      %v1180 = vmul.bf16 %v457, %v1133
      %v1181 = vmul.bf16 %v458, %v1133
      %v1182 = vmul.bf16 %v1122, %v1133
      %v1231 = vunpack.c.l.b16 %v1135
      %v1232 = vunpack.c.l.b16 %v1136
      %v1233 = vunpack.c.l.b16 %v1137
      %v1234 = vunpack.c.l.b16 %v1138
      %v1235 = vunpack.c.l.b16 %v1139
      %v1236 = vunpack.c.l.b16 %v1140
      %v1237 = vunpack.c.l.b16 %v1141
      %v1238 = vunpack.c.l.b16 %v1142
      %v1239 = vunpack.c.l.b16 %v1143
      %v1240 = vunpack.c.l.b16 %v1144
      %v1241 = vunpack.c.l.b16 %v1145
      %v1242 = vunpack.c.l.b16 %v1146
      %v1243 = vunpack.c.l.b16 %v1147
      %v1244 = vunpack.c.l.b16 %v1148
      %v1245 = vunpack.c.l.b16 %v1149
      %v1246 = vunpack.c.l.b16 %v1150
      %v1247 = vunpack.c.l.b16 %v1151
      %v1248 = vunpack.c.l.b16 %v1152
      %v1249 = vunpack.c.l.b16 %v1153
      %v1250 = vunpack.c.l.b16 %v1154
      %v1251 = vunpack.c.l.b16 %v1155
      %v1252 = vunpack.c.l.b16 %v1156
      %v1253 = vunpack.c.l.b16 %v1157
      %v1254 = vunpack.c.l.b16 %v1158
      %v1255 = vunpack.c.l.b16 %v1159
      %v1256 = vunpack.c.l.b16 %v1160
      %v1257 = vunpack.c.l.b16 %v1161
      %v1258 = vunpack.c.l.b16 %v1162
      %v1259 = vunpack.c.l.b16 %v1163
      %v1260 = vunpack.c.l.b16 %v1164
      %v1261 = vunpack.c.l.b16 %v1165
      %v1262 = vunpack.c.l.b16 %v1166
      %v1263 = vunpack.c.l.b16 %v1167
      %v1264 = vunpack.c.l.b16 %v1168
      %v1265 = vunpack.c.l.b16 %v1169
      %v1266 = vunpack.c.l.b16 %v1170
      %v1267 = vunpack.c.l.b16 %v1171
      %v1268 = vunpack.c.l.b16 %v1172
      %v1269 = vunpack.c.l.b16 %v1173
      %v1270 = vunpack.c.l.b16 %v1174
      %v1271 = vunpack.c.l.b16 %v1175
      %v1272 = vunpack.c.l.b16 %v1176
      %v1273 = vunpack.c.l.b16 %v1177
      %v1274 = vunpack.c.l.b16 %v1178
      %v1275 = vunpack.c.l.b16 %v1179
      %v1276 = vunpack.c.l.b16 %v1180
      %v1277 = vunpack.c.l.b16 %v1181
      %v1278 = vunpack.c.l.b16 %v1182
      %v1279 = vpack.c.b16 %v1232, %v1231
      %v1280 = vpack.c.b16 %v1233, %v1233
      %v1281 = vpack.c.b16 %v1235, %v1234
      %v1282 = vpack.c.b16 %v1236, %v1236
      %v1283 = vpack.c.b16 %v1238, %v1237
      %v1284 = vpack.c.b16 %v1239, %v1239
      %v1285 = vpack.c.b16 %v1241, %v1240
      %v1286 = vpack.c.b16 %v1242, %v1242
      %v1287 = vpack.c.b16 %v1244, %v1243
      %v1288 = vpack.c.b16 %v1245, %v1245
      %v1289 = vpack.c.b16 %v1247, %v1246
      %v1290 = vpack.c.b16 %v1248, %v1248
      %v1291 = vpack.c.b16 %v1250, %v1249
      %v1292 = vpack.c.b16 %v1251, %v1251
      %v1293 = vpack.c.b16 %v1253, %v1252
      %v1294 = vpack.c.b16 %v1254, %v1254
      %v1295 = vpack.c.b16 %v1256, %v1255
      %v1296 = vpack.c.b16 %v1257, %v1257
      %v1297 = vpack.c.b16 %v1259, %v1258
      %v1298 = vpack.c.b16 %v1260, %v1260
      %v1299 = vpack.c.b16 %v1262, %v1261
      %v1300 = vpack.c.b16 %v1263, %v1263
      %v1301 = vpack.c.b16 %v1265, %v1264
      %v1302 = vpack.c.b16 %v1266, %v1266
      %v1303 = vpack.c.b16 %v1268, %v1267
      %v1304 = vpack.c.b16 %v1269, %v1269
      %v1305 = vpack.c.b16 %v1271, %v1270
      %v1306 = vpack.c.b16 %v1272, %v1272
      %v1307 = vpack.c.b16 %v1274, %v1273
      %v1308 = vpack.c.b16 %v1275, %v1275
      %v1309 = vpack.c.b16 %v1277, %v1276
      %v1310 = vpack.c.b16 %v1278, %v1278
      %vm1311 = vsmask.f32 7424
      %v1313 = vshrl.u32 %v1279, 16
      %v1315 = vshll.u32 %v1279, 16
      %v1317 = vrot.slane %v1315, 1
      %v1318 = vor.u32 %v1313, %v1317
      %v1320 = vshll.u32 %v1280, 16
      %v1322 = vrot.slane %v1320, 1
      %v1323 = vsel %vm1311, %v1318, %v1322
      %v1325 = vshrl.u32 %v1281, 16
      %v1327 = vshll.u32 %v1281, 16
      %v1329 = vrot.slane %v1327, 1
      %v1330 = vor.u32 %v1325, %v1329
      %v1332 = vshll.u32 %v1282, 16
      %v1334 = vrot.slane %v1332, 1
      %v1335 = vsel %vm1311, %v1330, %v1334
      %v1337 = vshrl.u32 %v1283, 16
      %v1339 = vshll.u32 %v1283, 16
      %v1341 = vrot.slane %v1339, 1
      %v1342 = vor.u32 %v1337, %v1341
      %v1344 = vshll.u32 %v1284, 16
      %v1346 = vrot.slane %v1344, 1
      %v1347 = vsel %vm1311, %v1342, %v1346
      %v1349 = vshrl.u32 %v1285, 16
      %v1351 = vshll.u32 %v1285, 16
      %v1353 = vrot.slane %v1351, 1
      %v1354 = vor.u32 %v1349, %v1353
      %v1356 = vshll.u32 %v1286, 16
      %v1358 = vrot.slane %v1356, 1
      %v1359 = vsel %vm1311, %v1354, %v1358
      %v1361 = vshrl.u32 %v1287, 16
      %v1363 = vshll.u32 %v1287, 16
      %v1365 = vrot.slane %v1363, 1
      %v1366 = vor.u32 %v1361, %v1365
      %v1368 = vshll.u32 %v1288, 16
      %v1370 = vrot.slane %v1368, 1
      %v1371 = vsel %vm1311, %v1366, %v1370
      %v1373 = vshrl.u32 %v1289, 16
      %v1375 = vshll.u32 %v1289, 16
      %v1377 = vrot.slane %v1375, 1
      %v1378 = vor.u32 %v1373, %v1377
      %v1380 = vshll.u32 %v1290, 16
      %v1382 = vrot.slane %v1380, 1
      %v1383 = vsel %vm1311, %v1378, %v1382
      %v1385 = vshrl.u32 %v1291, 16
      %v1387 = vshll.u32 %v1291, 16
      %v1389 = vrot.slane %v1387, 1
      %v1390 = vor.u32 %v1385, %v1389
      %v1392 = vshll.u32 %v1292, 16
      %v1394 = vrot.slane %v1392, 1
      %v1395 = vsel %vm1311, %v1390, %v1394
      %v1397 = vshrl.u32 %v1293, 16
      %v1399 = vshll.u32 %v1293, 16
      %v1401 = vrot.slane %v1399, 1
      %v1402 = vor.u32 %v1397, %v1401
      %v1404 = vshll.u32 %v1294, 16
      %v1406 = vrot.slane %v1404, 1
      %v1407 = vsel %vm1311, %v1402, %v1406
      %v1409 = vshrl.u32 %v1295, 16
      %v1411 = vshll.u32 %v1295, 16
      %v1413 = vrot.slane %v1411, 1
      %v1414 = vor.u32 %v1409, %v1413
      %v1416 = vshll.u32 %v1296, 16
      %v1418 = vrot.slane %v1416, 1
      %v1419 = vsel %vm1311, %v1414, %v1418
      %v1421 = vshrl.u32 %v1297, 16
      %v1423 = vshll.u32 %v1297, 16
      %v1425 = vrot.slane %v1423, 1
      %v1426 = vor.u32 %v1421, %v1425
      %v1428 = vshll.u32 %v1298, 16
      %v1430 = vrot.slane %v1428, 1
      %v1431 = vsel %vm1311, %v1426, %v1430
      %v1433 = vshrl.u32 %v1299, 16
      %v1435 = vshll.u32 %v1299, 16
      %v1437 = vrot.slane %v1435, 1
      %v1438 = vor.u32 %v1433, %v1437
      %v1440 = vshll.u32 %v1300, 16
      %v1442 = vrot.slane %v1440, 1
      %v1443 = vsel %vm1311, %v1438, %v1442
      %v1445 = vshrl.u32 %v1301, 16
      %v1447 = vshll.u32 %v1301, 16
      %v1449 = vrot.slane %v1447, 1
      %v1450 = vor.u32 %v1445, %v1449
      %v1452 = vshll.u32 %v1302, 16
      %v1454 = vrot.slane %v1452, 1
      %v1455 = vsel %vm1311, %v1450, %v1454
      %v1457 = vshrl.u32 %v1303, 16
      %v1459 = vshll.u32 %v1303, 16
      %v1461 = vrot.slane %v1459, 1
      %v1462 = vor.u32 %v1457, %v1461
      %v1464 = vshll.u32 %v1304, 16
      %v1466 = vrot.slane %v1464, 1
      %v1467 = vsel %vm1311, %v1462, %v1466
      %v1469 = vshrl.u32 %v1305, 16
      %v1471 = vshll.u32 %v1305, 16
      %v1473 = vrot.slane %v1471, 1
      %v1474 = vor.u32 %v1469, %v1473
      %v1476 = vshll.u32 %v1306, 16
      %v1478 = vrot.slane %v1476, 1
      %v1479 = vsel %vm1311, %v1474, %v1478
      %v1481 = vshrl.u32 %v1307, 16
      %v1483 = vshll.u32 %v1307, 16
      %v1485 = vrot.slane %v1483, 1
      %v1486 = vor.u32 %v1481, %v1485
      %v1488 = vshll.u32 %v1308, 16
      %v1490 = vrot.slane %v1488, 1
      %v1491 = vsel %vm1311, %v1486, %v1490
      %v1493 = vshrl.u32 %v1309, 16
      %v1495 = vshll.u32 %v1309, 16
      %v1497 = vrot.slane %v1495, 1
      %v1498 = vor.u32 %v1493, %v1497
      %v1500 = vshll.u32 %v1310, 16
      %v1502 = vrot.slane %v1500, 1
      %v1503 = vsel %vm1311, %v1498, %v1502
      %v1520 = vadd.bf16 %v1091, %v1323
      %v1521 = vadd.bf16 %v1092, %v1335
      %v1522 = vadd.bf16 %v1093, %v1347
      %v1523 = vadd.bf16 %v1094, %v1359
      %v1524 = vadd.bf16 %v1095, %v1371
      %v1525 = vadd.bf16 %v1096, %v1383
      %v1526 = vadd.bf16 %v1097, %v1395
      %v1527 = vadd.bf16 %v1098, %v1407
      %v1528 = vadd.bf16 %v1099, %v1419
      %v1529 = vadd.bf16 %v1100, %v1431
      %v1530 = vadd.bf16 %v1101, %v1443
      %v1531 = vadd.bf16 %v1102, %v1455
      %v1532 = vadd.bf16 %v1103, %v1467
      %v1533 = vadd.bf16 %v1104, %v1479
      %v1534 = vadd.bf16 %v1105, %v1491
      %v1535 = vadd.bf16 %v1106, %v1503
      %s1536 = sadd.s32 %s399, 1
      %s1537 = smul.u32 %s1536, 4
      %s1538 = smul.addr %s1537, 4
      %s1539 = scalar_lea.vmem [#allocation2], %s1538
      %v1540 = vld [vmem:[%s1539] sm:$0x8]
      %v1541 = vld [vmem:[%s1539 + $0x4] sm:$0xf]
      %v1542 = vld [vmem:[%s1539 + $0x8] sm:$0xf]
      %v1543 = vld [vmem:[%s1539 + $0x10] sm:$0x8]
      %v1544 = vld [vmem:[%s1539 + $0x14] sm:$0xf]
      %v1545 = vld [vmem:[%s1539 + $0x18] sm:$0xf]
      %v1546 = vld [vmem:[%s1539 + $0x20] sm:$0x8]
      %v1547 = vld [vmem:[%s1539 + $0x24] sm:$0xf]
      %v1548 = vld [vmem:[%s1539 + $0x28] sm:$0xf]
      %v1549 = vld [vmem:[%s1539 + $0x30] sm:$0x8]
      %v1550 = vld [vmem:[%s1539 + $0x34] sm:$0xf]
      %v1551 = vld [vmem:[%s1539 + $0x38] sm:$0xf]
      %v1552 = vld [vmem:[%s1539 + $0x40] sm:$0x8]
      %v1553 = vld [vmem:[%s1539 + $0x44] sm:$0xf]
      %v1554 = vld [vmem:[%s1539 + $0x48] sm:$0xf]
      %v1555 = vld [vmem:[%s1539 + $0x50] sm:$0x8]
      %v1556 = vld [vmem:[%s1539 + $0x54] sm:$0xf]
      %v1557 = vld [vmem:[%s1539 + $0x58] sm:$0xf]
      %v1558 = vld [vmem:[%s1539 + $0x60] sm:$0x8]
      %v1559 = vld [vmem:[%s1539 + $0x64] sm:$0xf]
      %v1560 = vld [vmem:[%s1539 + $0x68] sm:$0xf]
      %v1561 = vld [vmem:[%s1539 + $0x70] sm:$0x8]
      %v1562 = vld [vmem:[%s1539 + $0x74] sm:$0xf]
      %v1563 = vld [vmem:[%s1539 + $0x78] sm:$0xf]
      %v1564 = vld [vmem:[%s1539 + $0x80] sm:$0x8]
      %v1565 = vld [vmem:[%s1539 + $0x84] sm:$0xf]
      %v1566 = vld [vmem:[%s1539 + $0x88] sm:$0xf]
      %v1567 = vld [vmem:[%s1539 + $0x90] sm:$0x8]
      %v1568 = vld [vmem:[%s1539 + $0x94] sm:$0xf]
      %v1569 = vld [vmem:[%s1539 + $0x98] sm:$0xf]
      %v1570 = vld [vmem:[%s1539 + $0xa0] sm:$0x8]
      %v1571 = vld [vmem:[%s1539 + $0xa4] sm:$0xf]
      %v1572 = vld [vmem:[%s1539 + $0xa8] sm:$0xf]
      %v1573 = vld [vmem:[%s1539 + $0xb0] sm:$0x8]
      %v1574 = vld [vmem:[%s1539 + $0xb4] sm:$0xf]
      %v1575 = vld [vmem:[%s1539 + $0xb8] sm:$0xf]
      %v1576 = vld [vmem:[%s1539 + $0xc0] sm:$0x8]
      %v1577 = vld [vmem:[%s1539 + $0xc4] sm:$0xf]
      %v1578 = vld [vmem:[%s1539 + $0xc8] sm:$0xf]
      %v1579 = vld [vmem:[%s1539 + $0xd0] sm:$0x8]
      %v1580 = vld [vmem:[%s1539 + $0xd4] sm:$0xf]
      %v1581 = vld [vmem:[%s1539 + $0xd8] sm:$0xf]
      %v1582 = vld [vmem:[%s1539 + $0xe0] sm:$0x8]
      %v1583 = vld [vmem:[%s1539 + $0xe4] sm:$0xf]
      %v1584 = vld [vmem:[%s1539 + $0xe8] sm:$0xf]
      %v1585 = vld [vmem:[%s1539 + $0xf0] sm:$0x8]
      %v1586 = vld [vmem:[%s1539 + $0xf4] sm:$0xf]
      %v1587 = vld [vmem:[%s1539 + $0xf8] sm:$0xf]
      %s1588 = scalar_lea.vmem %s1, 2
      %v1589 = vld [vmem:[%s1588] sm:$0x1]
      %v1591 = vpack.i.b16 %v1589, %v1589
      %v1593 = vlaneseq
      %v1594 = vshrl.u32 %v1593, 7
      %v1595 = vsub.s32 0, %v1594
      %v1596 = vrot.slane %v1591, %v1595
      %v1598 = vunpack.c.l.b16 %v1596
      %v1599 = vpack.c.b16 %v1598, %v1598
      %v1601 = vmul.bf16 %v1540, %v1599
      %v1602 = vmul.bf16 %v1541, %v1599
      %v1603 = vmul.bf16 %v1542, %v1599
      %v1604 = vmul.bf16 %v1543, %v1599
      %v1605 = vmul.bf16 %v1544, %v1599
      %v1606 = vmul.bf16 %v1545, %v1599
      %v1607 = vmul.bf16 %v1546, %v1599
      %v1608 = vmul.bf16 %v1547, %v1599
      %v1609 = vmul.bf16 %v1548, %v1599
      %v1610 = vmul.bf16 %v1549, %v1599
      %v1611 = vmul.bf16 %v1550, %v1599
      %v1612 = vmul.bf16 %v1551, %v1599
      %v1613 = vmul.bf16 %v1552, %v1599
      %v1614 = vmul.bf16 %v1553, %v1599
      %v1615 = vmul.bf16 %v1554, %v1599
      %v1616 = vmul.bf16 %v1555, %v1599
      %v1617 = vmul.bf16 %v1556, %v1599
      %v1618 = vmul.bf16 %v1557, %v1599
      %v1619 = vmul.bf16 %v1558, %v1599
      %v1620 = vmul.bf16 %v1559, %v1599
      %v1621 = vmul.bf16 %v1560, %v1599
      %v1622 = vmul.bf16 %v1561, %v1599
      %v1623 = vmul.bf16 %v1562, %v1599
      %v1624 = vmul.bf16 %v1563, %v1599
      %v1625 = vmul.bf16 %v1564, %v1599
      %v1626 = vmul.bf16 %v1565, %v1599
      %v1627 = vmul.bf16 %v1566, %v1599
      %v1628 = vmul.bf16 %v1567, %v1599
      %v1629 = vmul.bf16 %v1568, %v1599
      %v1630 = vmul.bf16 %v1569, %v1599
      %v1631 = vmul.bf16 %v1570, %v1599
      %v1632 = vmul.bf16 %v1571, %v1599
      %v1633 = vmul.bf16 %v1572, %v1599
      %v1634 = vmul.bf16 %v1573, %v1599
      %v1635 = vmul.bf16 %v1574, %v1599
      %v1636 = vmul.bf16 %v1575, %v1599
      %v1637 = vmul.bf16 %v1576, %v1599
      %v1638 = vmul.bf16 %v1577, %v1599
      %v1639 = vmul.bf16 %v1578, %v1599
      %v1640 = vmul.bf16 %v1579, %v1599
      %v1641 = vmul.bf16 %v1580, %v1599
      %v1642 = vmul.bf16 %v1581, %v1599
      %v1643 = vmul.bf16 %v1582, %v1599
      %v1644 = vmul.bf16 %v1583, %v1599
      %v1645 = vmul.bf16 %v1584, %v1599
      %v1646 = vmul.bf16 %v1585, %v1599
      %v1647 = vmul.bf16 %v1586, %v1599
      %v1648 = vmul.bf16 %v1587, %v1599
      %v1697 = vunpack.c.l.b16 %v1601
      %v1698 = vunpack.c.l.b16 %v1602
      %v1699 = vunpack.c.l.b16 %v1603
      %v1700 = vunpack.c.l.b16 %v1604
      %v1701 = vunpack.c.l.b16 %v1605
      %v1702 = vunpack.c.l.b16 %v1606
      %v1703 = vunpack.c.l.b16 %v1607
      %v1704 = vunpack.c.l.b16 %v1608
      %v1705 = vunpack.c.l.b16 %v1609
      %v1706 = vunpack.c.l.b16 %v1610
      %v1707 = vunpack.c.l.b16 %v1611
      %v1708 = vunpack.c.l.b16 %v1612
      %v1709 = vunpack.c.l.b16 %v1613
      %v1710 = vunpack.c.l.b16 %v1614
      %v1711 = vunpack.c.l.b16 %v1615
      %v1712 = vunpack.c.l.b16 %v1616
      %v1713 = vunpack.c.l.b16 %v1617
      %v1714 = vunpack.c.l.b16 %v1618
      %v1715 = vunpack.c.l.b16 %v1619
      %v1716 = vunpack.c.l.b16 %v1620
      %v1717 = vunpack.c.l.b16 %v1621
      %v1718 = vunpack.c.l.b16 %v1622
      %v1719 = vunpack.c.l.b16 %v1623
      %v1720 = vunpack.c.l.b16 %v1624
      %v1721 = vunpack.c.l.b16 %v1625
      %v1722 = vunpack.c.l.b16 %v1626
      %v1723 = vunpack.c.l.b16 %v1627
      %v1724 = vunpack.c.l.b16 %v1628
      %v1725 = vunpack.c.l.b16 %v1629
      %v1726 = vunpack.c.l.b16 %v1630
      %v1727 = vunpack.c.l.b16 %v1631
      %v1728 = vunpack.c.l.b16 %v1632
      %v1729 = vunpack.c.l.b16 %v1633
      %v1730 = vunpack.c.l.b16 %v1634
      %v1731 = vunpack.c.l.b16 %v1635
      %v1732 = vunpack.c.l.b16 %v1636
      %v1733 = vunpack.c.l.b16 %v1637
      %v1734 = vunpack.c.l.b16 %v1638
      %v1735 = vunpack.c.l.b16 %v1639
      %v1736 = vunpack.c.l.b16 %v1640
      %v1737 = vunpack.c.l.b16 %v1641
      %v1738 = vunpack.c.l.b16 %v1642
      %v1739 = vunpack.c.l.b16 %v1643
      %v1740 = vunpack.c.l.b16 %v1644
      %v1741 = vunpack.c.l.b16 %v1645
      %v1742 = vunpack.c.l.b16 %v1646
      %v1743 = vunpack.c.l.b16 %v1647
      %v1744 = vunpack.c.l.b16 %v1648
      %v1745 = vpack.c.b16 %v1698, %v1697
      %v1746 = vpack.c.b16 %v1699, %v1699
      %v1747 = vpack.c.b16 %v1701, %v1700
      %v1748 = vpack.c.b16 %v1702, %v1702
      %v1749 = vpack.c.b16 %v1704, %v1703
      %v1750 = vpack.c.b16 %v1705, %v1705
      %v1751 = vpack.c.b16 %v1707, %v1706
      %v1752 = vpack.c.b16 %v1708, %v1708
      %v1753 = vpack.c.b16 %v1710, %v1709
      %v1754 = vpack.c.b16 %v1711, %v1711
      %v1755 = vpack.c.b16 %v1713, %v1712
      %v1756 = vpack.c.b16 %v1714, %v1714
      %v1757 = vpack.c.b16 %v1716, %v1715
      %v1758 = vpack.c.b16 %v1717, %v1717
      %v1759 = vpack.c.b16 %v1719, %v1718
      %v1760 = vpack.c.b16 %v1720, %v1720
      %v1761 = vpack.c.b16 %v1722, %v1721
      %v1762 = vpack.c.b16 %v1723, %v1723
      %v1763 = vpack.c.b16 %v1725, %v1724
      %v1764 = vpack.c.b16 %v1726, %v1726
      %v1765 = vpack.c.b16 %v1728, %v1727
      %v1766 = vpack.c.b16 %v1729, %v1729
      %v1767 = vpack.c.b16 %v1731, %v1730
      %v1768 = vpack.c.b16 %v1732, %v1732
      %v1769 = vpack.c.b16 %v1734, %v1733
      %v1770 = vpack.c.b16 %v1735, %v1735
      %v1771 = vpack.c.b16 %v1737, %v1736
      %v1772 = vpack.c.b16 %v1738, %v1738
      %v1773 = vpack.c.b16 %v1740, %v1739
      %v1774 = vpack.c.b16 %v1741, %v1741
      %v1775 = vpack.c.b16 %v1743, %v1742
      %v1776 = vpack.c.b16 %v1744, %v1744
      %v1778 = vshrl.u32 %v1745, 16
      %v1780 = vrot.slane %v1778, 3
      %v1781 = vshll.u32 %v1745, 16
      %v1783 = vrot.slane %v1781, 4
      %v1784 = vor.u32 %v1780, %v1783
      %v1786 = vshrl.u32 %v1746, 16
      %v1788 = vrot.slane %v1786, 3
      %v1789 = vshll.u32 %v1746, 16
      %v1791 = vrot.slane %v1789, 4
      %v1792 = vor.u32 %v1788, %v1791
      %v1793 = vsel %vm647, %v1784, %v1792
      %v1795 = vshrl.u32 %v1747, 16
      %v1797 = vrot.slane %v1795, 3
      %v1798 = vshll.u32 %v1747, 16
      %v1800 = vrot.slane %v1798, 4
      %v1801 = vor.u32 %v1797, %v1800
      %v1803 = vshrl.u32 %v1748, 16
      %v1805 = vrot.slane %v1803, 3
      %v1806 = vshll.u32 %v1748, 16
      %v1808 = vrot.slane %v1806, 4
      %v1809 = vor.u32 %v1805, %v1808
      %v1810 = vsel %vm647, %v1801, %v1809
      %v1812 = vshrl.u32 %v1749, 16
      %v1814 = vrot.slane %v1812, 3
      %v1815 = vshll.u32 %v1749, 16
      %v1817 = vrot.slane %v1815, 4
      %v1818 = vor.u32 %v1814, %v1817
      %v1820 = vshrl.u32 %v1750, 16
      %v1822 = vrot.slane %v1820, 3
      %v1823 = vshll.u32 %v1750, 16
      %v1825 = vrot.slane %v1823, 4
      %v1826 = vor.u32 %v1822, %v1825
      %v1827 = vsel %vm647, %v1818, %v1826
      %v1829 = vshrl.u32 %v1751, 16
      %v1831 = vrot.slane %v1829, 3
      %v1832 = vshll.u32 %v1751, 16
      %v1834 = vrot.slane %v1832, 4
      %v1835 = vor.u32 %v1831, %v1834
      %v1837 = vshrl.u32 %v1752, 16
      %v1839 = vrot.slane %v1837, 3
      %v1840 = vshll.u32 %v1752, 16
      %v1842 = vrot.slane %v1840, 4
      %v1843 = vor.u32 %v1839, %v1842
      %v1844 = vsel %vm647, %v1835, %v1843
      %v1846 = vshrl.u32 %v1753, 16
      %v1848 = vrot.slane %v1846, 3
      %v1849 = vshll.u32 %v1753, 16
      %v1851 = vrot.slane %v1849, 4
      %v1852 = vor.u32 %v1848, %v1851
      %v1854 = vshrl.u32 %v1754, 16
      %v1856 = vrot.slane %v1854, 3
      %v1857 = vshll.u32 %v1754, 16
      %v1859 = vrot.slane %v1857, 4
      %v1860 = vor.u32 %v1856, %v1859
      %v1861 = vsel %vm647, %v1852, %v1860
      %v1863 = vshrl.u32 %v1755, 16
      %v1865 = vrot.slane %v1863, 3
      %v1866 = vshll.u32 %v1755, 16
      %v1868 = vrot.slane %v1866, 4
      %v1869 = vor.u32 %v1865, %v1868
      %v1871 = vshrl.u32 %v1756, 16
      %v1873 = vrot.slane %v1871, 3
      %v1874 = vshll.u32 %v1756, 16
      %v1876 = vrot.slane %v1874, 4
      %v1877 = vor.u32 %v1873, %v1876
      %v1878 = vsel %vm647, %v1869, %v1877
      %v1880 = vshrl.u32 %v1757, 16
      %v1882 = vrot.slane %v1880, 3
      %v1883 = vshll.u32 %v1757, 16
      %v1885 = vrot.slane %v1883, 4
      %v1886 = vor.u32 %v1882, %v1885
      %v1888 = vshrl.u32 %v1758, 16
      %v1890 = vrot.slane %v1888, 3
      %v1891 = vshll.u32 %v1758, 16
      %v1893 = vrot.slane %v1891, 4
      %v1894 = vor.u32 %v1890, %v1893
      %v1895 = vsel %vm647, %v1886, %v1894
      %v1897 = vshrl.u32 %v1759, 16
      %v1899 = vrot.slane %v1897, 3
      %v1900 = vshll.u32 %v1759, 16
      %v1902 = vrot.slane %v1900, 4
      %v1903 = vor.u32 %v1899, %v1902
      %v1905 = vshrl.u32 %v1760, 16
      %v1907 = vrot.slane %v1905, 3
      %v1908 = vshll.u32 %v1760, 16
      %v1910 = vrot.slane %v1908, 4
      %v1911 = vor.u32 %v1907, %v1910
      %v1912 = vsel %vm647, %v1903, %v1911
      %v1914 = vshrl.u32 %v1761, 16
      %v1916 = vrot.slane %v1914, 3
      %v1917 = vshll.u32 %v1761, 16
      %v1919 = vrot.slane %v1917, 4
      %v1920 = vor.u32 %v1916, %v1919
      %v1922 = vshrl.u32 %v1762, 16
      %v1924 = vrot.slane %v1922, 3
      %v1925 = vshll.u32 %v1762, 16
      %v1927 = vrot.slane %v1925, 4
      %v1928 = vor.u32 %v1924, %v1927
      %v1929 = vsel %vm647, %v1920, %v1928
      %v1931 = vshrl.u32 %v1763, 16
      %v1933 = vrot.slane %v1931, 3
      %v1934 = vshll.u32 %v1763, 16
      %v1936 = vrot.slane %v1934, 4
      %v1937 = vor.u32 %v1933, %v1936
      %v1939 = vshrl.u32 %v1764, 16
      %v1941 = vrot.slane %v1939, 3
      %v1942 = vshll.u32 %v1764, 16
      %v1944 = vrot.slane %v1942, 4
      %v1945 = vor.u32 %v1941, %v1944
      %v1946 = vsel %vm647, %v1937, %v1945
      %v1948 = vshrl.u32 %v1765, 16
      %v1950 = vrot.slane %v1948, 3
      %v1951 = vshll.u32 %v1765, 16
      %v1953 = vrot.slane %v1951, 4
      %v1954 = vor.u32 %v1950, %v1953
      %v1956 = vshrl.u32 %v1766, 16
      %v1958 = vrot.slane %v1956, 3
      %v1959 = vshll.u32 %v1766, 16
      %v1961 = vrot.slane %v1959, 4
      %v1962 = vor.u32 %v1958, %v1961
      %v1963 = vsel %vm647, %v1954, %v1962
      %v1965 = vshrl.u32 %v1767, 16
      %v1967 = vrot.slane %v1965, 3
      %v1968 = vshll.u32 %v1767, 16
      %v1970 = vrot.slane %v1968, 4
      %v1971 = vor.u32 %v1967, %v1970
      %v1973 = vshrl.u32 %v1768, 16
      %v1975 = vrot.slane %v1973, 3
      %v1976 = vshll.u32 %v1768, 16
      %v1978 = vrot.slane %v1976, 4
      %v1979 = vor.u32 %v1975, %v1978
      %v1980 = vsel %vm647, %v1971, %v1979
      %v1982 = vshrl.u32 %v1769, 16
      %v1984 = vrot.slane %v1982, 3
      %v1985 = vshll.u32 %v1769, 16
      %v1987 = vrot.slane %v1985, 4
      %v1988 = vor.u32 %v1984, %v1987
      %v1990 = vshrl.u32 %v1770, 16
      %v1992 = vrot.slane %v1990, 3
      %v1993 = vshll.u32 %v1770, 16
      %v1995 = vrot.slane %v1993, 4
      %v1996 = vor.u32 %v1992, %v1995
      %v1997 = vsel %vm647, %v1988, %v1996
      %v1999 = vshrl.u32 %v1771, 16
      %v2001 = vrot.slane %v1999, 3
      %v2002 = vshll.u32 %v1771, 16
      %v2004 = vrot.slane %v2002, 4
      %v2005 = vor.u32 %v2001, %v2004
      %v2007 = vshrl.u32 %v1772, 16
      %v2009 = vrot.slane %v2007, 3
      %v2010 = vshll.u32 %v1772, 16
      %v2012 = vrot.slane %v2010, 4
      %v2013 = vor.u32 %v2009, %v2012
      %v2014 = vsel %vm647, %v2005, %v2013
      %v2016 = vshrl.u32 %v1773, 16
      %v2018 = vrot.slane %v2016, 3
      %v2019 = vshll.u32 %v1773, 16
      %v2021 = vrot.slane %v2019, 4
      %v2022 = vor.u32 %v2018, %v2021
      %v2024 = vshrl.u32 %v1774, 16
      %v2026 = vrot.slane %v2024, 3
      %v2027 = vshll.u32 %v1774, 16
      %v2029 = vrot.slane %v2027, 4
      %v2030 = vor.u32 %v2026, %v2029
      %v2031 = vsel %vm647, %v2022, %v2030
      %v2033 = vshrl.u32 %v1775, 16
      %v2035 = vrot.slane %v2033, 3
      %v2036 = vshll.u32 %v1775, 16
      %v2038 = vrot.slane %v2036, 4
      %v2039 = vor.u32 %v2035, %v2038
      %v2041 = vshrl.u32 %v1776, 16
      %v2043 = vrot.slane %v2041, 3
      %v2044 = vshll.u32 %v1776, 16
      %v2046 = vrot.slane %v2044, 4
      %v2047 = vor.u32 %v2043, %v2046
      %v2048 = vsel %vm647, %v2039, %v2047
      %v2065 = vadd.bf16 %v1520, %v1793
      %v2066 = vadd.bf16 %v1521, %v1810
      %v2067 = vadd.bf16 %v1522, %v1827
      %v2068 = vadd.bf16 %v1523, %v1844
      %v2069 = vadd.bf16 %v1524, %v1861
      %v2070 = vadd.bf16 %v1525, %v1878
      %v2071 = vadd.bf16 %v1526, %v1895
      %v2072 = vadd.bf16 %v1527, %v1912
      %v2073 = vadd.bf16 %v1528, %v1929
      %v2074 = vadd.bf16 %v1529, %v1946
      %v2075 = vadd.bf16 %v1530, %v1963
      %v2076 = vadd.bf16 %v1531, %v1980
      %v2077 = vadd.bf16 %v1532, %v1997
      %v2078 = vadd.bf16 %v1533, %v2014
      %v2079 = vadd.bf16 %v1534, %v2031
      %v2080 = vadd.bf16 %v1535, %v2048
      %v2081 = vshrl.u32 %v1589, 16
      %v2082 = vpack.i.b16 %v2081, %v2081
      %v2084 = vlaneseq
      %v2085 = vshrl.u32 %v2084, 7
      %v2086 = vsub.s32 0, %v2085
      %v2087 = vrot.slane %v2082, %v2086
      %v2089 = vunpack.c.l.b16 %v2087
      %v2090 = vpack.c.b16 %v2089, %v2089
      %v2092 = vmul.bf16 %v1541, %v2090
      %v2093 = vmul.bf16 %v1542, %v2090
      %v2094 = vmul.bf16 %v1544, %v2090
      %v2095 = vmul.bf16 %v1545, %v2090
      %v2096 = vmul.bf16 %v1547, %v2090
      %v2097 = vmul.bf16 %v1548, %v2090
      %v2098 = vmul.bf16 %v1550, %v2090
      %v2099 = vmul.bf16 %v1551, %v2090
      %v2100 = vmul.bf16 %v1553, %v2090
      %v2101 = vmul.bf16 %v1554, %v2090
      %v2102 = vmul.bf16 %v1556, %v2090
      %v2103 = vmul.bf16 %v1557, %v2090
      %v2104 = vmul.bf16 %v1559, %v2090
      %v2105 = vmul.bf16 %v1560, %v2090
      %v2106 = vmul.bf16 %v1562, %v2090
      %v2107 = vmul.bf16 %v1563, %v2090
      %v2108 = vmul.bf16 %v1565, %v2090
      %v2109 = vmul.bf16 %v1566, %v2090
      %v2110 = vmul.bf16 %v1568, %v2090
      %v2111 = vmul.bf16 %v1569, %v2090
      %v2112 = vmul.bf16 %v1571, %v2090
      %v2113 = vmul.bf16 %v1572, %v2090
      %v2114 = vmul.bf16 %v1574, %v2090
      %v2115 = vmul.bf16 %v1575, %v2090
      %v2116 = vmul.bf16 %v1577, %v2090
      %v2117 = vmul.bf16 %v1578, %v2090
      %v2118 = vmul.bf16 %v1580, %v2090
      %v2119 = vmul.bf16 %v1581, %v2090
      %v2120 = vmul.bf16 %v1583, %v2090
      %v2121 = vmul.bf16 %v1584, %v2090
      %v2122 = vmul.bf16 %v1586, %v2090
      %v2123 = vmul.bf16 %v1587, %v2090
      %v2156 = vunpack.c.l.b16 %v2092
      %v2157 = vunpack.c.l.b16 %v2093
      %v2158 = vunpack.c.l.b16 %v2094
      %v2159 = vunpack.c.l.b16 %v2095
      %v2160 = vunpack.c.l.b16 %v2096
      %v2161 = vunpack.c.l.b16 %v2097
      %v2162 = vunpack.c.l.b16 %v2098
      %v2163 = vunpack.c.l.b16 %v2099
      %v2164 = vunpack.c.l.b16 %v2100
      %v2165 = vunpack.c.l.b16 %v2101
      %v2166 = vunpack.c.l.b16 %v2102
      %v2167 = vunpack.c.l.b16 %v2103
      %v2168 = vunpack.c.l.b16 %v2104
      %v2169 = vunpack.c.l.b16 %v2105
      %v2170 = vunpack.c.l.b16 %v2106
      %v2171 = vunpack.c.l.b16 %v2107
      %v2172 = vunpack.c.l.b16 %v2108
      %v2173 = vunpack.c.l.b16 %v2109
      %v2174 = vunpack.c.l.b16 %v2110
      %v2175 = vunpack.c.l.b16 %v2111
      %v2176 = vunpack.c.l.b16 %v2112
      %v2177 = vunpack.c.l.b16 %v2113
      %v2178 = vunpack.c.l.b16 %v2114
      %v2179 = vunpack.c.l.b16 %v2115
      %v2180 = vunpack.c.l.b16 %v2116
      %v2181 = vunpack.c.l.b16 %v2117
      %v2182 = vunpack.c.l.b16 %v2118
      %v2183 = vunpack.c.l.b16 %v2119
      %v2184 = vunpack.c.l.b16 %v2120
      %v2185 = vunpack.c.l.b16 %v2121
      %v2186 = vunpack.c.l.b16 %v2122
      %v2187 = vunpack.c.l.b16 %v2123
      %v2188 = vpack.c.b16 %v2157, %v2156
      %v2189 = vpack.c.b16 %v2159, %v2158
      %v2190 = vpack.c.b16 %v2161, %v2160
      %v2191 = vpack.c.b16 %v2163, %v2162
      %v2192 = vpack.c.b16 %v2165, %v2164
      %v2193 = vpack.c.b16 %v2167, %v2166
      %v2194 = vpack.c.b16 %v2169, %v2168
      %v2195 = vpack.c.b16 %v2171, %v2170
      %v2196 = vpack.c.b16 %v2173, %v2172
      %v2197 = vpack.c.b16 %v2175, %v2174
      %v2198 = vpack.c.b16 %v2177, %v2176
      %v2199 = vpack.c.b16 %v2179, %v2178
      %v2200 = vpack.c.b16 %v2181, %v2180
      %v2201 = vpack.c.b16 %v2183, %v2182
      %v2202 = vpack.c.b16 %v2185, %v2184
      %v2203 = vpack.c.b16 %v2187, %v2186
      %v2220 = vadd.bf16 %v2065, %v2188
      %v2221 = vadd.bf16 %v2066, %v2189
      %v2222 = vadd.bf16 %v2067, %v2190
      %v2223 = vadd.bf16 %v2068, %v2191
      %v2224 = vadd.bf16 %v2069, %v2192
      %v2225 = vadd.bf16 %v2070, %v2193
      %v2226 = vadd.bf16 %v2071, %v2194
      %v2227 = vadd.bf16 %v2072, %v2195
      %v2228 = vadd.bf16 %v2073, %v2196
      %v2229 = vadd.bf16 %v2074, %v2197
      %v2230 = vadd.bf16 %v2075, %v2198
      %v2231 = vadd.bf16 %v2076, %v2199
      %v2232 = vadd.bf16 %v2077, %v2200
      %v2233 = vadd.bf16 %v2078, %v2201
      %v2234 = vadd.bf16 %v2079, %v2202
      %v2235 = vadd.bf16 %v2080, %v2203
      %v2236 = vld [vmem:[%s1539 + $0xc] sm:$0x1]
      %v2237 = vld [vmem:[%s1539 + $0x1c] sm:$0x1]
      %v2238 = vld [vmem:[%s1539 + $0x2c] sm:$0x1]
      %v2239 = vld [vmem:[%s1539 + $0x3c] sm:$0x1]
      %v2240 = vld [vmem:[%s1539 + $0x4c] sm:$0x1]
      %v2241 = vld [vmem:[%s1539 + $0x5c] sm:$0x1]
      %v2242 = vld [vmem:[%s1539 + $0x6c] sm:$0x1]
      %v2243 = vld [vmem:[%s1539 + $0x7c] sm:$0x1]
      %v2244 = vld [vmem:[%s1539 + $0x8c] sm:$0x1]
      %v2245 = vld [vmem:[%s1539 + $0x9c] sm:$0x1]
      %v2246 = vld [vmem:[%s1539 + $0xac] sm:$0x1]
      %v2247 = vld [vmem:[%s1539 + $0xbc] sm:$0x1]
      %v2248 = vld [vmem:[%s1539 + $0xcc] sm:$0x1]
      %v2249 = vld [vmem:[%s1539 + $0xdc] sm:$0x1]
      %v2250 = vld [vmem:[%s1539 + $0xec] sm:$0x1]
      %v2251 = vld [vmem:[%s1539 + $0xfc] sm:$0x1]
      %v2252 = vld [vmem:[%s1588] sm:$0x2]
      %v2254 = vpack.i.b16 %v2252, %v2252
      %v2256 = vlaneseq
      %v2257 = vshrl.u32 %v2256, 7
      %v2258 = vsub.s32 1, %v2257
      %v2259 = vrot.slane %v2254, %v2258
      %v2261 = vunpack.c.l.b16 %v2259
      %v2262 = vpack.c.b16 %v2261, %v2261
      %v2264 = vmul.bf16 %v1541, %v2262
      %v2265 = vmul.bf16 %v1542, %v2262
      %v2266 = vmul.bf16 %v2236, %v2262
      %v2267 = vmul.bf16 %v1544, %v2262
      %v2268 = vmul.bf16 %v1545, %v2262
      %v2269 = vmul.bf16 %v2237, %v2262
      %v2270 = vmul.bf16 %v1547, %v2262
      %v2271 = vmul.bf16 %v1548, %v2262
      %v2272 = vmul.bf16 %v2238, %v2262
      %v2273 = vmul.bf16 %v1550, %v2262
      %v2274 = vmul.bf16 %v1551, %v2262
      %v2275 = vmul.bf16 %v2239, %v2262
      %v2276 = vmul.bf16 %v1553, %v2262
      %v2277 = vmul.bf16 %v1554, %v2262
      %v2278 = vmul.bf16 %v2240, %v2262
      %v2279 = vmul.bf16 %v1556, %v2262
      %v2280 = vmul.bf16 %v1557, %v2262
      %v2281 = vmul.bf16 %v2241, %v2262
      %v2282 = vmul.bf16 %v1559, %v2262
      %v2283 = vmul.bf16 %v1560, %v2262
      %v2284 = vmul.bf16 %v2242, %v2262
      %v2285 = vmul.bf16 %v1562, %v2262
      %v2286 = vmul.bf16 %v1563, %v2262
      %v2287 = vmul.bf16 %v2243, %v2262
      %v2288 = vmul.bf16 %v1565, %v2262
      %v2289 = vmul.bf16 %v1566, %v2262
      %v2290 = vmul.bf16 %v2244, %v2262
      %v2291 = vmul.bf16 %v1568, %v2262
      %v2292 = vmul.bf16 %v1569, %v2262
      %v2293 = vmul.bf16 %v2245, %v2262
      %v2294 = vmul.bf16 %v1571, %v2262
      %v2295 = vmul.bf16 %v1572, %v2262
      %v2296 = vmul.bf16 %v2246, %v2262
      %v2297 = vmul.bf16 %v1574, %v2262
      %v2298 = vmul.bf16 %v1575, %v2262
      %v2299 = vmul.bf16 %v2247, %v2262
      %v2300 = vmul.bf16 %v1577, %v2262
      %v2301 = vmul.bf16 %v1578, %v2262
      %v2302 = vmul.bf16 %v2248, %v2262
      %v2303 = vmul.bf16 %v1580, %v2262
      %v2304 = vmul.bf16 %v1581, %v2262
      %v2305 = vmul.bf16 %v2249, %v2262
      %v2306 = vmul.bf16 %v1583, %v2262
      %v2307 = vmul.bf16 %v1584, %v2262
      %v2308 = vmul.bf16 %v2250, %v2262
      %v2309 = vmul.bf16 %v1586, %v2262
      %v2310 = vmul.bf16 %v1587, %v2262
      %v2311 = vmul.bf16 %v2251, %v2262
      %v2360 = vunpack.c.l.b16 %v2264
      %v2361 = vunpack.c.l.b16 %v2265
      %v2362 = vunpack.c.l.b16 %v2266
      %v2363 = vunpack.c.l.b16 %v2267
      %v2364 = vunpack.c.l.b16 %v2268
      %v2365 = vunpack.c.l.b16 %v2269
      %v2366 = vunpack.c.l.b16 %v2270
      %v2367 = vunpack.c.l.b16 %v2271
      %v2368 = vunpack.c.l.b16 %v2272
      %v2369 = vunpack.c.l.b16 %v2273
      %v2370 = vunpack.c.l.b16 %v2274
      %v2371 = vunpack.c.l.b16 %v2275
      %v2372 = vunpack.c.l.b16 %v2276
      %v2373 = vunpack.c.l.b16 %v2277
      %v2374 = vunpack.c.l.b16 %v2278
      %v2375 = vunpack.c.l.b16 %v2279
      %v2376 = vunpack.c.l.b16 %v2280
      %v2377 = vunpack.c.l.b16 %v2281
      %v2378 = vunpack.c.l.b16 %v2282
      %v2379 = vunpack.c.l.b16 %v2283
      %v2380 = vunpack.c.l.b16 %v2284
      %v2381 = vunpack.c.l.b16 %v2285
      %v2382 = vunpack.c.l.b16 %v2286
      %v2383 = vunpack.c.l.b16 %v2287
      %v2384 = vunpack.c.l.b16 %v2288
      %v2385 = vunpack.c.l.b16 %v2289
      %v2386 = vunpack.c.l.b16 %v2290
      %v2387 = vunpack.c.l.b16 %v2291
      %v2388 = vunpack.c.l.b16 %v2292
      %v2389 = vunpack.c.l.b16 %v2293
      %v2390 = vunpack.c.l.b16 %v2294
      %v2391 = vunpack.c.l.b16 %v2295
      %v2392 = vunpack.c.l.b16 %v2296
      %v2393 = vunpack.c.l.b16 %v2297
      %v2394 = vunpack.c.l.b16 %v2298
      %v2395 = vunpack.c.l.b16 %v2299
      %v2396 = vunpack.c.l.b16 %v2300
      %v2397 = vunpack.c.l.b16 %v2301
      %v2398 = vunpack.c.l.b16 %v2302
      %v2399 = vunpack.c.l.b16 %v2303
      %v2400 = vunpack.c.l.b16 %v2304
      %v2401 = vunpack.c.l.b16 %v2305
      %v2402 = vunpack.c.l.b16 %v2306
      %v2403 = vunpack.c.l.b16 %v2307
      %v2404 = vunpack.c.l.b16 %v2308
      %v2405 = vunpack.c.l.b16 %v2309
      %v2406 = vunpack.c.l.b16 %v2310
      %v2407 = vunpack.c.l.b16 %v2311
      %v2408 = vpack.c.b16 %v2361, %v2360
      %v2409 = vpack.c.b16 %v2362, %v2362
      %v2410 = vpack.c.b16 %v2364, %v2363
      %v2411 = vpack.c.b16 %v2365, %v2365
      %v2412 = vpack.c.b16 %v2367, %v2366
      %v2413 = vpack.c.b16 %v2368, %v2368
      %v2414 = vpack.c.b16 %v2370, %v2369
      %v2415 = vpack.c.b16 %v2371, %v2371
      %v2416 = vpack.c.b16 %v2373, %v2372
      %v2417 = vpack.c.b16 %v2374, %v2374
      %v2418 = vpack.c.b16 %v2376, %v2375
      %v2419 = vpack.c.b16 %v2377, %v2377
      %v2420 = vpack.c.b16 %v2379, %v2378
      %v2421 = vpack.c.b16 %v2380, %v2380
      %v2422 = vpack.c.b16 %v2382, %v2381
      %v2423 = vpack.c.b16 %v2383, %v2383
      %v2424 = vpack.c.b16 %v2385, %v2384
      %v2425 = vpack.c.b16 %v2386, %v2386
      %v2426 = vpack.c.b16 %v2388, %v2387
      %v2427 = vpack.c.b16 %v2389, %v2389
      %v2428 = vpack.c.b16 %v2391, %v2390
      %v2429 = vpack.c.b16 %v2392, %v2392
      %v2430 = vpack.c.b16 %v2394, %v2393
      %v2431 = vpack.c.b16 %v2395, %v2395
      %v2432 = vpack.c.b16 %v2397, %v2396
      %v2433 = vpack.c.b16 %v2398, %v2398
      %v2434 = vpack.c.b16 %v2400, %v2399
      %v2435 = vpack.c.b16 %v2401, %v2401
      %v2436 = vpack.c.b16 %v2403, %v2402
      %v2437 = vpack.c.b16 %v2404, %v2404
      %v2438 = vpack.c.b16 %v2406, %v2405
      %v2439 = vpack.c.b16 %v2407, %v2407
      %v2441 = vshrl.u32 %v2408, 16
      %v2443 = vshll.u32 %v2408, 16
      %v2445 = vrot.slane %v2443, 1
      %v2446 = vor.u32 %v2441, %v2445
      %v2448 = vshll.u32 %v2409, 16
      %v2450 = vrot.slane %v2448, 1
      %v2451 = vsel %vm1311, %v2446, %v2450
      %v2453 = vshrl.u32 %v2410, 16
      %v2455 = vshll.u32 %v2410, 16
      %v2457 = vrot.slane %v2455, 1
      %v2458 = vor.u32 %v2453, %v2457
      %v2460 = vshll.u32 %v2411, 16
      %v2462 = vrot.slane %v2460, 1
      %v2463 = vsel %vm1311, %v2458, %v2462
      %v2465 = vshrl.u32 %v2412, 16
      %v2467 = vshll.u32 %v2412, 16
      %v2469 = vrot.slane %v2467, 1
      %v2470 = vor.u32 %v2465, %v2469
      %v2472 = vshll.u32 %v2413, 16
      %v2474 = vrot.slane %v2472, 1
      %v2475 = vsel %vm1311, %v2470, %v2474
      %v2477 = vshrl.u32 %v2414, 16
      %v2479 = vshll.u32 %v2414, 16
      %v2481 = vrot.slane %v2479, 1
      %v2482 = vor.u32 %v2477, %v2481
      %v2484 = vshll.u32 %v2415, 16
      %v2486 = vrot.slane %v2484, 1
      %v2487 = vsel %vm1311, %v2482, %v2486
      %v2489 = vshrl.u32 %v2416, 16
      %v2491 = vshll.u32 %v2416, 16
      %v2493 = vrot.slane %v2491, 1
      %v2494 = vor.u32 %v2489, %v2493
      %v2496 = vshll.u32 %v2417, 16
      %v2498 = vrot.slane %v2496, 1
      %v2499 = vsel %vm1311, %v2494, %v2498
      %v2501 = vshrl.u32 %v2418, 16
      %v2503 = vshll.u32 %v2418, 16
      %v2505 = vrot.slane %v2503, 1
      %v2506 = vor.u32 %v2501, %v2505
      %v2508 = vshll.u32 %v2419, 16
      %v2510 = vrot.slane %v2508, 1
      %v2511 = vsel %vm1311, %v2506, %v2510
      %v2513 = vshrl.u32 %v2420, 16
      %v2515 = vshll.u32 %v2420, 16
      %v2517 = vrot.slane %v2515, 1
      %v2518 = vor.u32 %v2513, %v2517
      %v2520 = vshll.u32 %v2421, 16
      %v2522 = vrot.slane %v2520, 1
      %v2523 = vsel %vm1311, %v2518, %v2522
      %v2525 = vshrl.u32 %v2422, 16
      %v2527 = vshll.u32 %v2422, 16
      %v2529 = vrot.slane %v2527, 1
      %v2530 = vor.u32 %v2525, %v2529
      %v2532 = vshll.u32 %v2423, 16
      %v2534 = vrot.slane %v2532, 1
      %v2535 = vsel %vm1311, %v2530, %v2534
      %v2537 = vshrl.u32 %v2424, 16
      %v2539 = vshll.u32 %v2424, 16
      %v2541 = vrot.slane %v2539, 1
      %v2542 = vor.u32 %v2537, %v2541
      %v2544 = vshll.u32 %v2425, 16
      %v2546 = vrot.slane %v2544, 1
      %v2547 = vsel %vm1311, %v2542, %v2546
      %v2549 = vshrl.u32 %v2426, 16
      %v2551 = vshll.u32 %v2426, 16
      %v2553 = vrot.slane %v2551, 1
      %v2554 = vor.u32 %v2549, %v2553
      %v2556 = vshll.u32 %v2427, 16
      %v2558 = vrot.slane %v2556, 1
      %v2559 = vsel %vm1311, %v2554, %v2558
      %v2561 = vshrl.u32 %v2428, 16
      %v2563 = vshll.u32 %v2428, 16
      %v2565 = vrot.slane %v2563, 1
      %v2566 = vor.u32 %v2561, %v2565
      %v2568 = vshll.u32 %v2429, 16
      %v2570 = vrot.slane %v2568, 1
      %v2571 = vsel %vm1311, %v2566, %v2570
      %v2573 = vshrl.u32 %v2430, 16
      %v2575 = vshll.u32 %v2430, 16
      %v2577 = vrot.slane %v2575, 1
      %v2578 = vor.u32 %v2573, %v2577
      %v2580 = vshll.u32 %v2431, 16
      %v2582 = vrot.slane %v2580, 1
      %v2583 = vsel %vm1311, %v2578, %v2582
      %v2585 = vshrl.u32 %v2432, 16
      %v2587 = vshll.u32 %v2432, 16
      %v2589 = vrot.slane %v2587, 1
      %v2590 = vor.u32 %v2585, %v2589
      %v2592 = vshll.u32 %v2433, 16
      %v2594 = vrot.slane %v2592, 1
      %v2595 = vsel %vm1311, %v2590, %v2594
      %v2597 = vshrl.u32 %v2434, 16
      %v2599 = vshll.u32 %v2434, 16
      %v2601 = vrot.slane %v2599, 1
      %v2602 = vor.u32 %v2597, %v2601
      %v2604 = vshll.u32 %v2435, 16
      %v2606 = vrot.slane %v2604, 1
      %v2607 = vsel %vm1311, %v2602, %v2606
      %v2609 = vshrl.u32 %v2436, 16
      %v2611 = vshll.u32 %v2436, 16
      %v2613 = vrot.slane %v2611, 1
      %v2614 = vor.u32 %v2609, %v2613
      %v2616 = vshll.u32 %v2437, 16
      %v2618 = vrot.slane %v2616, 1
      %v2619 = vsel %vm1311, %v2614, %v2618
      %v2621 = vshrl.u32 %v2438, 16
      %v2623 = vshll.u32 %v2438, 16
      %v2625 = vrot.slane %v2623, 1
      %v2626 = vor.u32 %v2621, %v2625
      %v2628 = vshll.u32 %v2439, 16
      %v2630 = vrot.slane %v2628, 1
      %v2631 = vsel %vm1311, %v2626, %v2630
      %v2648 = vadd.bf16 %v2220, %v2451
      %v2649 = vadd.bf16 %v2221, %v2463
      %v2650 = vadd.bf16 %v2222, %v2475
      %v2651 = vadd.bf16 %v2223, %v2487
      %v2652 = vadd.bf16 %v2224, %v2499
      %v2653 = vadd.bf16 %v2225, %v2511
      %v2654 = vadd.bf16 %v2226, %v2523
      %v2655 = vadd.bf16 %v2227, %v2535
      %v2656 = vadd.bf16 %v2228, %v2547
      %v2657 = vadd.bf16 %v2229, %v2559
      %v2658 = vadd.bf16 %v2230, %v2571
      %v2659 = vadd.bf16 %v2231, %v2583
      %v2660 = vadd.bf16 %v2232, %v2595
      %v2661 = vadd.bf16 %v2233, %v2607
      %v2662 = vadd.bf16 %v2234, %v2619
      %v2663 = vadd.bf16 %v2235, %v2631
      %s2664 = sadd.s32 %s399, 2
      %s2665 = smul.u32 %s2664, 4
      %s2666 = smul.addr %s2665, 4
      %s2667 = scalar_lea.vmem [#allocation2], %s2666
      %v2668 = vld [vmem:[%s2667] sm:$0x8]
      %v2669 = vld [vmem:[%s2667 + $0x4] sm:$0xf]
      %v2670 = vld [vmem:[%s2667 + $0x8] sm:$0xf]
      %v2671 = vld [vmem:[%s2667 + $0x10] sm:$0x8]
      %v2672 = vld [vmem:[%s2667 + $0x14] sm:$0xf]
      %v2673 = vld [vmem:[%s2667 + $0x18] sm:$0xf]
      %v2674 = vld [vmem:[%s2667 + $0x20] sm:$0x8]
      %v2675 = vld [vmem:[%s2667 + $0x24] sm:$0xf]
      %v2676 = vld [vmem:[%s2667 + $0x28] sm:$0xf]
      %v2677 = vld [vmem:[%s2667 + $0x30] sm:$0x8]
      %v2678 = vld [vmem:[%s2667 + $0x34] sm:$0xf]
      %v2679 = vld [vmem:[%s2667 + $0x38] sm:$0xf]
      %v2680 = vld [vmem:[%s2667 + $0x40] sm:$0x8]
      %v2681 = vld [vmem:[%s2667 + $0x44] sm:$0xf]
      %v2682 = vld [vmem:[%s2667 + $0x48] sm:$0xf]
      %v2683 = vld [vmem:[%s2667 + $0x50] sm:$0x8]
      %v2684 = vld [vmem:[%s2667 + $0x54] sm:$0xf]
      %v2685 = vld [vmem:[%s2667 + $0x58] sm:$0xf]
      %v2686 = vld [vmem:[%s2667 + $0x60] sm:$0x8]
      %v2687 = vld [vmem:[%s2667 + $0x64] sm:$0xf]
      %v2688 = vld [vmem:[%s2667 + $0x68] sm:$0xf]
      %v2689 = vld [vmem:[%s2667 + $0x70] sm:$0x8]
      %v2690 = vld [vmem:[%s2667 + $0x74] sm:$0xf]
      %v2691 = vld [vmem:[%s2667 + $0x78] sm:$0xf]
      %v2692 = vld [vmem:[%s2667 + $0x80] sm:$0x8]
      %v2693 = vld [vmem:[%s2667 + $0x84] sm:$0xf]
      %v2694 = vld [vmem:[%s2667 + $0x88] sm:$0xf]
      %v2695 = vld [vmem:[%s2667 + $0x90] sm:$0x8]
      %v2696 = vld [vmem:[%s2667 + $0x94] sm:$0xf]
      %v2697 = vld [vmem:[%s2667 + $0x98] sm:$0xf]
      %v2698 = vld [vmem:[%s2667 + $0xa0] sm:$0x8]
      %v2699 = vld [vmem:[%s2667 + $0xa4] sm:$0xf]
      %v2700 = vld [vmem:[%s2667 + $0xa8] sm:$0xf]
      %v2701 = vld [vmem:[%s2667 + $0xb0] sm:$0x8]
      %v2702 = vld [vmem:[%s2667 + $0xb4] sm:$0xf]
      %v2703 = vld [vmem:[%s2667 + $0xb8] sm:$0xf]
      %v2704 = vld [vmem:[%s2667 + $0xc0] sm:$0x8]
      %v2705 = vld [vmem:[%s2667 + $0xc4] sm:$0xf]
      %v2706 = vld [vmem:[%s2667 + $0xc8] sm:$0xf]
      %v2707 = vld [vmem:[%s2667 + $0xd0] sm:$0x8]
      %v2708 = vld [vmem:[%s2667 + $0xd4] sm:$0xf]
      %v2709 = vld [vmem:[%s2667 + $0xd8] sm:$0xf]
      %v2710 = vld [vmem:[%s2667 + $0xe0] sm:$0x8]
      %v2711 = vld [vmem:[%s2667 + $0xe4] sm:$0xf]
      %v2712 = vld [vmem:[%s2667 + $0xe8] sm:$0xf]
      %v2713 = vld [vmem:[%s2667 + $0xf0] sm:$0x8]
      %v2714 = vld [vmem:[%s2667 + $0xf4] sm:$0xf]
      %v2715 = vld [vmem:[%s2667 + $0xf8] sm:$0xf]
      %s2716 = scalar_lea.vmem %s1, 4
      %v2717 = vld [vmem:[%s2716] sm:$0x1]
      %v2719 = vpack.i.b16 %v2717, %v2717
      %v2721 = vlaneseq
      %v2722 = vshrl.u32 %v2721, 7
      %v2723 = vsub.s32 0, %v2722
      %v2724 = vrot.slane %v2719, %v2723
      %v2726 = vunpack.c.l.b16 %v2724
      %v2727 = vpack.c.b16 %v2726, %v2726
      %v2729 = vmul.bf16 %v2668, %v2727
      %v2730 = vmul.bf16 %v2669, %v2727
      %v2731 = vmul.bf16 %v2670, %v2727
      %v2732 = vmul.bf16 %v2671, %v2727
      %v2733 = vmul.bf16 %v2672, %v2727
      %v2734 = vmul.bf16 %v2673, %v2727
      %v2735 = vmul.bf16 %v2674, %v2727
      %v2736 = vmul.bf16 %v2675, %v2727
      %v2737 = vmul.bf16 %v2676, %v2727
      %v2738 = vmul.bf16 %v2677, %v2727
      %v2739 = vmul.bf16 %v2678, %v2727
      %v2740 = vmul.bf16 %v2679, %v2727
      %v2741 = vmul.bf16 %v2680, %v2727
      %v2742 = vmul.bf16 %v2681, %v2727
      %v2743 = vmul.bf16 %v2682, %v2727
      %v2744 = vmul.bf16 %v2683, %v2727
      %v2745 = vmul.bf16 %v2684, %v2727
      %v2746 = vmul.bf16 %v2685, %v2727
      %v2747 = vmul.bf16 %v2686, %v2727
      %v2748 = vmul.bf16 %v2687, %v2727
      %v2749 = vmul.bf16 %v2688, %v2727
      %v2750 = vmul.bf16 %v2689, %v2727
      %v2751 = vmul.bf16 %v2690, %v2727
      %v2752 = vmul.bf16 %v2691, %v2727
      %v2753 = vmul.bf16 %v2692, %v2727
      %v2754 = vmul.bf16 %v2693, %v2727
      %v2755 = vmul.bf16 %v2694, %v2727
      %v2756 = vmul.bf16 %v2695, %v2727
      %v2757 = vmul.bf16 %v2696, %v2727
      %v2758 = vmul.bf16 %v2697, %v2727
      %v2759 = vmul.bf16 %v2698, %v2727
      %v2760 = vmul.bf16 %v2699, %v2727
      %v2761 = vmul.bf16 %v2700, %v2727
      %v2762 = vmul.bf16 %v2701, %v2727
      %v2763 = vmul.bf16 %v2702, %v2727
      %v2764 = vmul.bf16 %v2703, %v2727
      %v2765 = vmul.bf16 %v2704, %v2727
      %v2766 = vmul.bf16 %v2705, %v2727
      %v2767 = vmul.bf16 %v2706, %v2727
      %v2768 = vmul.bf16 %v2707, %v2727
      %v2769 = vmul.bf16 %v2708, %v2727
      %v2770 = vmul.bf16 %v2709, %v2727
      %v2771 = vmul.bf16 %v2710, %v2727
      %v2772 = vmul.bf16 %v2711, %v2727
      %v2773 = vmul.bf16 %v2712, %v2727
      %v2774 = vmul.bf16 %v2713, %v2727
      %v2775 = vmul.bf16 %v2714, %v2727
      %v2776 = vmul.bf16 %v2715, %v2727
      %v2825 = vunpack.c.l.b16 %v2729
      %v2826 = vunpack.c.l.b16 %v2730
      %v2827 = vunpack.c.l.b16 %v2731
      %v2828 = vunpack.c.l.b16 %v2732
      %v2829 = vunpack.c.l.b16 %v2733
      %v2830 = vunpack.c.l.b16 %v2734
      %v2831 = vunpack.c.l.b16 %v2735
      %v2832 = vunpack.c.l.b16 %v2736
      %v2833 = vunpack.c.l.b16 %v2737
      %v2834 = vunpack.c.l.b16 %v2738
      %v2835 = vunpack.c.l.b16 %v2739
      %v2836 = vunpack.c.l.b16 %v2740
      %v2837 = vunpack.c.l.b16 %v2741
      %v2838 = vunpack.c.l.b16 %v2742
      %v2839 = vunpack.c.l.b16 %v2743
      %v2840 = vunpack.c.l.b16 %v2744
      %v2841 = vunpack.c.l.b16 %v2745
      %v2842 = vunpack.c.l.b16 %v2746
      %v2843 = vunpack.c.l.b16 %v2747
      %v2844 = vunpack.c.l.b16 %v2748
      %v2845 = vunpack.c.l.b16 %v2749
      %v2846 = vunpack.c.l.b16 %v2750
      %v2847 = vunpack.c.l.b16 %v2751
      %v2848 = vunpack.c.l.b16 %v2752
      %v2849 = vunpack.c.l.b16 %v2753
      %v2850 = vunpack.c.l.b16 %v2754
      %v2851 = vunpack.c.l.b16 %v2755
      %v2852 = vunpack.c.l.b16 %v2756
      %v2853 = vunpack.c.l.b16 %v2757
      %v2854 = vunpack.c.l.b16 %v2758
      %v2855 = vunpack.c.l.b16 %v2759
      %v2856 = vunpack.c.l.b16 %v2760
      %v2857 = vunpack.c.l.b16 %v2761
      %v2858 = vunpack.c.l.b16 %v2762
      %v2859 = vunpack.c.l.b16 %v2763
      %v2860 = vunpack.c.l.b16 %v2764
      %v2861 = vunpack.c.l.b16 %v2765
      %v2862 = vunpack.c.l.b16 %v2766
      %v2863 = vunpack.c.l.b16 %v2767
      %v2864 = vunpack.c.l.b16 %v2768
      %v2865 = vunpack.c.l.b16 %v2769
      %v2866 = vunpack.c.l.b16 %v2770
      %v2867 = vunpack.c.l.b16 %v2771
      %v2868 = vunpack.c.l.b16 %v2772
      %v2869 = vunpack.c.l.b16 %v2773
      %v2870 = vunpack.c.l.b16 %v2774
      %v2871 = vunpack.c.l.b16 %v2775
      %v2872 = vunpack.c.l.b16 %v2776
      %v2873 = vpack.c.b16 %v2826, %v2825
      %v2874 = vpack.c.b16 %v2827, %v2827
      %v2875 = vpack.c.b16 %v2829, %v2828
      %v2876 = vpack.c.b16 %v2830, %v2830
      %v2877 = vpack.c.b16 %v2832, %v2831
      %v2878 = vpack.c.b16 %v2833, %v2833
      %v2879 = vpack.c.b16 %v2835, %v2834
      %v2880 = vpack.c.b16 %v2836, %v2836
      %v2881 = vpack.c.b16 %v2838, %v2837
      %v2882 = vpack.c.b16 %v2839, %v2839
      %v2883 = vpack.c.b16 %v2841, %v2840
      %v2884 = vpack.c.b16 %v2842, %v2842
      %v2885 = vpack.c.b16 %v2844, %v2843
      %v2886 = vpack.c.b16 %v2845, %v2845
      %v2887 = vpack.c.b16 %v2847, %v2846
      %v2888 = vpack.c.b16 %v2848, %v2848
      %v2889 = vpack.c.b16 %v2850, %v2849
      %v2890 = vpack.c.b16 %v2851, %v2851
      %v2891 = vpack.c.b16 %v2853, %v2852
      %v2892 = vpack.c.b16 %v2854, %v2854
      %v2893 = vpack.c.b16 %v2856, %v2855
      %v2894 = vpack.c.b16 %v2857, %v2857
      %v2895 = vpack.c.b16 %v2859, %v2858
      %v2896 = vpack.c.b16 %v2860, %v2860
      %v2897 = vpack.c.b16 %v2862, %v2861
      %v2898 = vpack.c.b16 %v2863, %v2863
      %v2899 = vpack.c.b16 %v2865, %v2864
      %v2900 = vpack.c.b16 %v2866, %v2866
      %v2901 = vpack.c.b16 %v2868, %v2867
      %v2902 = vpack.c.b16 %v2869, %v2869
      %v2903 = vpack.c.b16 %v2871, %v2870
      %v2904 = vpack.c.b16 %v2872, %v2872
      %v2906 = vshrl.u32 %v2873, 16
      %v2908 = vrot.slane %v2906, 3
      %v2909 = vshll.u32 %v2873, 16
      %v2911 = vrot.slane %v2909, 4
      %v2912 = vor.u32 %v2908, %v2911
      %v2914 = vshrl.u32 %v2874, 16
      %v2916 = vrot.slane %v2914, 3
      %v2917 = vshll.u32 %v2874, 16
      %v2919 = vrot.slane %v2917, 4
      %v2920 = vor.u32 %v2916, %v2919
      %v2921 = vsel %vm647, %v2912, %v2920
      %v2923 = vshrl.u32 %v2875, 16
      %v2925 = vrot.slane %v2923, 3
      %v2926 = vshll.u32 %v2875, 16
      %v2928 = vrot.slane %v2926, 4
      %v2929 = vor.u32 %v2925, %v2928
      %v2931 = vshrl.u32 %v2876, 16
      %v2933 = vrot.slane %v2931, 3
      %v2934 = vshll.u32 %v2876, 16
      %v2936 = vrot.slane %v2934, 4
      %v2937 = vor.u32 %v2933, %v2936
      %v2938 = vsel %vm647, %v2929, %v2937
      %v2940 = vshrl.u32 %v2877, 16
      %v2942 = vrot.slane %v2940, 3
      %v2943 = vshll.u32 %v2877, 16
      %v2945 = vrot.slane %v2943, 4
      %v2946 = vor.u32 %v2942, %v2945
      %v2948 = vshrl.u32 %v2878, 16
      %v2950 = vrot.slane %v2948, 3
      %v2951 = vshll.u32 %v2878, 16
      %v2953 = vrot.slane %v2951, 4
      %v2954 = vor.u32 %v2950, %v2953
      %v2955 = vsel %vm647, %v2946, %v2954
      %v2957 = vshrl.u32 %v2879, 16
      %v2959 = vrot.slane %v2957, 3
      %v2960 = vshll.u32 %v2879, 16
      %v2962 = vrot.slane %v2960, 4
      %v2963 = vor.u32 %v2959, %v2962
      %v2965 = vshrl.u32 %v2880, 16
      %v2967 = vrot.slane %v2965, 3
      %v2968 = vshll.u32 %v2880, 16
      %v2970 = vrot.slane %v2968, 4
      %v2971 = vor.u32 %v2967, %v2970
      %v2972 = vsel %vm647, %v2963, %v2971
      %v2974 = vshrl.u32 %v2881, 16
      %v2976 = vrot.slane %v2974, 3
      %v2977 = vshll.u32 %v2881, 16
      %v2979 = vrot.slane %v2977, 4
      %v2980 = vor.u32 %v2976, %v2979
      %v2982 = vshrl.u32 %v2882, 16
      %v2984 = vrot.slane %v2982, 3
      %v2985 = vshll.u32 %v2882, 16
      %v2987 = vrot.slane %v2985, 4
      %v2988 = vor.u32 %v2984, %v2987
      %v2989 = vsel %vm647, %v2980, %v2988
      %v2991 = vshrl.u32 %v2883, 16
      %v2993 = vrot.slane %v2991, 3
      %v2994 = vshll.u32 %v2883, 16
      %v2996 = vrot.slane %v2994, 4
      %v2997 = vor.u32 %v2993, %v2996
      %v2999 = vshrl.u32 %v2884, 16
      %v3001 = vrot.slane %v2999, 3
      %v3002 = vshll.u32 %v2884, 16
      %v3004 = vrot.slane %v3002, 4
      %v3005 = vor.u32 %v3001, %v3004
      %v3006 = vsel %vm647, %v2997, %v3005
      %v3008 = vshrl.u32 %v2885, 16
      %v3010 = vrot.slane %v3008, 3
      %v3011 = vshll.u32 %v2885, 16
      %v3013 = vrot.slane %v3011, 4
      %v3014 = vor.u32 %v3010, %v3013
      %v3016 = vshrl.u32 %v2886, 16
      %v3018 = vrot.slane %v3016, 3
      %v3019 = vshll.u32 %v2886, 16
      %v3021 = vrot.slane %v3019, 4
      %v3022 = vor.u32 %v3018, %v3021
      %v3023 = vsel %vm647, %v3014, %v3022
      %v3025 = vshrl.u32 %v2887, 16
      %v3027 = vrot.slane %v3025, 3
      %v3028 = vshll.u32 %v2887, 16
      %v3030 = vrot.slane %v3028, 4
      %v3031 = vor.u32 %v3027, %v3030
      %v3033 = vshrl.u32 %v2888, 16
      %v3035 = vrot.slane %v3033, 3
      %v3036 = vshll.u32 %v2888, 16
      %v3038 = vrot.slane %v3036, 4
      %v3039 = vor.u32 %v3035, %v3038
      %v3040 = vsel %vm647, %v3031, %v3039
      %v3042 = vshrl.u32 %v2889, 16
      %v3044 = vrot.slane %v3042, 3
      %v3045 = vshll.u32 %v2889, 16
      %v3047 = vrot.slane %v3045, 4
      %v3048 = vor.u32 %v3044, %v3047
      %v3050 = vshrl.u32 %v2890, 16
      %v3052 = vrot.slane %v3050, 3
      %v3053 = vshll.u32 %v2890, 16
      %v3055 = vrot.slane %v3053, 4
      %v3056 = vor.u32 %v3052, %v3055
      %v3057 = vsel %vm647, %v3048, %v3056
      %v3059 = vshrl.u32 %v2891, 16
      %v3061 = vrot.slane %v3059, 3
      %v3062 = vshll.u32 %v2891, 16
      %v3064 = vrot.slane %v3062, 4
      %v3065 = vor.u32 %v3061, %v3064
      %v3067 = vshrl.u32 %v2892, 16
      %v3069 = vrot.slane %v3067, 3
      %v3070 = vshll.u32 %v2892, 16
      %v3072 = vrot.slane %v3070, 4
      %v3073 = vor.u32 %v3069, %v3072
      %v3074 = vsel %vm647, %v3065, %v3073
      %v3076 = vshrl.u32 %v2893, 16
      %v3078 = vrot.slane %v3076, 3
      %v3079 = vshll.u32 %v2893, 16
      %v3081 = vrot.slane %v3079, 4
      %v3082 = vor.u32 %v3078, %v3081
      %v3084 = vshrl.u32 %v2894, 16
      %v3086 = vrot.slane %v3084, 3
      %v3087 = vshll.u32 %v2894, 16
      %v3089 = vrot.slane %v3087, 4
      %v3090 = vor.u32 %v3086, %v3089
      %v3091 = vsel %vm647, %v3082, %v3090
      %v3093 = vshrl.u32 %v2895, 16
      %v3095 = vrot.slane %v3093, 3
      %v3096 = vshll.u32 %v2895, 16
      %v3098 = vrot.slane %v3096, 4
      %v3099 = vor.u32 %v3095, %v3098
      %v3101 = vshrl.u32 %v2896, 16
      %v3103 = vrot.slane %v3101, 3
      %v3104 = vshll.u32 %v2896, 16
      %v3106 = vrot.slane %v3104, 4
      %v3107 = vor.u32 %v3103, %v3106
      %v3108 = vsel %vm647, %v3099, %v3107
      %v3110 = vshrl.u32 %v2897, 16
      %v3112 = vrot.slane %v3110, 3
      %v3113 = vshll.u32 %v2897, 16
      %v3115 = vrot.slane %v3113, 4
      %v3116 = vor.u32 %v3112, %v3115
      %v3118 = vshrl.u32 %v2898, 16
      %v3120 = vrot.slane %v3118, 3
      %v3121 = vshll.u32 %v2898, 16
      %v3123 = vrot.slane %v3121, 4
      %v3124 = vor.u32 %v3120, %v3123
      %v3125 = vsel %vm647, %v3116, %v3124
      %v3127 = vshrl.u32 %v2899, 16
      %v3129 = vrot.slane %v3127, 3
      %v3130 = vshll.u32 %v2899, 16
      %v3132 = vrot.slane %v3130, 4
      %v3133 = vor.u32 %v3129, %v3132
      %v3135 = vshrl.u32 %v2900, 16
      %v3137 = vrot.slane %v3135, 3
      %v3138 = vshll.u32 %v2900, 16
      %v3140 = vrot.slane %v3138, 4
      %v3141 = vor.u32 %v3137, %v3140
      %v3142 = vsel %vm647, %v3133, %v3141
      %v3144 = vshrl.u32 %v2901, 16
      %v3146 = vrot.slane %v3144, 3
      %v3147 = vshll.u32 %v2901, 16
      %v3149 = vrot.slane %v3147, 4
      %v3150 = vor.u32 %v3146, %v3149
      %v3152 = vshrl.u32 %v2902, 16
      %v3154 = vrot.slane %v3152, 3
      %v3155 = vshll.u32 %v2902, 16
      %v3157 = vrot.slane %v3155, 4
      %v3158 = vor.u32 %v3154, %v3157
      %v3159 = vsel %vm647, %v3150, %v3158
      %v3161 = vshrl.u32 %v2903, 16
      %v3163 = vrot.slane %v3161, 3
      %v3164 = vshll.u32 %v2903, 16
      %v3166 = vrot.slane %v3164, 4
      %v3167 = vor.u32 %v3163, %v3166
      %v3169 = vshrl.u32 %v2904, 16
      %v3171 = vrot.slane %v3169, 3
      %v3172 = vshll.u32 %v2904, 16
      %v3174 = vrot.slane %v3172, 4
      %v3175 = vor.u32 %v3171, %v3174
      %v3176 = vsel %vm647, %v3167, %v3175
      %v3193 = vadd.bf16 %v2648, %v2921
      %v3194 = vadd.bf16 %v2649, %v2938
      %v3195 = vadd.bf16 %v2650, %v2955
      %v3196 = vadd.bf16 %v2651, %v2972
      %v3197 = vadd.bf16 %v2652, %v2989
      %v3198 = vadd.bf16 %v2653, %v3006
      %v3199 = vadd.bf16 %v2654, %v3023
      %v3200 = vadd.bf16 %v2655, %v3040
      %v3201 = vadd.bf16 %v2656, %v3057
      %v3202 = vadd.bf16 %v2657, %v3074
      %v3203 = vadd.bf16 %v2658, %v3091
      %v3204 = vadd.bf16 %v2659, %v3108
      %v3205 = vadd.bf16 %v2660, %v3125
      %v3206 = vadd.bf16 %v2661, %v3142
      %v3207 = vadd.bf16 %v2662, %v3159
      %v3208 = vadd.bf16 %v2663, %v3176
      %v3209 = vshrl.u32 %v2717, 16
      %v3210 = vpack.i.b16 %v3209, %v3209
      %v3212 = vlaneseq
      %v3213 = vshrl.u32 %v3212, 7
      %v3214 = vsub.s32 0, %v3213
      %v3215 = vrot.slane %v3210, %v3214
      %v3217 = vunpack.c.l.b16 %v3215
      %v3218 = vpack.c.b16 %v3217, %v3217
      %v3220 = vmul.bf16 %v2669, %v3218
      %v3221 = vmul.bf16 %v2670, %v3218
      %v3222 = vmul.bf16 %v2672, %v3218
      %v3223 = vmul.bf16 %v2673, %v3218
      %v3224 = vmul.bf16 %v2675, %v3218
      %v3225 = vmul.bf16 %v2676, %v3218
      %v3226 = vmul.bf16 %v2678, %v3218
      %v3227 = vmul.bf16 %v2679, %v3218
      %v3228 = vmul.bf16 %v2681, %v3218
      %v3229 = vmul.bf16 %v2682, %v3218
      %v3230 = vmul.bf16 %v2684, %v3218
      %v3231 = vmul.bf16 %v2685, %v3218
      %v3232 = vmul.bf16 %v2687, %v3218
      %v3233 = vmul.bf16 %v2688, %v3218
      %v3234 = vmul.bf16 %v2690, %v3218
      %v3235 = vmul.bf16 %v2691, %v3218
      %v3236 = vmul.bf16 %v2693, %v3218
      %v3237 = vmul.bf16 %v2694, %v3218
      %v3238 = vmul.bf16 %v2696, %v3218
      %v3239 = vmul.bf16 %v2697, %v3218
      %v3240 = vmul.bf16 %v2699, %v3218
      %v3241 = vmul.bf16 %v2700, %v3218
      %v3242 = vmul.bf16 %v2702, %v3218
      %v3243 = vmul.bf16 %v2703, %v3218
      %v3244 = vmul.bf16 %v2705, %v3218
      %v3245 = vmul.bf16 %v2706, %v3218
      %v3246 = vmul.bf16 %v2708, %v3218
      %v3247 = vmul.bf16 %v2709, %v3218
      %v3248 = vmul.bf16 %v2711, %v3218
      %v3249 = vmul.bf16 %v2712, %v3218
      %v3250 = vmul.bf16 %v2714, %v3218
      %v3251 = vmul.bf16 %v2715, %v3218
      %v3284 = vunpack.c.l.b16 %v3220
      %v3285 = vunpack.c.l.b16 %v3221
      %v3286 = vunpack.c.l.b16 %v3222
      %v3287 = vunpack.c.l.b16 %v3223
      %v3288 = vunpack.c.l.b16 %v3224
      %v3289 = vunpack.c.l.b16 %v3225
      %v3290 = vunpack.c.l.b16 %v3226
      %v3291 = vunpack.c.l.b16 %v3227
      %v3292 = vunpack.c.l.b16 %v3228
      %v3293 = vunpack.c.l.b16 %v3229
      %v3294 = vunpack.c.l.b16 %v3230
      %v3295 = vunpack.c.l.b16 %v3231
      %v3296 = vunpack.c.l.b16 %v3232
      %v3297 = vunpack.c.l.b16 %v3233
      %v3298 = vunpack.c.l.b16 %v3234
      %v3299 = vunpack.c.l.b16 %v3235
      %v3300 = vunpack.c.l.b16 %v3236
      %v3301 = vunpack.c.l.b16 %v3237
      %v3302 = vunpack.c.l.b16 %v3238
      %v3303 = vunpack.c.l.b16 %v3239
      %v3304 = vunpack.c.l.b16 %v3240
      %v3305 = vunpack.c.l.b16 %v3241
      %v3306 = vunpack.c.l.b16 %v3242
      %v3307 = vunpack.c.l.b16 %v3243
      %v3308 = vunpack.c.l.b16 %v3244
      %v3309 = vunpack.c.l.b16 %v3245
      %v3310 = vunpack.c.l.b16 %v3246
      %v3311 = vunpack.c.l.b16 %v3247
      %v3312 = vunpack.c.l.b16 %v3248
      %v3313 = vunpack.c.l.b16 %v3249
      %v3314 = vunpack.c.l.b16 %v3250
      %v3315 = vunpack.c.l.b16 %v3251
      %v3316 = vpack.c.b16 %v3285, %v3284
      %v3317 = vpack.c.b16 %v3287, %v3286
      %v3318 = vpack.c.b16 %v3289, %v3288
      %v3319 = vpack.c.b16 %v3291, %v3290
      %v3320 = vpack.c.b16 %v3293, %v3292
      %v3321 = vpack.c.b16 %v3295, %v3294
      %v3322 = vpack.c.b16 %v3297, %v3296
      %v3323 = vpack.c.b16 %v3299, %v3298
      %v3324 = vpack.c.b16 %v3301, %v3300
      %v3325 = vpack.c.b16 %v3303, %v3302
      %v3326 = vpack.c.b16 %v3305, %v3304
      %v3327 = vpack.c.b16 %v3307, %v3306
      %v3328 = vpack.c.b16 %v3309, %v3308
      %v3329 = vpack.c.b16 %v3311, %v3310
      %v3330 = vpack.c.b16 %v3313, %v3312
      %v3331 = vpack.c.b16 %v3315, %v3314
      %v3348 = vadd.bf16 %v3193, %v3316
      %v3349 = vadd.bf16 %v3194, %v3317
      %v3350 = vadd.bf16 %v3195, %v3318
      %v3351 = vadd.bf16 %v3196, %v3319
      %v3352 = vadd.bf16 %v3197, %v3320
      %v3353 = vadd.bf16 %v3198, %v3321
      %v3354 = vadd.bf16 %v3199, %v3322
      %v3355 = vadd.bf16 %v3200, %v3323
      %v3356 = vadd.bf16 %v3201, %v3324
      %v3357 = vadd.bf16 %v3202, %v3325
      %v3358 = vadd.bf16 %v3203, %v3326
      %v3359 = vadd.bf16 %v3204, %v3327
      %v3360 = vadd.bf16 %v3205, %v3328
      %v3361 = vadd.bf16 %v3206, %v3329
      %v3362 = vadd.bf16 %v3207, %v3330
      %v3363 = vadd.bf16 %v3208, %v3331
      %v3364 = vld [vmem:[%s2667 + $0xc] sm:$0x1]
      %v3365 = vld [vmem:[%s2667 + $0x1c] sm:$0x1]
      %v3366 = vld [vmem:[%s2667 + $0x2c] sm:$0x1]
      %v3367 = vld [vmem:[%s2667 + $0x3c] sm:$0x1]
      %v3368 = vld [vmem:[%s2667 + $0x4c] sm:$0x1]
      %v3369 = vld [vmem:[%s2667 + $0x5c] sm:$0x1]
      %v3370 = vld [vmem:[%s2667 + $0x6c] sm:$0x1]
      %v3371 = vld [vmem:[%s2667 + $0x7c] sm:$0x1]
      %v3372 = vld [vmem:[%s2667 + $0x8c] sm:$0x1]
      %v3373 = vld [vmem:[%s2667 + $0x9c] sm:$0x1]
      %v3374 = vld [vmem:[%s2667 + $0xac] sm:$0x1]
      %v3375 = vld [vmem:[%s2667 + $0xbc] sm:$0x1]
      %v3376 = vld [vmem:[%s2667 + $0xcc] sm:$0x1]
      %v3377 = vld [vmem:[%s2667 + $0xdc] sm:$0x1]
      %v3378 = vld [vmem:[%s2667 + $0xec] sm:$0x1]
      %v3379 = vld [vmem:[%s2667 + $0xfc] sm:$0x1]
      %v3380 = vld [vmem:[%s2716] sm:$0x2]
      %v3382 = vpack.i.b16 %v3380, %v3380
      %v3384 = vlaneseq
      %v3385 = vshrl.u32 %v3384, 7
      %v3386 = vsub.s32 1, %v3385
      %v3387 = vrot.slane %v3382, %v3386
      %v3389 = vunpack.c.l.b16 %v3387
      %v3390 = vpack.c.b16 %v3389, %v3389
      %v3392 = vmul.bf16 %v2669, %v3390
      %v3393 = vmul.bf16 %v2670, %v3390
      %v3394 = vmul.bf16 %v3364, %v3390
      %v3395 = vmul.bf16 %v2672, %v3390
      %v3396 = vmul.bf16 %v2673, %v3390
      %v3397 = vmul.bf16 %v3365, %v3390
      %v3398 = vmul.bf16 %v2675, %v3390
      %v3399 = vmul.bf16 %v2676, %v3390
      %v3400 = vmul.bf16 %v3366, %v3390
      %v3401 = vmul.bf16 %v2678, %v3390
      %v3402 = vmul.bf16 %v2679, %v3390
      %v3403 = vmul.bf16 %v3367, %v3390
      %v3404 = vmul.bf16 %v2681, %v3390
      %v3405 = vmul.bf16 %v2682, %v3390
      %v3406 = vmul.bf16 %v3368, %v3390
      %v3407 = vmul.bf16 %v2684, %v3390
      %v3408 = vmul.bf16 %v2685, %v3390
      %v3409 = vmul.bf16 %v3369, %v3390
      %v3410 = vmul.bf16 %v2687, %v3390
      %v3411 = vmul.bf16 %v2688, %v3390
      %v3412 = vmul.bf16 %v3370, %v3390
      %v3413 = vmul.bf16 %v2690, %v3390
      %v3414 = vmul.bf16 %v2691, %v3390
      %v3415 = vmul.bf16 %v3371, %v3390
      %v3416 = vmul.bf16 %v2693, %v3390
      %v3417 = vmul.bf16 %v2694, %v3390
      %v3418 = vmul.bf16 %v3372, %v3390
      %v3419 = vmul.bf16 %v2696, %v3390
      %v3420 = vmul.bf16 %v2697, %v3390
      %v3421 = vmul.bf16 %v3373, %v3390
      %v3422 = vmul.bf16 %v2699, %v3390
      %v3423 = vmul.bf16 %v2700, %v3390
      %v3424 = vmul.bf16 %v3374, %v3390
      %v3425 = vmul.bf16 %v2702, %v3390
      %v3426 = vmul.bf16 %v2703, %v3390
      %v3427 = vmul.bf16 %v3375, %v3390
      %v3428 = vmul.bf16 %v2705, %v3390
      %v3429 = vmul.bf16 %v2706, %v3390
      %v3430 = vmul.bf16 %v3376, %v3390
      %v3431 = vmul.bf16 %v2708, %v3390
      %v3432 = vmul.bf16 %v2709, %v3390
      %v3433 = vmul.bf16 %v3377, %v3390
      %v3434 = vmul.bf16 %v2711, %v3390
      %v3435 = vmul.bf16 %v2712, %v3390
      %v3436 = vmul.bf16 %v3378, %v3390
      %v3437 = vmul.bf16 %v2714, %v3390
      %v3438 = vmul.bf16 %v2715, %v3390
      %v3439 = vmul.bf16 %v3379, %v3390
      %v3488 = vunpack.c.l.b16 %v3392
      %v3489 = vunpack.c.l.b16 %v3393
      %v3490 = vunpack.c.l.b16 %v3394
      %v3491 = vunpack.c.l.b16 %v3395
      %v3492 = vunpack.c.l.b16 %v3396
      %v3493 = vunpack.c.l.b16 %v3397
      %v3494 = vunpack.c.l.b16 %v3398
      %v3495 = vunpack.c.l.b16 %v3399
      %v3496 = vunpack.c.l.b16 %v3400
      %v3497 = vunpack.c.l.b16 %v3401
      %v3498 = vunpack.c.l.b16 %v3402
      %v3499 = vunpack.c.l.b16 %v3403
      %v3500 = vunpack.c.l.b16 %v3404
      %v3501 = vunpack.c.l.b16 %v3405
      %v3502 = vunpack.c.l.b16 %v3406
      %v3503 = vunpack.c.l.b16 %v3407
      %v3504 = vunpack.c.l.b16 %v3408
      %v3505 = vunpack.c.l.b16 %v3409
      %v3506 = vunpack.c.l.b16 %v3410
      %v3507 = vunpack.c.l.b16 %v3411
      %v3508 = vunpack.c.l.b16 %v3412
      %v3509 = vunpack.c.l.b16 %v3413
      %v3510 = vunpack.c.l.b16 %v3414
      %v3511 = vunpack.c.l.b16 %v3415
      %v3512 = vunpack.c.l.b16 %v3416
      %v3513 = vunpack.c.l.b16 %v3417
      %v3514 = vunpack.c.l.b16 %v3418
      %v3515 = vunpack.c.l.b16 %v3419
      %v3516 = vunpack.c.l.b16 %v3420
      %v3517 = vunpack.c.l.b16 %v3421
      %v3518 = vunpack.c.l.b16 %v3422
      %v3519 = vunpack.c.l.b16 %v3423
      %v3520 = vunpack.c.l.b16 %v3424
      %v3521 = vunpack.c.l.b16 %v3425
      %v3522 = vunpack.c.l.b16 %v3426
      %v3523 = vunpack.c.l.b16 %v3427
      %v3524 = vunpack.c.l.b16 %v3428
      %v3525 = vunpack.c.l.b16 %v3429
      %v3526 = vunpack.c.l.b16 %v3430
      %v3527 = vunpack.c.l.b16 %v3431
      %v3528 = vunpack.c.l.b16 %v3432
      %v3529 = vunpack.c.l.b16 %v3433
      %v3530 = vunpack.c.l.b16 %v3434
      %v3531 = vunpack.c.l.b16 %v3435
      %v3532 = vunpack.c.l.b16 %v3436
      %v3533 = vunpack.c.l.b16 %v3437
      %v3534 = vunpack.c.l.b16 %v3438
      %v3535 = vunpack.c.l.b16 %v3439
      %v3536 = vpack.c.b16 %v3489, %v3488
      %v3537 = vpack.c.b16 %v3490, %v3490
      %v3538 = vpack.c.b16 %v3492, %v3491
      %v3539 = vpack.c.b16 %v3493, %v3493
      %v3540 = vpack.c.b16 %v3495, %v3494
      %v3541 = vpack.c.b16 %v3496, %v3496
      %v3542 = vpack.c.b16 %v3498, %v3497
      %v3543 = vpack.c.b16 %v3499, %v3499
      %v3544 = vpack.c.b16 %v3501, %v3500
      %v3545 = vpack.c.b16 %v3502, %v3502
      %v3546 = vpack.c.b16 %v3504, %v3503
      %v3547 = vpack.c.b16 %v3505, %v3505
      %v3548 = vpack.c.b16 %v3507, %v3506
      %v3549 = vpack.c.b16 %v3508, %v3508
      %v3550 = vpack.c.b16 %v3510, %v3509
      %v3551 = vpack.c.b16 %v3511, %v3511
      %v3552 = vpack.c.b16 %v3513, %v3512
      %v3553 = vpack.c.b16 %v3514, %v3514
      %v3554 = vpack.c.b16 %v3516, %v3515
      %v3555 = vpack.c.b16 %v3517, %v3517
      %v3556 = vpack.c.b16 %v3519, %v3518
      %v3557 = vpack.c.b16 %v3520, %v3520
      %v3558 = vpack.c.b16 %v3522, %v3521
      %v3559 = vpack.c.b16 %v3523, %v3523
      %v3560 = vpack.c.b16 %v3525, %v3524
      %v3561 = vpack.c.b16 %v3526, %v3526
      %v3562 = vpack.c.b16 %v3528, %v3527
      %v3563 = vpack.c.b16 %v3529, %v3529
      %v3564 = vpack.c.b16 %v3531, %v3530
      %v3565 = vpack.c.b16 %v3532, %v3532
      %v3566 = vpack.c.b16 %v3534, %v3533
      %v3567 = vpack.c.b16 %v3535, %v3535
      %v3569 = vshrl.u32 %v3536, 16
      %v3571 = vshll.u32 %v3536, 16
      %v3573 = vrot.slane %v3571, 1
      %v3574 = vor.u32 %v3569, %v3573
      %v3576 = vshll.u32 %v3537, 16
      %v3578 = vrot.slane %v3576, 1
      %v3579 = vsel %vm1311, %v3574, %v3578
      %v3581 = vshrl.u32 %v3538, 16
      %v3583 = vshll.u32 %v3538, 16
      %v3585 = vrot.slane %v3583, 1
      %v3586 = vor.u32 %v3581, %v3585
      %v3588 = vshll.u32 %v3539, 16
      %v3590 = vrot.slane %v3588, 1
      %v3591 = vsel %vm1311, %v3586, %v3590
      %v3593 = vshrl.u32 %v3540, 16
      %v3595 = vshll.u32 %v3540, 16
      %v3597 = vrot.slane %v3595, 1
      %v3598 = vor.u32 %v3593, %v3597
      %v3600 = vshll.u32 %v3541, 16
      %v3602 = vrot.slane %v3600, 1
      %v3603 = vsel %vm1311, %v3598, %v3602
      %v3605 = vshrl.u32 %v3542, 16
      %v3607 = vshll.u32 %v3542, 16
      %v3609 = vrot.slane %v3607, 1
      %v3610 = vor.u32 %v3605, %v3609
      %v3612 = vshll.u32 %v3543, 16
      %v3614 = vrot.slane %v3612, 1
      %v3615 = vsel %vm1311, %v3610, %v3614
      %v3617 = vshrl.u32 %v3544, 16
      %v3619 = vshll.u32 %v3544, 16
      %v3621 = vrot.slane %v3619, 1
      %v3622 = vor.u32 %v3617, %v3621
      %v3624 = vshll.u32 %v3545, 16
      %v3626 = vrot.slane %v3624, 1
      %v3627 = vsel %vm1311, %v3622, %v3626
      %v3629 = vshrl.u32 %v3546, 16
      %v3631 = vshll.u32 %v3546, 16
      %v3633 = vrot.slane %v3631, 1
      %v3634 = vor.u32 %v3629, %v3633
      %v3636 = vshll.u32 %v3547, 16
      %v3638 = vrot.slane %v3636, 1
      %v3639 = vsel %vm1311, %v3634, %v3638
      %v3641 = vshrl.u32 %v3548, 16
      %v3643 = vshll.u32 %v3548, 16
      %v3645 = vrot.slane %v3643, 1
      %v3646 = vor.u32 %v3641, %v3645
      %v3648 = vshll.u32 %v3549, 16
      %v3650 = vrot.slane %v3648, 1
      %v3651 = vsel %vm1311, %v3646, %v3650
      %v3653 = vshrl.u32 %v3550, 16
      %v3655 = vshll.u32 %v3550, 16
      %v3657 = vrot.slane %v3655, 1
      %v3658 = vor.u32 %v3653, %v3657
      %v3660 = vshll.u32 %v3551, 16
      %v3662 = vrot.slane %v3660, 1
      %v3663 = vsel %vm1311, %v3658, %v3662
      %v3665 = vshrl.u32 %v3552, 16
      %v3667 = vshll.u32 %v3552, 16
      %v3669 = vrot.slane %v3667, 1
      %v3670 = vor.u32 %v3665, %v3669
      %v3672 = vshll.u32 %v3553, 16
      %v3674 = vrot.slane %v3672, 1
      %v3675 = vsel %vm1311, %v3670, %v3674
      %v3677 = vshrl.u32 %v3554, 16
      %v3679 = vshll.u32 %v3554, 16
      %v3681 = vrot.slane %v3679, 1
      %v3682 = vor.u32 %v3677, %v3681
      %v3684 = vshll.u32 %v3555, 16
      %v3686 = vrot.slane %v3684, 1
      %v3687 = vsel %vm1311, %v3682, %v3686
      %v3689 = vshrl.u32 %v3556, 16
      %v3691 = vshll.u32 %v3556, 16
      %v3693 = vrot.slane %v3691, 1
      %v3694 = vor.u32 %v3689, %v3693
      %v3696 = vshll.u32 %v3557, 16
      %v3698 = vrot.slane %v3696, 1
      %v3699 = vsel %vm1311, %v3694, %v3698
      %v3701 = vshrl.u32 %v3558, 16
      %v3703 = vshll.u32 %v3558, 16
      %v3705 = vrot.slane %v3703, 1
      %v3706 = vor.u32 %v3701, %v3705
      %v3708 = vshll.u32 %v3559, 16
      %v3710 = vrot.slane %v3708, 1
      %v3711 = vsel %vm1311, %v3706, %v3710
      %v3713 = vshrl.u32 %v3560, 16
      %v3715 = vshll.u32 %v3560, 16
      %v3717 = vrot.slane %v3715, 1
      %v3718 = vor.u32 %v3713, %v3717
      %v3720 = vshll.u32 %v3561, 16
      %v3722 = vrot.slane %v3720, 1
      %v3723 = vsel %vm1311, %v3718, %v3722
      %v3725 = vshrl.u32 %v3562, 16
      %v3727 = vshll.u32 %v3562, 16
      %v3729 = vrot.slane %v3727, 1
      %v3730 = vor.u32 %v3725, %v3729
      %v3732 = vshll.u32 %v3563, 16
      %v3734 = vrot.slane %v3732, 1
      %v3735 = vsel %vm1311, %v3730, %v3734
      %v3737 = vshrl.u32 %v3564, 16
      %v3739 = vshll.u32 %v3564, 16
      %v3741 = vrot.slane %v3739, 1
      %v3742 = vor.u32 %v3737, %v3741
      %v3744 = vshll.u32 %v3565, 16
      %v3746 = vrot.slane %v3744, 1
      %v3747 = vsel %vm1311, %v3742, %v3746
      %v3749 = vshrl.u32 %v3566, 16
      %v3751 = vshll.u32 %v3566, 16
      %v3753 = vrot.slane %v3751, 1
      %v3754 = vor.u32 %v3749, %v3753
      %v3756 = vshll.u32 %v3567, 16
      %v3758 = vrot.slane %v3756, 1
      %v3759 = vsel %vm1311, %v3754, %v3758
      %v3776 = vadd.bf16 %v3348, %v3579
      %v3777 = vadd.bf16 %v3349, %v3591
      %v3778 = vadd.bf16 %v3350, %v3603
      %v3779 = vadd.bf16 %v3351, %v3615
      %v3780 = vadd.bf16 %v3352, %v3627
      %v3781 = vadd.bf16 %v3353, %v3639
      %v3782 = vadd.bf16 %v3354, %v3651
      %v3783 = vadd.bf16 %v3355, %v3663
      %v3784 = vadd.bf16 %v3356, %v3675
      %v3785 = vadd.bf16 %v3357, %v3687
      %v3786 = vadd.bf16 %v3358, %v3699
      %v3787 = vadd.bf16 %v3359, %v3711
      %v3788 = vadd.bf16 %v3360, %v3723
      %v3789 = vadd.bf16 %v3361, %v3735
      %v3790 = vadd.bf16 %v3362, %v3747
      %v3791 = vadd.bf16 %v3363, %v3759
      %v3792 = vmax.bf16 %v3776, 0
      %v3793 = vmax.bf16 %v3777, 0
      %v3794 = vmax.bf16 %v3778, 0
      %v3795 = vmax.bf16 %v3779, 0
      %v3796 = vmax.bf16 %v3780, 0
      %v3797 = vmax.bf16 %v3781, 0
      %v3798 = vmax.bf16 %v3782, 0
      %v3799 = vmax.bf16 %v3783, 0
      %v3800 = vmax.bf16 %v3784, 0
      %v3801 = vmax.bf16 %v3785, 0
      %v3802 = vmax.bf16 %v3786, 0
      %v3803 = vmax.bf16 %v3787, 0
      %v3804 = vmax.bf16 %v3788, 0
      %v3805 = vmax.bf16 %v3789, 0
      %v3806 = vmax.bf16 %v3790, 0
      %v3807 = vmax.bf16 %v3791, 0
      %v3808 = vld [vmem:[%s2] sm:$0xf]
      %v3809 = vld [vmem:[%s4] sm:$0xff]
      %3811 = vset.pattern.permute.xlu0 0
      %3812 = vperm.xlu0 %3811, %v3809
      %v3813 = vpop.permute.xlu0 %3812
      %vm3815 = vcmask 31744
      %v3817 = vsel %vm3815, %v3808, 0
      %v3820 = vsel %vm3815, %v3792, 0
      %v3823 = vsel %vm3815, %v3793, 0
      %v3826 = vsel %vm3815, %v3794, 0
      %v3829 = vsel %vm3815, %v3795, 0
      %v3832 = vsel %vm3815, %v3796, 0
      %v3835 = vsel %vm3815, %v3797, 0
      %v3838 = vsel %vm3815, %v3798, 0
      %v3841 = vsel %vm3815, %v3799, 0
      %v3844 = vsel %vm3815, %v3800, 0
      %v3847 = vsel %vm3815, %v3801, 0
      %v3850 = vsel %vm3815, %v3802, 0
      %v3853 = vsel %vm3815, %v3803, 0
      %v3856 = vsel %vm3815, %v3804, 0
      %v3859 = vsel %vm3815, %v3805, 0
      %v3862 = vsel %vm3815, %v3806, 0
      %v3865 = vsel %vm3815, %v3807, 0
      %3867 = vmatprep.subr.bf16.mxu0 0
      %3868 = vmatpush1.bf16.xpose.msra.mxu0 %v3841
      %3869 = vmatprep.subr.bf16.mxu0 0
      %3870 = vmatpush1.bf16.xpose.msra.mxu0 %v3838
      %3871 = vmatprep.subr.bf16.mxu0 0
      %3872 = vmatpush1.bf16.xpose.msra.mxu0 %v3835
      %3873 = vmatprep.subr.bf16.mxu0 0
      %3874 = vmatpush1.bf16.xpose.msra.mxu0 %v3832
      %3875 = vmatprep.subr.bf16.mxu0 0
      %3876 = vmatpush1.bf16.xpose.msra.mxu0 %v3829
      %3877 = vmatprep.subr.bf16.mxu0 0
      %3878 = vmatpush1.bf16.xpose.msra.mxu0 %v3826
      %3879 = vmatprep.subr.bf16.mxu0 0
      %3880 = vmatpush1.bf16.xpose.msra.mxu0 %v3823
      %3881 = vmatprep.subr.bf16.mxu0 0
      %3882 = vmatpush1.bf16.xpose.msra.mxu0 %v3820
      %3883 = vmatprep.subr.bf16.mxu0 0
      %3884 = vmatpush2.bf16.xpose.msra.mxu0 %v3865
      %3885 = vmatprep.subr.bf16.mxu0 0
      %3886 = vmatpush2.bf16.xpose.msra.mxu0 %v3862
      %3887 = vmatprep.subr.bf16.mxu0 0
      %3888 = vmatpush2.bf16.xpose.msra.mxu0 %v3859
      %3889 = vmatprep.subr.bf16.mxu0 0
      %3890 = vmatpush2.bf16.xpose.msra.mxu0 %v3856
      %3891 = vmatprep.subr.bf16.mxu0 0
      %3892 = vmatpush2.bf16.xpose.msra.mxu0 %v3853
      %3893 = vmatprep.subr.bf16.mxu0 0
      %3894 = vmatpush2.bf16.xpose.msra.mxu0 %v3850
      %3895 = vmatprep.subr.bf16.mxu0 0
      %3896 = vmatpush2.bf16.xpose.msra.mxu0 %v3847
      %3897 = vmatprep.subr.bf16.mxu0 0
      %3898 = vmatpush2.bf16.xpose.msra.mxu0 %v3844
      %3899 = vmatprep.mubr.bf16.mxu0 0
      %3900 = vmatmul.mubr.bf16.gmra.mxu0 %v3817
      %v3901 = vpop.f32.mrf.mxu0
      %v3902 = vadd.f32 %v3813, %v3901
      %v3903 = vpop.f32.mrf.mxu0
      %v3904 = vadd.f32 %v3813, %v3903
      %v3905 = vpop.f32.mrf.mxu0
      %v3906 = vpop.f32.mrf.mxu0
      %3907 = vdwg.mxu0
      %v3908 = vmax.f32 %v3902, 0.0
      %v3909 = vmax.f32 %v3904, 0.0
      %3910 = vst [vmem:[%s246] sm:$0xff] %v3908
      %3911 = vst [vmem:[%s246 + $0x8] sm:$0xff] %v3909
      %s3912 = smul.u32 2, %s21
      %p3913 = scmp.lt.s32.totalorder %s20, 1
      %s3914 = scalar_select %p3913, %s20, 1
      %p3915 = scmp.lt.s32.totalorder %s3912, 1
      %s3916 = scalar_select %p3915, %s3912, 1
      %s3917 = smul.addr %s3914, 2
      %s3918 = sadd.s32 %s3916, %s3917
      %s3919 = smul.addr %s3918, 8
      %s3920 = scalar_lea.vmem %s5, %s3919
      // Predicated region
      $region45: #{depthwise_separable_block.1} parent=39 // pred_check
        %p3921 = pneg %p158
      $region46: #{depthwise_separable_block.1} parent=39 // pred_check_branch
        %3923 = sbr.rel (%p3921) target = $region48
      $region47: #{depthwise_separable_block.1} parent=39 // pred_region
        %s3924 = smul.u32 2, %s21
      $region48: #{depthwise_separable_block.1} parent=39 // pred_fallthru
        _
    $region40: #{depthwise_separable_block.1} parent=5 // pred_fallthru
      _
    %p3925 = scmp.le.s32.totalorder 2, %s11
    // Predicated region
    $region49: #{depthwise_separable_block.1} parent=5 // pred_check
      %p3926 = pneg %p3925
    $region50: #{depthwise_separable_block.1} parent=5 // pred_check_branch
      %3928 = sbr.rel (%p3926) target = $region52
    $region51: #{depthwise_separable_block.1} parent=5 // pred_region
      %s3929 = ssub.s32 %s11, 2
      // Predicated region
      $region53: #{depthwise_separable_block.1} parent=51 // pred_check
        %p3930 = pneg %p164
      $region54: #{depthwise_separable_block.1} parent=51 // pred_check_branch
        %3932 = sbr.rel (%p3930) target = $region56
      $region55: #{depthwise_separable_block.1} parent=51 // pred_region
        %s3933 = smul.u32 2, %s23
        %p3934 = scmp.lt.s32.totalorder %s22, 1
        %s3935 = scalar_select %p3934, %s22, 1
        %p3936 = scmp.lt.s32.totalorder %s3933, 1
        %s3937 = scalar_select %p3936, %s3933, 1
        %s3938 = smul.addr %s3935, 2
        %s3939 = sadd.s32 %s3937, %s3938
        %s3940 = smul.addr %s3939, 8
        %s3941 = scalar_lea.vmem %s5, %s3940
      $region56: #{depthwise_separable_block.1} parent=51 // pred_fallthru
        _
    $region52: #{depthwise_separable_block.1} parent=5 // pred_fallthru
      _
  $region6: #{depthwise_separable_block.1} parent=0 // loop_footer
    %s15 = sadd.s32 1, %s11
  $region7: #{depthwise_separable_block.1} parent=0 // loop_footer_branch
    %10 = sbr.rel target = $region3
  $region8: #{depthwise_separable_block.1} parent=0 // loop_exit
    _

</llo_original>
